<compile_context>
chip_gen: v6e
topology: v6e:2x2x1
jax: 0.10.0
libtpu: 0.0.40
codegen_flags: <defaults>
</compile_context>

<pallas_src>
import jax
import jax.numpy as jnp
from jax import lax
from jax.experimental import pallas as pl
from jax.experimental.pallas import tpu as pltpu

# ---------------- sizes (small, TPU friendly: 4*NHID = 128 lanes, NTOKEN = 256) ----------------
NTOKEN = 256
NINP = 32
NHID = 32
LAT = 16
NLAYERS = 1
SEQ = 8
BATCH = 8


def _lstm_gates(gates, c, H):
    """PyTorch gate order (i, f, g, o)."""
    i = jax.nn.sigmoid(gates[:, 0:H])
    f = jax.nn.sigmoid(gates[:, H:2 * H])
    g = jnp.tanh(gates[:, 2 * H:3 * H])
    o = jax.nn.sigmoid(gates[:, 3 * H:4 * H])
    c_new = f * c + i * g
    h_new = o * jnp.tanh(c_new)
    return h_new, c_new


# ---------------------------- fused Pallas kernel ----------------------------

def vae_fused_kernel(tok_ref, emb_tab_ref,
                     enc_wih_ref, enc_b_ref, enc_whh_ref,
                     lat_w_ref, lat_b_ref,
                     dec_we_ref, dec_wl_ref, dec_whh_ref, dec_b_ref,
                     wout_ref, bout_ref,
                     logits_ref, mu_ref, logvar_ref):
    T, B, H = SEQ, BATCH, NHID
    f32 = jnp.float32

    # ---- embedding lookup as an exact one-hot matmul (no XLA gather, stays in VMEM) ----
    tok = tok_ref[...]                                              # [T*B, 1] int32
    vocab_iota = lax.broadcasted_iota(jnp.int32, (T * B, NTOKEN), 1)
    onehot = (vocab_iota == tok).astype(f32)                        # [T*B, NTOKEN]
    emb_flat = jnp.dot(onehot, emb_tab_ref[...],
                       preferred_element_type=f32)                  # [T*B, NINP]

    # ---- encoder: input projection hoisted out of the recurrence ----
    # column layout: [fwd gates (4H) | bwd gates (4H)]
    in_gates = (jnp.dot(emb_flat, enc_wih_ref[...], preferred_element_type=f32)
                + enc_b_ref[...])                                   # [T*B, 8H]
    enc_whh = enc_whh_ref[...]                                      # block-diag [2H, 8H]

    hf = jnp.zeros((B, H), f32)
    cf = jnp.zeros((B, H), f32)
    hb = jnp.zeros((B, H), f32)
    cb = jnp.zeros((B, H), f32)
    for t in range(T):                                              # fully unrolled, T = 8
        h_cat = jnp.concatenate([hf, hb], axis=1)                   # [B, 2H]
        rec = jnp.dot(h_cat, enc_whh, preferred_element_type=f32)   # [B, 8H] (one MXU call)
        gf = in_gates[t * B:(t + 1) * B, 0:4 * H] + rec[:, 0:4 * H]
        gb = in_gates[(T - 1 - t) * B:(T - t) * B, 4 * H:8 * H] + rec[:, 4 * H:8 * H]
        hf, cf = _lstm_gates(gf, cf, H)
        hb, cb = _lstm_gates(gb, cb, H)

    # ---- latent head: one matmul yields [mu | logvar | h0 | c0] ----
    # (z_to_h / z_to_c folded through fc_mu at init; valid because z == mu in eval mode)
    x = jnp.concatenate([hf, hb, cf, cb], axis=1)                   # [B, 4H]  == torch cat/permute/view
    lat = (jnp.dot(x, lat_w_ref[...], preferred_element_type=f32)
           + lat_b_ref[...])                                        # [B, 2*LAT + 2*H]
    mu = lat[:, 0:LAT]
    logvar = lat[:, LAT:2 * LAT]
    h0 = lat[:, 2 * LAT:2 * LAT + H]
    c0 = lat[:, 2 * LAT + H:2 * LAT + 2 * H]

    # ---- decoder: emb path and latent path hoisted out of the recurrence ----
    dec_in = jnp.dot(emb_flat, dec_we_ref[...],
                     preferred_element_type=f32)                    # [T*B, 4H]
    lat_contrib = (jnp.dot(h0, dec_wl_ref[...], preferred_element_type=f32)
                   + dec_b_ref[...])                                # [B, 4H] (constant over time)
    dec_whh = dec_whh_ref[...]

    h, c = h0, c0
    hs = []
    for t in range(T):                                              # fully unrolled, T = 8
        gates = (dec_in[t * B:(t + 1) * B]
                 + jnp.dot(h, dec_whh, preferred_element_type=f32)
                 + lat_contrib)
        h, c = _lstm_gates(gates, c, H)
        hs.append(h)

    # ---- batched vocab projection + single lane-dense (256-lane) logits store ----
    h_all = jnp.concatenate(hs, axis=0)                             # [T*B, H]
    logits = (jnp.dot(h_all, wout_ref[...], preferred_element_type=f32)
              + bout_ref[...])                                      # [T*B, NTOKEN]
    logits_ref[...] = logits
    mu_ref[...] = mu
    logvar_ref[...] = logvar


# ---------------------------- wrapper ----------------------------

def _vmem_spec():
    return pl.BlockSpec(memory_space=pltpu.MemorySpace.VMEM)


def vae_forward(fp, tokens):
    """tokens: int32 [SEQ, BATCH]  ->  (logits [SEQ, BATCH, NTOKEN], mu, logvar)"""
    tok2d = tokens.reshape(SEQ * BATCH, 1).astype(jnp.int32)  # free layout-preserving reshape
    logits_flat, mu, logvar = pl.pallas_call(
        vae_fused_kernel,
        out_shape=(jax.ShapeDtypeStruct((SEQ * BATCH, NTOKEN), jnp.float32),
                   jax.ShapeDtypeStruct((BATCH, LAT), jnp.float32),
                   jax.ShapeDtypeStruct((BATCH, LAT), jnp.float32)),
        in_specs=[_vmem_spec() for _ in range(13)],
        out_specs=(_vmem_spec(), _vmem_spec(), _vmem_spec()),
    )(tok2d, fp['emb'],
      fp['enc_wih_fb_T'], fp['enc_b_fb'], fp['enc_whh_block'],
      fp['lat_w'], fp['lat_b'],
      fp['dec_wih_e_T'], fp['dec_wih_l_T'], fp['dec_whh_T'], fp['dec_b'],
      fp['wout_T'], fp['bout'])
    # row-major [T*B, V] -> [T, B, V] is a layout-preserving (free) reshape
    return logits_flat.reshape(SEQ, BATCH, NTOKEN), mu, logvar


# ---------------------------- deterministic raw params ----------------------------

def init_params():
    key = jax.random.PRNGKey(0)
    keys = iter(jax.random.split(key, 32))

    def u(shape):
        return jax.random.uniform(next(keys), shape, jnp.float32, -0.1, 0.1)

    p = {}
    p['emb'] = u((NTOKEN, NINP))
    # encoder BiLSTM (1 layer, both directions) -- PyTorch gate order (i, f, g, o)
    for d in ('f', 'b'):
        wih = u((4 * NHID, NINP))
        whh = u((4 * NHID, NHID))
        bih = u((4 * NHID,))
        bhh = u((4 * NHID,))
        p[f'enc_wih_{d}_T'] = wih.T
        p[f'enc_whh_{d}_T'] = whh.T
        p[f'enc_b_{d}'] = (bih + bhh).reshape(1, 4 * NHID)
    # fc_mu / fc_logvar : (2*nhid*nlayers*2) -> lat_dim
    wmu = u((LAT, 4 * NHID * NLAYERS)); bmu = u((LAT,))
    wlv = u((LAT, 4 * NHID * NLAYERS)); blv = u((LAT,))
    p['wmu_T'] = wmu.T; p['bmu'] = bmu.reshape(1, LAT)
    p['wlv_T'] = wlv.T; p['blv'] = blv.reshape(1, LAT)
    # z_to_h / z_to_c : lat_dim -> nhid*nlayers
    wh = u((NHID * NLAYERS, LAT)); bh = u((NHID * NLAYERS,))
    wc = u((NHID * NLAYERS, LAT)); bc = u((NHID * NLAYERS,))
    p['wh_T'] = wh.T; p['bh'] = bh.reshape(1, NHID)
    p['wc_T'] = wc.T; p['bc'] = bc.reshape(1, NHID)
    # decoder LSTM : input (ninp + nhid) -> nhid
    wih_d = u((4 * NHID, NINP + NHID))
    whh_d = u((4 * NHID, NHID))
    bih_d = u((4 * NHID,))
    bhh_d = u((4 * NHID,))
    p['dec_wih_e_T'] = wih_d[:, :NINP].T
    p['dec_wih_l_T'] = wih_d[:, NINP:].T
    p['dec_whh_T'] = whh_d.T
    p['dec_b'] = (bih_d + bhh_d).reshape(1, 4 * NHID)
    # decoder_out : nhid -> ntoken
    wout = u((NTOKEN, NHID)); bout = u((NTOKEN,))
    p['wout_T'] = wout.T
    p['bout'] = bout.reshape(1, NTOKEN)
    return p


# ---------------------------- weight prep for the fused kernel ----------------------------

def prep_weights(p):
    """Fold/concat raw PyTorch-style weights into the MXU-shaped fused kernel weights."""
    H = NHID
    fp = {}
    fp['emb'] = p['emb']
    # encoder: [fwd | bwd] input projection + block-diagonal recurrent weight
    fp['enc_wih_fb_T'] = jnp.concatenate([p['enc_wih_f_T'], p['enc_wih_b_T']], axis=1)  # [NINP, 8H]
    fp['enc_b_fb'] = jnp.concatenate([p['enc_b_f'], p['enc_b_b']], axis=1)              # [1, 8H]
    whh_block = jnp.zeros((2 * H, 8 * H), jnp.float32)
    whh_block = whh_block.at[0:H, 0:4 * H].set(p['enc_whh_f_T'])
    whh_block = whh_block.at[H:2 * H, 4 * H:8 * H].set(p['enc_whh_b_T'])
    fp['enc_whh_block'] = whh_block                                                     # [2H, 8H]
    # latent: [fc_mu | fc_logvar | z_to_h(fc_mu(.)) | z_to_c(fc_mu(.))] (eval: z == mu)
    wh_fold = p['wmu_T'] @ p['wh_T']                  # [4H, H]
    wc_fold = p['wmu_T'] @ p['wc_T']                  # [4H, H]
    bh_fold = p['bmu'] @ p['wh_T'] + p['bh']          # [1, H]
    bc_fold = p['bmu'] @ p['wc_T'] + p['bc']          # [1, H]
    fp['lat_w'] = jnp.concatenate([p['wmu_T'], p['wlv_T'], wh_fold, wc_fold], axis=1)   # [4H, 2*LAT+2H]
    fp['lat_b'] = jnp.concatenate([p['bmu'], p['blv'], bh_fold, bc_fold], axis=1)       # [1, 2*LAT+2H]
    # decoder
    fp['dec_wih_e_T'] = p['dec_wih_e_T']
    fp['dec_wih_l_T'] = p['dec_wih_l_T']
    fp['dec_whh_T'] = p['dec_whh_T']
    fp['dec_b'] = p['dec_b']
    fp['wout_T'] = p['wout_T']
    fp['bout'] = p['bout']
    return fp


# ---------------------------- pure-JAX reference (un-fused, raw weights) ----------------------------

def _ref_cell(x, h, c, wih_T, whh_T, b, H):
    gates = x @ wih_T + h @ whh_T + b
    return _lstm_gates(gates, c, H)


def reference_forward(p, tokens):
    emb = p['emb'][tokens]
    T, B, _ = emb.shape
    H = NHID
    hf = cf = hb = cb = jnp.zeros((B, H), jnp.float32)
    for t in range(T):
        hf, cf = _ref_cell(emb[t], hf, cf, p['enc_wih_f_T'], p['enc_whh_f_T'], p['enc_b_f'], H)
        hb, cb = _ref_cell(emb[T - 1 - t], hb, cb, p['enc_wih_b_T'], p['enc_whh_b_T'], p['enc_b_b'], H)
    x = jnp.stack([hf, hb, cf, cb], axis=1).reshape(B, 4 * H)
    mu = x @ p['wmu_T'] + p['bmu']
    logvar = x @ p['wlv_T'] + p['blv']
    z = mu
    h0 = z @ p['wh_T'] + p['bh']
    c0 = z @ p['wc_T'] + p['bc']
    h, c = h0, c0
    wih_T = jnp.concatenate([p['dec_wih_e_T'], p['dec_wih_l_T']], axis=0)
    logits = []
    for t in range(T):
        x_t = jnp.concatenate([emb[t], h0], axis=1)
        h, c = _ref_cell(x_t, h, c, wih_T, p['dec_whh_T'], p['dec_b'], H)
        logits.append(h @ p['wout_T'] + p['bout'])
    return jnp.stack(logits, axis=0), mu, logvar


# ---------------------------- main ----------------------------

if __name__ == "__main__":
    raw_params = init_params()
    fused_params = prep_weights(raw_params)

    tok_key = jax.random.PRNGKey(0)
    tokens = jax.random.randint(tok_key, (SEQ, BATCH), 0, NTOKEN, dtype=jnp.int32)

    fwd = jax.jit(vae_forward)
    logits, mu, logvar = fwd(fused_params, tokens)
    jax.block_until_ready((logits, mu, logvar))

    assert logits.shape == (SEQ, BATCH, NTOKEN)
    assert mu.shape == (BATCH, LAT) and logvar.shape == (BATCH, LAT)

    ref_logits, ref_mu, ref_logvar = reference_forward(raw_params, tokens)
    assert jnp.allclose(mu, ref_mu, atol=2e-2, rtol=2e-2)
    assert jnp.allclose(logvar, ref_logvar, atol=2e-2, rtol=2e-2)
    assert jnp.allclose(logits, ref_logits, atol=2e-2, rtol=2e-2)

    print("KERNEL_OK")
</pallas_src>

<mosaic_0001>
module attributes {stable_mosaic.version = 11 : i64} {
  func.func @vae_fused_kernel(%arg0: memref<64x1xi32, #tpu.memory_space<vmem>>, %arg1: memref<256x32xf32, #tpu.memory_space<vmem>>, %arg2: memref<32x256xf32, #tpu.memory_space<vmem>>, %arg3: memref<1x256xf32, #tpu.memory_space<vmem>>, %arg4: memref<64x256xf32, #tpu.memory_space<vmem>>, %arg5: memref<128x96xf32, #tpu.memory_space<vmem>>, %arg6: memref<1x96xf32, #tpu.memory_space<vmem>>, %arg7: memref<32x128xf32, #tpu.memory_space<vmem>>, %arg8: memref<32x128xf32, #tpu.memory_space<vmem>>, %arg9: memref<32x128xf32, #tpu.memory_space<vmem>>, %arg10: memref<1x128xf32, #tpu.memory_space<vmem>>, %arg11: memref<32x256xf32, #tpu.memory_space<vmem>>, %arg12: memref<1x256xf32, #tpu.memory_space<vmem>>, %arg13: memref<64x256xf32, #tpu.memory_space<vmem>>, %arg14: memref<8x16xf32, #tpu.memory_space<vmem>>, %arg15: memref<8x16xf32, #tpu.memory_space<vmem>>) attributes {dimension_semantics = [], scalar_prefetch = 0 : i64, scratch_operands = 0 : i64, tpu.core_type = #tpu.core_type<tc>} {
    %c0 = arith.constant 0 : index
    %c0_0 = arith.constant 0 : index
    %0 = vector.load %arg0[%c0, %c0_0] : memref<64x1xi32, #tpu.memory_space<vmem>>, vector<64x1xi32>
    %1 = tpu.iota {dimensions = array<i32: 1>} : vector<64x256xi32>
    %2 = vector.broadcast %0 : vector<64x1xi32> to vector<64x256xi32>
    %3 = arith.cmpi eq, %1, %2 : vector<64x256xi32>
    %4 = arith.extui %3 : vector<64x256xi1> to vector<64x256xi32>
    %5 = arith.sitofp %4 : vector<64x256xi32> to vector<64x256xf32>
    %c0_1 = arith.constant 0 : index
    %c0_2 = arith.constant 0 : index
    %6 = vector.load %arg1[%c0_1, %c0_2] : memref<256x32xf32, #tpu.memory_space<vmem>>, vector<256x32xf32>
    %cst = arith.constant dense<0.000000e+00> : vector<64x32xf32>
    %7 = tpu.matmul %5, %6, %cst {dimension_numbers = #tpu.dot_dimension_numbers<[1], [0], [0], [1], [0, 0, 1, 1], [], []>} : vector<64x256xf32>, vector<256x32xf32>, vector<64x32xf32> -> vector<64x32xf32>
    %c0_3 = arith.constant 0 : index
    %c0_4 = arith.constant 0 : index
    %8 = vector.load %arg2[%c0_3, %c0_4] : memref<32x256xf32, #tpu.memory_space<vmem>>, vector<32x256xf32>
    %cst_5 = arith.constant dense<0.000000e+00> : vector<64x256xf32>
    %9 = tpu.matmul %7, %8, %cst_5 {dimension_numbers = #tpu.dot_dimension_numbers<[1], [0], [0], [1], [0, 0, 1, 1], [], []>} : vector<64x32xf32>, vector<32x256xf32>, vector<64x256xf32> -> vector<64x256xf32>
    %c0_6 = arith.constant 0 : index
    %c0_7 = arith.constant 0 : index
    %10 = vector.load %arg3[%c0_6, %c0_7] : memref<1x256xf32, #tpu.memory_space<vmem>>, vector<1x256xf32>
    %11 = vector.broadcast %10 : vector<1x256xf32> to vector<64x256xf32>
    %12 = arith.addf %9, %11 : vector<64x256xf32>
    %c0_8 = arith.constant 0 : index
    %c0_9 = arith.constant 0 : index
    %13 = vector.load %arg4[%c0_8, %c0_9] : memref<64x256xf32, #tpu.memory_space<vmem>>, vector<64x256xf32>
    %cst_10 = arith.constant 0.000000e+00 : f32
    %14 = vector.broadcast %cst_10 : f32 to vector<8x32xf32>
    %cst_11 = arith.constant 0.000000e+00 : f32
    %15 = vector.broadcast %cst_11 : f32 to vector<8x32xf32>
    %cst_12 = arith.constant 0.000000e+00 : f32
    %16 = vector.broadcast %cst_12 : f32 to vector<8x32xf32>
    %cst_13 = arith.constant 0.000000e+00 : f32
    %17 = vector.broadcast %cst_13 : f32 to vector<8x32xf32>
    %18 = tpu.concatenate %14, %16 in 1 : vector<8x32xf32>, vector<8x32xf32> -> vector<8x64xf32>
    %cst_14 = arith.constant dense<0.000000e+00> : vector<8x256xf32>
    %19 = tpu.matmul %18, %13, %cst_14 {dimension_numbers = #tpu.dot_dimension_numbers<[1], [0], [0], [1], [0, 0, 1, 1], [], []>} : vector<8x64xf32>, vector<64x256xf32>, vector<8x256xf32> -> vector<8x256xf32>
    %20 = vector.extract_strided_slice %12 {offsets = [0, 0], sizes = [8, 128], strides = [1, 1]} : vector<64x256xf32> to vector<8x128xf32>
    %21 = vector.extract_strided_slice %19 {offsets = [0, 0], sizes = [8, 128], strides = [1, 1]} : vector<8x256xf32> to vector<8x128xf32>
    %22 = arith.addf %20, %21 : vector<8x128xf32>
    %23 = vector.extract_strided_slice %12 {offsets = [56, 128], sizes = [8, 128], strides = [1, 1]} : vector<64x256xf32> to vector<8x128xf32>
    %24 = vector.extract_strided_slice %19 {offsets = [0, 128], sizes = [8, 128], strides = [1, 1]} : vector<8x256xf32> to vector<8x128xf32>
    %25 = arith.addf %23, %24 : vector<8x128xf32>
    %26 = vector.extract_strided_slice %22 {offsets = [0, 0], sizes = [8, 32], strides = [1, 1]} : vector<8x128xf32> to vector<8x32xf32>
    %27 = arith.negf %26 : vector<8x32xf32>
    %28 = math.exp %27 : vector<8x32xf32>
    %cst_15 = arith.constant 1.000000e+00 : f32
    %29 = vector.broadcast %cst_15 : f32 to vector<8x32xf32>
    %30 = arith.addf %29, %28 : vector<8x32xf32>
    %31 = arith.divf %29, %30 : vector<8x32xf32>
    %32 = vector.extract_strided_slice %22 {offsets = [0, 32], sizes = [8, 32], strides = [1, 1]} : vector<8x128xf32> to vector<8x32xf32>
    %33 = arith.negf %32 : vector<8x32xf32>
    %34 = math.exp %33 : vector<8x32xf32>
    %cst_16 = arith.constant 1.000000e+00 : f32
    %35 = vector.broadcast %cst_16 : f32 to vector<8x32xf32>
    %36 = arith.addf %35, %34 : vector<8x32xf32>
    %37 = arith.divf %35, %36 : vector<8x32xf32>
    %38 = vector.extract_strided_slice %22 {offsets = [0, 64], sizes = [8, 32], strides = [1, 1]} : vector<8x128xf32> to vector<8x32xf32>
    %39 = math.tanh %38 : vector<8x32xf32>
    %40 = vector.extract_strided_slice %22 {offsets = [0, 96], sizes = [8, 32], strides = [1, 1]} : vector<8x128xf32> to vector<8x32xf32>
    %41 = arith.negf %40 : vector<8x32xf32>
    %42 = math.exp %41 : vector<8x32xf32>
    %cst_17 = arith.constant 1.000000e+00 : f32
    %43 = vector.broadcast %cst_17 : f32 to vector<8x32xf32>
    %44 = arith.addf %43, %42 : vector<8x32xf32>
    %45 = arith.divf %43, %44 : vector<8x32xf32>
    %46 = arith.mulf %37, %15 : vector<8x32xf32>
    %47 = arith.mulf %31, %39 : vector<8x32xf32>
    %48 = arith.addf %46, %47 : vector<8x32xf32>
    %49 = math.tanh %48 : vector<8x32xf32>
    %50 = arith.mulf %45, %49 : vector<8x32xf32>
    %51 = vector.extract_strided_slice %25 {offsets = [0, 0], sizes = [8, 32], strides = [1, 1]} : vector<8x128xf32> to vector<8x32xf32>
    %52 = arith.negf %51 : vector<8x32xf32>
    %53 = math.exp %52 : vector<8x32xf32>
    %cst_18 = arith.constant 1.000000e+00 : f32
    %54 = vector.broadcast %cst_18 : f32 to vector<8x32xf32>
    %55 = arith.addf %54, %53 : vector<8x32xf32>
    %56 = arith.divf %54, %55 : vector<8x32xf32>
    %57 = vector.extract_strided_slice %25 {offsets = [0, 32], sizes = [8, 32], strides = [1, 1]} : vector<8x128xf32> to vector<8x32xf32>
    %58 = arith.negf %57 : vector<8x32xf32>
    %59 = math.exp %58 : vector<8x32xf32>
    %cst_19 = arith.constant 1.000000e+00 : f32
    %60 = vector.broadcast %cst_19 : f32 to vector<8x32xf32>
    %61 = arith.addf %60, %59 : vector<8x32xf32>
    %62 = arith.divf %60, %61 : vector<8x32xf32>
    %63 = vector.extract_strided_slice %25 {offsets = [0, 64], sizes = [8, 32], strides = [1, 1]} : vector<8x128xf32> to vector<8x32xf32>
    %64 = math.tanh %63 : vector<8x32xf32>
    %65 = vector.extract_strided_slice %25 {offsets = [0, 96], sizes = [8, 32], strides = [1, 1]} : vector<8x128xf32> to vector<8x32xf32>
    %66 = arith.negf %65 : vector<8x32xf32>
    %67 = math.exp %66 : vector<8x32xf32>
    %cst_20 = arith.constant 1.000000e+00 : f32
    %68 = vector.broadcast %cst_20 : f32 to vector<8x32xf32>
    %69 = arith.addf %68, %67 : vector<8x32xf32>
    %70 = arith.divf %68, %69 : vector<8x32xf32>
    %71 = arith.mulf %62, %17 : vector<8x32xf32>
    %72 = arith.mulf %56, %64 : vector<8x32xf32>
    %73 = arith.addf %71, %72 : vector<8x32xf32>
    %74 = math.tanh %73 : vector<8x32xf32>
    %75 = arith.mulf %70, %74 : vector<8x32xf32>
    %76 = tpu.concatenate %50, %75 in 1 : vector<8x32xf32>, vector<8x32xf32> -> vector<8x64xf32>
    %cst_21 = arith.constant dense<0.000000e+00> : vector<8x256xf32>
    %77 = tpu.matmul %76, %13, %cst_21 {dimension_numbers = #tpu.dot_dimension_numbers<[1], [0], [0], [1], [0, 0, 1, 1], [], []>} : vector<8x64xf32>, vector<64x256xf32>, vector<8x256xf32> -> vector<8x256xf32>
    %78 = vector.extract_strided_slice %12 {offsets = [8, 0], sizes = [8, 128], strides = [1, 1]} : vector<64x256xf32> to vector<8x128xf32>
    %79 = vector.extract_strided_slice %77 {offsets = [0, 0], sizes = [8, 128], strides = [1, 1]} : vector<8x256xf32> to vector<8x128xf32>
    %80 = arith.addf %78, %79 : vector<8x128xf32>
    %81 = vector.extract_strided_slice %12 {offsets = [48, 128], sizes = [8, 128], strides = [1, 1]} : vector<64x256xf32> to vector<8x128xf32>
    %82 = vector.extract_strided_slice %77 {offsets = [0, 128], sizes = [8, 128], strides = [1, 1]} : vector<8x256xf32> to vector<8x128xf32>
    %83 = arith.addf %81, %82 : vector<8x128xf32>
    %84 = vector.extract_strided_slice %80 {offsets = [0, 0], sizes = [8, 32], strides = [1, 1]} : vector<8x128xf32> to vector<8x32xf32>
    %85 = arith.negf %84 : vector<8x32xf32>
    %86 = math.exp %85 : vector<8x32xf32>
    %cst_22 = arith.constant 1.000000e+00 : f32
    %87 = vector.broadcast %cst_22 : f32 to vector<8x32xf32>
    %88 = arith.addf %87, %86 : vector<8x32xf32>
    %89 = arith.divf %87, %88 : vector<8x32xf32>
    %90 = vector.extract_strided_slice %80 {offsets = [0, 32], sizes = [8, 32], strides = [1, 1]} : vector<8x128xf32> to vector<8x32xf32>
    %91 = arith.negf %90 : vector<8x32xf32>
    %92 = math.exp %91 : vector<8x32xf32>
    %cst_23 = arith.constant 1.000000e+00 : f32
    %93 = vector.broadcast %cst_23 : f32 to vector<8x32xf32>
    %94 = arith.addf %93, %92 : vector<8x32xf32>
    %95 = arith.divf %93, %94 : vector<8x32xf32>
    %96 = vector.extract_strided_slice %80 {offsets = [0, 64], sizes = [8, 32], strides = [1, 1]} : vector<8x128xf32> to vector<8x32xf32>
    %97 = math.tanh %96 : vector<8x32xf32>
    %98 = vector.extract_strided_slice %80 {offsets = [0, 96], sizes = [8, 32], strides = [1, 1]} : vector<8x128xf32> to vector<8x32xf32>
    %99 = arith.negf %98 : vector<8x32xf32>
    %100 = math.exp %99 : vector<8x32xf32>
    %cst_24 = arith.constant 1.000000e+00 : f32
    %101 = vector.broadcast %cst_24 : f32 to vector<8x32xf32>
    %102 = arith.addf %101, %100 : vector<8x32xf32>
    %103 = arith.divf %101, %102 : vector<8x32xf32>
    %104 = arith.mulf %95, %48 : vector<8x32xf32>
    %105 = arith.mulf %89, %97 : vector<8x32xf32>
    %106 = arith.addf %104, %105 : vector<8x32xf32>
    %107 = math.tanh %106 : vector<8x32xf32>
    %108 = arith.mulf %103, %107 : vector<8x32xf32>
    %109 = vector.extract_strided_slice %83 {offsets = [0, 0], sizes = [8, 32], strides = [1, 1]} : vector<8x128xf32> to vector<8x32xf32>
    %110 = arith.negf %109 : vector<8x32xf32>
    %111 = math.exp %110 : vector<8x32xf32>
    %cst_25 = arith.constant 1.000000e+00 : f32
    %112 = vector.broadcast %cst_25 : f32 to vector<8x32xf32>
    %113 = arith.addf %112, %111 : vector<8x32xf32>
    %114 = arith.divf %112, %113 : vector<8x32xf32>
    %115 = vector.extract_strided_slice %83 {offsets = [0, 32], sizes = [8, 32], strides = [1, 1]} : vector<8x128xf32> to vector<8x32xf32>
    %116 = arith.negf %115 : vector<8x32xf32>
    %117 = math.exp %116 : vector<8x32xf32>
    %cst_26 = arith.constant 1.000000e+00 : f32
    %118 = vector.broadcast %cst_26 : f32 to vector<8x32xf32>
    %119 = arith.addf %118, %117 : vector<8x32xf32>
    %120 = arith.divf %118, %119 : vector<8x32xf32>
    %121 = vector.extract_strided_slice %83 {offsets = [0, 64], sizes = [8, 32], strides = [1, 1]} : vector<8x128xf32> to vector<8x32xf32>
    %122 = math.tanh %121 : vector<8x32xf32>
    %123 = vector.extract_strided_slice %83 {offsets = [0, 96], sizes = [8, 32], strides = [1, 1]} : vector<8x128xf32> to vector<8x32xf32>
    %124 = arith.negf %123 : vector<8x32xf32>
    %125 = math.exp %124 : vector<8x32xf32>
    %cst_27 = arith.constant 1.000000e+00 : f32
    %126 = vector.broadcast %cst_27 : f32 to vector<8x32xf32>
    %127 = arith.addf %126, %125 : vector<8x32xf32>
    %128 = arith.divf %126, %127 : vector<8x32xf32>
    %129 = arith.mulf %120, %73 : vector<8x32xf32>
    %130 = arith.mulf %114, %122 : vector<8x32xf32>
    %131 = arith.addf %129, %130 : vector<8x32xf32>
    %132 = math.tanh %131 : vector<8x32xf32>
    %133 = arith.mulf %128, %132 : vector<8x32xf32>
    %134 = tpu.concatenate %108, %133 in 1 : vector<8x32xf32>, vector<8x32xf32> -> vector<8x64xf32>
    %cst_28 = arith.constant dense<0.000000e+00> : vector<8x256xf32>
    %135 = tpu.matmul %134, %13, %cst_28 {dimension_numbers = #tpu.dot_dimension_numbers<[1], [0], [0], [1], [0, 0, 1, 1], [], []>} : vector<8x64xf32>, vector<64x256xf32>, vector<8x256xf32> -> vector<8x256xf32>
    %136 = vector.extract_strided_slice %12 {offsets = [16, 0], sizes = [8, 128], strides = [1, 1]} : vector<64x256xf32> to vector<8x128xf32>
    %137 = vector.extract_strided_slice %135 {offsets = [0, 0], sizes = [8, 128], strides = [1, 1]} : vector<8x256xf32> to vector<8x128xf32>
    %138 = arith.addf %136, %137 : vector<8x128xf32>
    %139 = vector.extract_strided_slice %12 {offsets = [40, 128], sizes = [8, 128], strides = [1, 1]} : vector<64x256xf32> to vector<8x128xf32>
    %140 = vector.extract_strided_slice %135 {offsets = [0, 128], sizes = [8, 128], strides = [1, 1]} : vector<8x256xf32> to vector<8x128xf32>
    %141 = arith.addf %139, %140 : vector<8x128xf32>
    %142 = vector.extract_strided_slice %138 {offsets = [0, 0], sizes = [8, 32], strides = [1, 1]} : vector<8x128xf32> to vector<8x32xf32>
    %143 = arith.negf %142 : vector<8x32xf32>
    %144 = math.exp %143 : vector<8x32xf32>
    %cst_29 = arith.constant 1.000000e+00 : f32
    %145 = vector.broadcast %cst_29 : f32 to vector<8x32xf32>
    %146 = arith.addf %145, %144 : vector<8x32xf32>
    %147 = arith.divf %145, %146 : vector<8x32xf32>
    %148 = vector.extract_strided_slice %138 {offsets = [0, 32], sizes = [8, 32], strides = [1, 1]} : vector<8x128xf32> to vector<8x32xf32>
    %149 = arith.negf %148 : vector<8x32xf32>
    %150 = math.exp %149 : vector<8x32xf32>
    %cst_30 = arith.constant 1.000000e+00 : f32
    %151 = vector.broadcast %cst_30 : f32 to vector<8x32xf32>
    %152 = arith.addf %151, %150 : vector<8x32xf32>
    %153 = arith.divf %151, %152 : vector<8x32xf32>
    %154 = vector.extract_strided_slice %138 {offsets = [0, 64], sizes = [8, 32], strides = [1, 1]} : vector<8x128xf32> to vector<8x32xf32>
    %155 = math.tanh %154 : vector<8x32xf32>
    %156 = vector.extract_strided_slice %138 {offsets = [0, 96], sizes = [8, 32], strides = [1, 1]} : vector<8x128xf32> to vector<8x32xf32>
    %157 = arith.negf %156 : vector<8x32xf32>
    %158 = math.exp %157 : vector<8x32xf32>
    %cst_31 = arith.constant 1.000000e+00 : f32
    %159 = vector.broadcast %cst_31 : f32 to vector<8x32xf32>
    %160 = arith.addf %159, %158 : vector<8x32xf32>
    %161 = arith.divf %159, %160 : vector<8x32xf32>
    %162 = arith.mulf %153, %106 : vector<8x32xf32>
    %163 = arith.mulf %147, %155 : vector<8x32xf32>
    %164 = arith.addf %162, %163 : vector<8x32xf32>
    %165 = math.tanh %164 : vector<8x32xf32>
    %166 = arith.mulf %161, %165 : vector<8x32xf32>
    %167 = vector.extract_strided_slice %141 {offsets = [0, 0], sizes = [8, 32], strides = [1, 1]} : vector<8x128xf32> to vector<8x32xf32>
    %168 = arith.negf %167 : vector<8x32xf32>
    %169 = math.exp %168 : vector<8x32xf32>
    %cst_32 = arith.constant 1.000000e+00 : f32
    %170 = vector.broadcast %cst_32 : f32 to vector<8x32xf32>
    %171 = arith.addf %170, %169 : vector<8x32xf32>
    %172 = arith.divf %170, %171 : vector<8x32xf32>
    %173 = vector.extract_strided_slice %141 {offsets = [0, 32], sizes = [8, 32], strides = [1, 1]} : vector<8x128xf32> to vector<8x32xf32>
    %174 = arith.negf %173 : vector<8x32xf32>
    %175 = math.exp %174 : vector<8x32xf32>
    %cst_33 = arith.constant 1.000000e+00 : f32
    %176 = vector.broadcast %cst_33 : f32 to vector<8x32xf32>
    %177 = arith.addf %176, %175 : vector<8x32xf32>
    %178 = arith.divf %176, %177 : vector<8x32xf32>
    %179 = vector.extract_strided_slice %141 {offsets = [0, 64], sizes = [8, 32], strides = [1, 1]} : vector<8x128xf32> to vector<8x32xf32>
    %180 = math.tanh %179 : vector<8x32xf32>
    %181 = vector.extract_strided_slice %141 {offsets = [0, 96], sizes = [8, 32], strides = [1, 1]} : vector<8x128xf32> to vector<8x32xf32>
    %182 = arith.negf %181 : vector<8x32xf32>
    %183 = math.exp %182 : vector<8x32xf32>
    %cst_34 = arith.constant 1.000000e+00 : f32
    %184 = vector.broadcast %cst_34 : f32 to vector<8x32xf32>
    %185 = arith.addf %184, %183 : vector<8x32xf32>
    %186 = arith.divf %184, %185 : vector<8x32xf32>
    %187 = arith.mulf %178, %131 : vector<8x32xf32>
    %188 = arith.mulf %172, %180 : vector<8x32xf32>
    %189 = arith.addf %187, %188 : vector<8x32xf32>
    %190 = math.tanh %189 : vector<8x32xf32>
    %191 = arith.mulf %186, %190 : vector<8x32xf32>
    %192 = tpu.concatenate %166, %191 in 1 : vector<8x32xf32>, vector<8x32xf32> -> vector<8x64xf32>
    %cst_35 = arith.constant dense<0.000000e+00> : vector<8x256xf32>
    %193 = tpu.matmul %192, %13, %cst_35 {dimension_numbers = #tpu.dot_dimension_numbers<[1], [0], [0], [1], [0, 0, 1, 1], [], []>} : vector<8x64xf32>, vector<64x256xf32>, vector<8x256xf32> -> vector<8x256xf32>
    %194 = vector.extract_strided_slice %12 {offsets = [24, 0], sizes = [8, 128], strides = [1, 1]} : vector<64x256xf32> to vector<8x128xf32>
    %195 = vector.extract_strided_slice %193 {offsets = [0, 0], sizes = [8, 128], strides = [1, 1]} : vector<8x256xf32> to vector<8x128xf32>
    %196 = arith.addf %194, %195 : vector<8x128xf32>
    %197 = vector.extract_strided_slice %12 {offsets = [32, 128], sizes = [8, 128], strides = [1, 1]} : vector<64x256xf32> to vector<8x128xf32>
    %198 = vector.extract_strided_slice %193 {offsets = [0, 128], sizes = [8, 128], strides = [1, 1]} : vector<8x256xf32> to vector<8x128xf32>
    %199 = arith.addf %197, %198 : vector<8x128xf32>
    %200 = vector.extract_strided_slice %196 {offsets = [0, 0], sizes = [8, 32], strides = [1, 1]} : vector<8x128xf32> to vector<8x32xf32>
    %201 = arith.negf %200 : vector<8x32xf32>
    %202 = math.exp %201 : vector<8x32xf32>
    %cst_36 = arith.constant 1.000000e+00 : f32
    %203 = vector.broadcast %cst_36 : f32 to vector<8x32xf32>
    %204 = arith.addf %203, %202 : vector<8x32xf32>
    %205 = arith.divf %203, %204 : vector<8x32xf32>
    %206 = vector.extract_strided_slice %196 {offsets = [0, 32], sizes = [8, 32], strides = [1, 1]} : vector<8x128xf32> to vector<8x32xf32>
    %207 = arith.negf %206 : vector<8x32xf32>
    %208 = math.exp %207 : vector<8x32xf32>
    %cst_37 = arith.constant 1.000000e+00 : f32
    %209 = vector.broadcast %cst_37 : f32 to vector<8x32xf32>
    %210 = arith.addf %209, %208 : vector<8x32xf32>
    %211 = arith.divf %209, %210 : vector<8x32xf32>
    %212 = vector.extract_strided_slice %196 {offsets = [0, 64], sizes = [8, 32], strides = [1, 1]} : vector<8x128xf32> to vector<8x32xf32>
    %213 = math.tanh %212 : vector<8x32xf32>
    %214 = vector.extract_strided_slice %196 {offsets = [0, 96], sizes = [8, 32], strides = [1, 1]} : vector<8x128xf32> to vector<8x32xf32>
    %215 = arith.negf %214 : vector<8x32xf32>
    %216 = math.exp %215 : vector<8x32xf32>
    %cst_38 = arith.constant 1.000000e+00 : f32
    %217 = vector.broadcast %cst_38 : f32 to vector<8x32xf32>
    %218 = arith.addf %217, %216 : vector<8x32xf32>
    %219 = arith.divf %217, %218 : vector<8x32xf32>
    %220 = arith.mulf %211, %164 : vector<8x32xf32>
    %221 = arith.mulf %205, %213 : vector<8x32xf32>
    %222 = arith.addf %220, %221 : vector<8x32xf32>
    %223 = math.tanh %222 : vector<8x32xf32>
    %224 = arith.mulf %219, %223 : vector<8x32xf32>
    %225 = vector.extract_strided_slice %199 {offsets = [0, 0], sizes = [8, 32], strides = [1, 1]} : vector<8x128xf32> to vector<8x32xf32>
    %226 = arith.negf %225 : vector<8x32xf32>
    %227 = math.exp %226 : vector<8x32xf32>
    %cst_39 = arith.constant 1.000000e+00 : f32
    %228 = vector.broadcast %cst_39 : f32 to vector<8x32xf32>
    %229 = arith.addf %228, %227 : vector<8x32xf32>
    %230 = arith.divf %228, %229 : vector<8x32xf32>
    %231 = vector.extract_strided_slice %199 {offsets = [0, 32], sizes = [8, 32], strides = [1, 1]} : vector<8x128xf32> to vector<8x32xf32>
    %232 = arith.negf %231 : vector<8x32xf32>
    %233 = math.exp %232 : vector<8x32xf32>
    %cst_40 = arith.constant 1.000000e+00 : f32
    %234 = vector.broadcast %cst_40 : f32 to vector<8x32xf32>
    %235 = arith.addf %234, %233 : vector<8x32xf32>
    %236 = arith.divf %234, %235 : vector<8x32xf32>
    %237 = vector.extract_strided_slice %199 {offsets = [0, 64], sizes = [8, 32], strides = [1, 1]} : vector<8x128xf32> to vector<8x32xf32>
    %238 = math.tanh %237 : vector<8x32xf32>
    %239 = vector.extract_strided_slice %199 {offsets = [0, 96], sizes = [8, 32], strides = [1, 1]} : vector<8x128xf32> to vector<8x32xf32>
    %240 = arith.negf %239 : vector<8x32xf32>
    %241 = math.exp %240 : vector<8x32xf32>
    %cst_41 = arith.constant 1.000000e+00 : f32
    %242 = vector.broadcast %cst_41 : f32 to vector<8x32xf32>
    %243 = arith.addf %242, %241 : vector<8x32xf32>
    %244 = arith.divf %242, %243 : vector<8x32xf32>
    %245 = arith.mulf %236, %189 : vector<8x32xf32>
    %246 = arith.mulf %230, %238 : vector<8x32xf32>
    %247 = arith.addf %245, %246 : vector<8x32xf32>
    %248 = math.tanh %247 : vector<8x32xf32>
    %249 = arith.mulf %244, %248 : vector<8x32xf32>
    %250 = tpu.concatenate %224, %249 in 1 : vector<8x32xf32>, vector<8x32xf32> -> vector<8x64xf32>
    %cst_42 = arith.constant dense<0.000000e+00> : vector<8x256xf32>
    %251 = tpu.matmul %250, %13, %cst_42 {dimension_numbers = #tpu.dot_dimension_numbers<[1], [0], [0], [1], [0, 0, 1, 1], [], []>} : vector<8x64xf32>, vector<64x256xf32>, vector<8x256xf32> -> vector<8x256xf32>
    %252 = vector.extract_strided_slice %12 {offsets = [32, 0], sizes = [8, 128], strides = [1, 1]} : vector<64x256xf32> to vector<8x128xf32>
    %253 = vector.extract_strided_slice %251 {offsets = [0, 0], sizes = [8, 128], strides = [1, 1]} : vector<8x256xf32> to vector<8x128xf32>
    %254 = arith.addf %252, %253 : vector<8x128xf32>
    %255 = vector.extract_strided_slice %12 {offsets = [24, 128], sizes = [8, 128], strides = [1, 1]} : vector<64x256xf32> to vector<8x128xf32>
    %256 = vector.extract_strided_slice %251 {offsets = [0, 128], sizes = [8, 128], strides = [1, 1]} : vector<8x256xf32> to vector<8x128xf32>
    %257 = arith.addf %255, %256 : vector<8x128xf32>
    %258 = vector.extract_strided_slice %254 {offsets = [0, 0], sizes = [8, 32], strides = [1, 1]} : vector<8x128xf32> to vector<8x32xf32>
    %259 = arith.negf %258 : vector<8x32xf32>
    %260 = math.exp %259 : vector<8x32xf32>
    %cst_43 = arith.constant 1.000000e+00 : f32
    %261 = vector.broadcast %cst_43 : f32 to vector<8x32xf32>
    %262 = arith.addf %261, %260 : vector<8x32xf32>
    %263 = arith.divf %261, %262 : vector<8x32xf32>
    %264 = vector.extract_strided_slice %254 {offsets = [0, 32], sizes = [8, 32], strides = [1, 1]} : vector<8x128xf32> to vector<8x32xf32>
    %265 = arith.negf %264 : vector<8x32xf32>
    %266 = math.exp %265 : vector<8x32xf32>
    %cst_44 = arith.constant 1.000000e+00 : f32
    %267 = vector.broadcast %cst_44 : f32 to vector<8x32xf32>
    %268 = arith.addf %267, %266 : vector<8x32xf32>
    %269 = arith.divf %267, %268 : vector<8x32xf32>
    %270 = vector.extract_strided_slice %254 {offsets = [0, 64], sizes = [8, 32], strides = [1, 1]} : vector<8x128xf32> to vector<8x32xf32>
    %271 = math.tanh %270 : vector<8x32xf32>
    %272 = vector.extract_strided_slice %254 {offsets = [0, 96], sizes = [8, 32], strides = [1, 1]} : vector<8x128xf32> to vector<8x32xf32>
    %273 = arith.negf %272 : vector<8x32xf32>
    %274 = math.exp %273 : vector<8x32xf32>
    %cst_45 = arith.constant 1.000000e+00 : f32
    %275 = vector.broadcast %cst_45 : f32 to vector<8x32xf32>
    %276 = arith.addf %275, %274 : vector<8x32xf32>
    %277 = arith.divf %275, %276 : vector<8x32xf32>
    %278 = arith.mulf %269, %222 : vector<8x32xf32>
    %279 = arith.mulf %263, %271 : vector<8x32xf32>
    %280 = arith.addf %278, %279 : vector<8x32xf32>
    %281 = math.tanh %280 : vector<8x32xf32>
    %282 = arith.mulf %277, %281 : vector<8x32xf32>
    %283 = vector.extract_strided_slice %257 {offsets = [0, 0], sizes = [8, 32], strides = [1, 1]} : vector<8x128xf32> to vector<8x32xf32>
    %284 = arith.negf %283 : vector<8x32xf32>
    %285 = math.exp %284 : vector<8x32xf32>
    %cst_46 = arith.constant 1.000000e+00 : f32
    %286 = vector.broadcast %cst_46 : f32 to vector<8x32xf32>
    %287 = arith.addf %286, %285 : vector<8x32xf32>
    %288 = arith.divf %286, %287 : vector<8x32xf32>
    %289 = vector.extract_strided_slice %257 {offsets = [0, 32], sizes = [8, 32], strides = [1, 1]} : vector<8x128xf32> to vector<8x32xf32>
    %290 = arith.negf %289 : vector<8x32xf32>
    %291 = math.exp %290 : vector<8x32xf32>
    %cst_47 = arith.constant 1.000000e+00 : f32
    %292 = vector.broadcast %cst_47 : f32 to vector<8x32xf32>
    %293 = arith.addf %292, %291 : vector<8x32xf32>
    %294 = arith.divf %292, %293 : vector<8x32xf32>
    %295 = vector.extract_strided_slice %257 {offsets = [0, 64], sizes = [8, 32], strides = [1, 1]} : vector<8x128xf32> to vector<8x32xf32>
    %296 = math.tanh %295 : vector<8x32xf32>
    %297 = vector.extract_strided_slice %257 {offsets = [0, 96], sizes = [8, 32], strides = [1, 1]} : vector<8x128xf32> to vector<8x32xf32>
    %298 = arith.negf %297 : vector<8x32xf32>
    %299 = math.exp %298 : vector<8x32xf32>
    %cst_48 = arith.constant 1.000000e+00 : f32
    %300 = vector.broadcast %cst_48 : f32 to vector<8x32xf32>
    %301 = arith.addf %300, %299 : vector<8x32xf32>
    %302 = arith.divf %300, %301 : vector<8x32xf32>
    %303 = arith.mulf %294, %247 : vector<8x32xf32>
    %304 = arith.mulf %288, %296 : vector<8x32xf32>
    %305 = arith.addf %303, %304 : vector<8x32xf32>
    %306 = math.tanh %305 : vector<8x32xf32>
    %307 = arith.mulf %302, %306 : vector<8x32xf32>
    %308 = tpu.concatenate %282, %307 in 1 : vector<8x32xf32>, vector<8x32xf32> -> vector<8x64xf32>
    %cst_49 = arith.constant dense<0.000000e+00> : vector<8x256xf32>
    %309 = tpu.matmul %308, %13, %cst_49 {dimension_numbers = #tpu.dot_dimension_numbers<[1], [0], [0], [1], [0, 0, 1, 1], [], []>} : vector<8x64xf32>, vector<64x256xf32>, vector<8x256xf32> -> vector<8x256xf32>
    %310 = vector.extract_strided_slice %12 {offsets = [40, 0], sizes = [8, 128], strides = [1, 1]} : vector<64x256xf32> to vector<8x128xf32>
    %311 = vector.extract_strided_slice %309 {offsets = [0, 0], sizes = [8, 128], strides = [1, 1]} : vector<8x256xf32> to vector<8x128xf32>
    %312 = arith.addf %310, %311 : vector<8x128xf32>
    %313 = vector.extract_strided_slice %12 {offsets = [16, 128], sizes = [8, 128], strides = [1, 1]} : vector<64x256xf32> to vector<8x128xf32>
    %314 = vector.extract_strided_slice %309 {offsets = [0, 128], sizes = [8, 128], strides = [1, 1]} : vector<8x256xf32> to vector<8x128xf32>
    %315 = arith.addf %313, %314 : vector<8x128xf32>
    %316 = vector.extract_strided_slice %312 {offsets = [0, 0], sizes = [8, 32], strides = [1, 1]} : vector<8x128xf32> to vector<8x32xf32>
    %317 = arith.negf %316 : vector<8x32xf32>
    %318 = math.exp %317 : vector<8x32xf32>
    %cst_50 = arith.constant 1.000000e+00 : f32
    %319 = vector.broadcast %cst_50 : f32 to vector<8x32xf32>
    %320 = arith.addf %319, %318 : vector<8x32xf32>
    %321 = arith.divf %319, %320 : vector<8x32xf32>
    %322 = vector.extract_strided_slice %312 {offsets = [0, 32], sizes = [8, 32], strides = [1, 1]} : vector<8x128xf32> to vector<8x32xf32>
    %323 = arith.negf %322 : vector<8x32xf32>
    %324 = math.exp %323 : vector<8x32xf32>
    %cst_51 = arith.constant 1.000000e+00 : f32
    %325 = vector.broadcast %cst_51 : f32 to vector<8x32xf32>
    %326 = arith.addf %325, %324 : vector<8x32xf32>
    %327 = arith.divf %325, %326 : vector<8x32xf32>
    %328 = vector.extract_strided_slice %312 {offsets = [0, 64], sizes = [8, 32], strides = [1, 1]} : vector<8x128xf32> to vector<8x32xf32>
    %329 = math.tanh %328 : vector<8x32xf32>
    %330 = vector.extract_strided_slice %312 {offsets = [0, 96], sizes = [8, 32], strides = [1, 1]} : vector<8x128xf32> to vector<8x32xf32>
    %331 = arith.negf %330 : vector<8x32xf32>
    %332 = math.exp %331 : vector<8x32xf32>
    %cst_52 = arith.constant 1.000000e+00 : f32
    %333 = vector.broadcast %cst_52 : f32 to vector<8x32xf32>
    %334 = arith.addf %333, %332 : vector<8x32xf32>
    %335 = arith.divf %333, %334 : vector<8x32xf32>
    %336 = arith.mulf %327, %280 : vector<8x32xf32>
    %337 = arith.mulf %321, %329 : vector<8x32xf32>
    %338 = arith.addf %336, %337 : vector<8x32xf32>
    %339 = math.tanh %338 : vector<8x32xf32>
    %340 = arith.mulf %335, %339 : vector<8x32xf32>
    %341 = vector.extract_strided_slice %315 {offsets = [0, 0], sizes = [8, 32], strides = [1, 1]} : vector<8x128xf32> to vector<8x32xf32>
    %342 = arith.negf %341 : vector<8x32xf32>
    %343 = math.exp %342 : vector<8x32xf32>
    %cst_53 = arith.constant 1.000000e+00 : f32
    %344 = vector.broadcast %cst_53 : f32 to vector<8x32xf32>
    %345 = arith.addf %344, %343 : vector<8x32xf32>
    %346 = arith.divf %344, %345 : vector<8x32xf32>
    %347 = vector.extract_strided_slice %315 {offsets = [0, 32], sizes = [8, 32], strides = [1, 1]} : vector<8x128xf32> to vector<8x32xf32>
    %348 = arith.negf %347 : vector<8x32xf32>
    %349 = math.exp %348 : vector<8x32xf32>
    %cst_54 = arith.constant 1.000000e+00 : f32
    %350 = vector.broadcast %cst_54 : f32 to vector<8x32xf32>
    %351 = arith.addf %350, %349 : vector<8x32xf32>
    %352 = arith.divf %350, %351 : vector<8x32xf32>
    %353 = vector.extract_strided_slice %315 {offsets = [0, 64], sizes = [8, 32], strides = [1, 1]} : vector<8x128xf32> to vector<8x32xf32>
    %354 = math.tanh %353 : vector<8x32xf32>
    %355 = vector.extract_strided_slice %315 {offsets = [0, 96], sizes = [8, 32], strides = [1, 1]} : vector<8x128xf32> to vector<8x32xf32>
    %356 = arith.negf %355 : vector<8x32xf32>
    %357 = math.exp %356 : vector<8x32xf32>
    %cst_55 = arith.constant 1.000000e+00 : f32
    %358 = vector.broadcast %cst_55 : f32 to vector<8x32xf32>
    %359 = arith.addf %358, %357 : vector<8x32xf32>
    %360 = arith.divf %358, %359 : vector<8x32xf32>
    %361 = arith.mulf %352, %305 : vector<8x32xf32>
    %362 = arith.mulf %346, %354 : vector<8x32xf32>
    %363 = arith.addf %361, %362 : vector<8x32xf32>
    %364 = math.tanh %363 : vector<8x32xf32>
    %365 = arith.mulf %360, %364 : vector<8x32xf32>
    %366 = tpu.concatenate %340, %365 in 1 : vector<8x32xf32>, vector<8x32xf32> -> vector<8x64xf32>
    %cst_56 = arith.constant dense<0.000000e+00> : vector<8x256xf32>
    %367 = tpu.matmul %366, %13, %cst_56 {dimension_numbers = #tpu.dot_dimension_numbers<[1], [0], [0], [1], [0, 0, 1, 1], [], []>} : vector<8x64xf32>, vector<64x256xf32>, vector<8x256xf32> -> vector<8x256xf32>
    %368 = vector.extract_strided_slice %12 {offsets = [48, 0], sizes = [8, 128], strides = [1, 1]} : vector<64x256xf32> to vector<8x128xf32>
    %369 = vector.extract_strided_slice %367 {offsets = [0, 0], sizes = [8, 128], strides = [1, 1]} : vector<8x256xf32> to vector<8x128xf32>
    %370 = arith.addf %368, %369 : vector<8x128xf32>
    %371 = vector.extract_strided_slice %12 {offsets = [8, 128], sizes = [8, 128], strides = [1, 1]} : vector<64x256xf32> to vector<8x128xf32>
    %372 = vector.extract_strided_slice %367 {offsets = [0, 128], sizes = [8, 128], strides = [1, 1]} : vector<8x256xf32> to vector<8x128xf32>
    %373 = arith.addf %371, %372 : vector<8x128xf32>
    %374 = vector.extract_strided_slice %370 {offsets = [0, 0], sizes = [8, 32], strides = [1, 1]} : vector<8x128xf32> to vector<8x32xf32>
    %375 = arith.negf %374 : vector<8x32xf32>
    %376 = math.exp %375 : vector<8x32xf32>
    %cst_57 = arith.constant 1.000000e+00 : f32
    %377 = vector.broadcast %cst_57 : f32 to vector<8x32xf32>
    %378 = arith.addf %377, %376 : vector<8x32xf32>
    %379 = arith.divf %377, %378 : vector<8x32xf32>
    %380 = vector.extract_strided_slice %370 {offsets = [0, 32], sizes = [8, 32], strides = [1, 1]} : vector<8x128xf32> to vector<8x32xf32>
    %381 = arith.negf %380 : vector<8x32xf32>
    %382 = math.exp %381 : vector<8x32xf32>
    %cst_58 = arith.constant 1.000000e+00 : f32
    %383 = vector.broadcast %cst_58 : f32 to vector<8x32xf32>
    %384 = arith.addf %383, %382 : vector<8x32xf32>
    %385 = arith.divf %383, %384 : vector<8x32xf32>
    %386 = vector.extract_strided_slice %370 {offsets = [0, 64], sizes = [8, 32], strides = [1, 1]} : vector<8x128xf32> to vector<8x32xf32>
    %387 = math.tanh %386 : vector<8x32xf32>
    %388 = vector.extract_strided_slice %370 {offsets = [0, 96], sizes = [8, 32], strides = [1, 1]} : vector<8x128xf32> to vector<8x32xf32>
    %389 = arith.negf %388 : vector<8x32xf32>
    %390 = math.exp %389 : vector<8x32xf32>
    %cst_59 = arith.constant 1.000000e+00 : f32
    %391 = vector.broadcast %cst_59 : f32 to vector<8x32xf32>
    %392 = arith.addf %391, %390 : vector<8x32xf32>
    %393 = arith.divf %391, %392 : vector<8x32xf32>
    %394 = arith.mulf %385, %338 : vector<8x32xf32>
    %395 = arith.mulf %379, %387 : vector<8x32xf32>
    %396 = arith.addf %394, %395 : vector<8x32xf32>
    %397 = math.tanh %396 : vector<8x32xf32>
    %398 = arith.mulf %393, %397 : vector<8x32xf32>
    %399 = vector.extract_strided_slice %373 {offsets = [0, 0], sizes = [8, 32], strides = [1, 1]} : vector<8x128xf32> to vector<8x32xf32>
    %400 = arith.negf %399 : vector<8x32xf32>
    %401 = math.exp %400 : vector<8x32xf32>
    %cst_60 = arith.constant 1.000000e+00 : f32
    %402 = vector.broadcast %cst_60 : f32 to vector<8x32xf32>
    %403 = arith.addf %402, %401 : vector<8x32xf32>
    %404 = arith.divf %402, %403 : vector<8x32xf32>
    %405 = vector.extract_strided_slice %373 {offsets = [0, 32], sizes = [8, 32], strides = [1, 1]} : vector<8x128xf32> to vector<8x32xf32>
    %406 = arith.negf %405 : vector<8x32xf32>
    %407 = math.exp %406 : vector<8x32xf32>
    %cst_61 = arith.constant 1.000000e+00 : f32
    %408 = vector.broadcast %cst_61 : f32 to vector<8x32xf32>
    %409 = arith.addf %408, %407 : vector<8x32xf32>
    %410 = arith.divf %408, %409 : vector<8x32xf32>
    %411 = vector.extract_strided_slice %373 {offsets = [0, 64], sizes = [8, 32], strides = [1, 1]} : vector<8x128xf32> to vector<8x32xf32>
    %412 = math.tanh %411 : vector<8x32xf32>
    %413 = vector.extract_strided_slice %373 {offsets = [0, 96], sizes = [8, 32], strides = [1, 1]} : vector<8x128xf32> to vector<8x32xf32>
    %414 = arith.negf %413 : vector<8x32xf32>
    %415 = math.exp %414 : vector<8x32xf32>
    %cst_62 = arith.constant 1.000000e+00 : f32
    %416 = vector.broadcast %cst_62 : f32 to vector<8x32xf32>
    %417 = arith.addf %416, %415 : vector<8x32xf32>
    %418 = arith.divf %416, %417 : vector<8x32xf32>
    %419 = arith.mulf %410, %363 : vector<8x32xf32>
    %420 = arith.mulf %404, %412 : vector<8x32xf32>
    %421 = arith.addf %419, %420 : vector<8x32xf32>
    %422 = math.tanh %421 : vector<8x32xf32>
    %423 = arith.mulf %418, %422 : vector<8x32xf32>
    %424 = tpu.concatenate %398, %423 in 1 : vector<8x32xf32>, vector<8x32xf32> -> vector<8x64xf32>
    %cst_63 = arith.constant dense<0.000000e+00> : vector<8x256xf32>
    %425 = tpu.matmul %424, %13, %cst_63 {dimension_numbers = #tpu.dot_dimension_numbers<[1], [0], [0], [1], [0, 0, 1, 1], [], []>} : vector<8x64xf32>, vector<64x256xf32>, vector<8x256xf32> -> vector<8x256xf32>
    %426 = vector.extract_strided_slice %12 {offsets = [56, 0], sizes = [8, 128], strides = [1, 1]} : vector<64x256xf32> to vector<8x128xf32>
    %427 = vector.extract_strided_slice %425 {offsets = [0, 0], sizes = [8, 128], strides = [1, 1]} : vector<8x256xf32> to vector<8x128xf32>
    %428 = arith.addf %426, %427 : vector<8x128xf32>
    %429 = vector.extract_strided_slice %12 {offsets = [0, 128], sizes = [8, 128], strides = [1, 1]} : vector<64x256xf32> to vector<8x128xf32>
    %430 = vector.extract_strided_slice %425 {offsets = [0, 128], sizes = [8, 128], strides = [1, 1]} : vector<8x256xf32> to vector<8x128xf32>
    %431 = arith.addf %429, %430 : vector<8x128xf32>
    %432 = vector.extract_strided_slice %428 {offsets = [0, 0], sizes = [8, 32], strides = [1, 1]} : vector<8x128xf32> to vector<8x32xf32>
    %433 = arith.negf %432 : vector<8x32xf32>
    %434 = math.exp %433 : vector<8x32xf32>
    %cst_64 = arith.constant 1.000000e+00 : f32
    %435 = vector.broadcast %cst_64 : f32 to vector<8x32xf32>
    %436 = arith.addf %435, %434 : vector<8x32xf32>
    %437 = arith.divf %435, %436 : vector<8x32xf32>
    %438 = vector.extract_strided_slice %428 {offsets = [0, 32], sizes = [8, 32], strides = [1, 1]} : vector<8x128xf32> to vector<8x32xf32>
    %439 = arith.negf %438 : vector<8x32xf32>
    %440 = math.exp %439 : vector<8x32xf32>
    %cst_65 = arith.constant 1.000000e+00 : f32
    %441 = vector.broadcast %cst_65 : f32 to vector<8x32xf32>
    %442 = arith.addf %441, %440 : vector<8x32xf32>
    %443 = arith.divf %441, %442 : vector<8x32xf32>
    %444 = vector.extract_strided_slice %428 {offsets = [0, 64], sizes = [8, 32], strides = [1, 1]} : vector<8x128xf32> to vector<8x32xf32>
    %445 = math.tanh %444 : vector<8x32xf32>
    %446 = vector.extract_strided_slice %428 {offsets = [0, 96], sizes = [8, 32], strides = [1, 1]} : vector<8x128xf32> to vector<8x32xf32>
    %447 = arith.negf %446 : vector<8x32xf32>
    %448 = math.exp %447 : vector<8x32xf32>
    %cst_66 = arith.constant 1.000000e+00 : f32
    %449 = vector.broadcast %cst_66 : f32 to vector<8x32xf32>
    %450 = arith.addf %449, %448 : vector<8x32xf32>
    %451 = arith.divf %449, %450 : vector<8x32xf32>
    %452 = arith.mulf %443, %396 : vector<8x32xf32>
    %453 = arith.mulf %437, %445 : vector<8x32xf32>
    %454 = arith.addf %452, %453 : vector<8x32xf32>
    %455 = math.tanh %454 : vector<8x32xf32>
    %456 = arith.mulf %451, %455 : vector<8x32xf32>
    %457 = vector.extract_strided_slice %431 {offsets = [0, 0], sizes = [8, 32], strides = [1, 1]} : vector<8x128xf32> to vector<8x32xf32>
    %458 = arith.negf %457 : vector<8x32xf32>
    %459 = math.exp %458 : vector<8x32xf32>
    %cst_67 = arith.constant 1.000000e+00 : f32
    %460 = vector.broadcast %cst_67 : f32 to vector<8x32xf32>
    %461 = arith.addf %460, %459 : vector<8x32xf32>
    %462 = arith.divf %460, %461 : vector<8x32xf32>
    %463 = vector.extract_strided_slice %431 {offsets = [0, 32], sizes = [8, 32], strides = [1, 1]} : vector<8x128xf32> to vector<8x32xf32>
    %464 = arith.negf %463 : vector<8x32xf32>
    %465 = math.exp %464 : vector<8x32xf32>
    %cst_68 = arith.constant 1.000000e+00 : f32
    %466 = vector.broadcast %cst_68 : f32 to vector<8x32xf32>
    %467 = arith.addf %466, %465 : vector<8x32xf32>
    %468 = arith.divf %466, %467 : vector<8x32xf32>
    %469 = vector.extract_strided_slice %431 {offsets = [0, 64], sizes = [8, 32], strides = [1, 1]} : vector<8x128xf32> to vector<8x32xf32>
    %470 = math.tanh %469 : vector<8x32xf32>
    %471 = vector.extract_strided_slice %431 {offsets = [0, 96], sizes = [8, 32], strides = [1, 1]} : vector<8x128xf32> to vector<8x32xf32>
    %472 = arith.negf %471 : vector<8x32xf32>
    %473 = math.exp %472 : vector<8x32xf32>
    %cst_69 = arith.constant 1.000000e+00 : f32
    %474 = vector.broadcast %cst_69 : f32 to vector<8x32xf32>
    %475 = arith.addf %474, %473 : vector<8x32xf32>
    %476 = arith.divf %474, %475 : vector<8x32xf32>
    %477 = arith.mulf %468, %421 : vector<8x32xf32>
    %478 = arith.mulf %462, %470 : vector<8x32xf32>
    %479 = arith.addf %477, %478 : vector<8x32xf32>
    %480 = math.tanh %479 : vector<8x32xf32>
    %481 = arith.mulf %476, %480 : vector<8x32xf32>
    %482 = tpu.concatenate %456, %481, %454, %479 in 1 : vector<8x32xf32>, vector<8x32xf32>, vector<8x32xf32>, vector<8x32xf32> -> vector<8x128xf32>
    %c0_70 = arith.constant 0 : index
    %c0_71 = arith.constant 0 : index
    %483 = vector.load %arg5[%c0_70, %c0_71] : memref<128x96xf32, #tpu.memory_space<vmem>>, vector<128x96xf32>
    %cst_72 = arith.constant dense<0.000000e+00> : vector<8x96xf32>
    %484 = tpu.matmul %482, %483, %cst_72 {dimension_numbers = #tpu.dot_dimension_numbers<[1], [0], [0], [1], [0, 0, 1, 1], [], []>} : vector<8x128xf32>, vector<128x96xf32>, vector<8x96xf32> -> vector<8x96xf32>
    %c0_73 = arith.constant 0 : index
    %c0_74 = arith.constant 0 : index
    %485 = vector.load %arg6[%c0_73, %c0_74] : memref<1x96xf32, #tpu.memory_space<vmem>>, vector<1x96xf32>
    %486 = vector.broadcast %485 : vector<1x96xf32> to vector<8x96xf32>
    %487 = arith.addf %484, %486 : vector<8x96xf32>
    %488 = vector.extract_strided_slice %487 {offsets = [0, 0], sizes = [8, 16], strides = [1, 1]} : vector<8x96xf32> to vector<8x16xf32>
    %489 = vector.extract_strided_slice %487 {offsets = [0, 16], sizes = [8, 16], strides = [1, 1]} : vector<8x96xf32> to vector<8x16xf32>
    %490 = vector.extract_strided_slice %487 {offsets = [0, 32], sizes = [8, 32], strides = [1, 1]} : vector<8x96xf32> to vector<8x32xf32>
    %491 = vector.extract_strided_slice %487 {offsets = [0, 64], sizes = [8, 32], strides = [1, 1]} : vector<8x96xf32> to vector<8x32xf32>
    %c0_75 = arith.constant 0 : index
    %c0_76 = arith.constant 0 : index
    %492 = vector.load %arg7[%c0_75, %c0_76] : memref<32x128xf32, #tpu.memory_space<vmem>>, vector<32x128xf32>
    %cst_77 = arith.constant dense<0.000000e+00> : vector<64x128xf32>
    %493 = tpu.matmul %7, %492, %cst_77 {dimension_numbers = #tpu.dot_dimension_numbers<[1], [0], [0], [1], [0, 0, 1, 1], [], []>} : vector<64x32xf32>, vector<32x128xf32>, vector<64x128xf32> -> vector<64x128xf32>
    %c0_78 = arith.constant 0 : index
    %c0_79 = arith.constant 0 : index
    %494 = vector.load %arg8[%c0_78, %c0_79] : memref<32x128xf32, #tpu.memory_space<vmem>>, vector<32x128xf32>
    %cst_80 = arith.constant dense<0.000000e+00> : vector<8x128xf32>
    %495 = tpu.matmul %490, %494, %cst_80 {dimension_numbers = #tpu.dot_dimension_numbers<[1], [0], [0], [1], [0, 0, 1, 1], [], []>} : vector<8x32xf32>, vector<32x128xf32>, vector<8x128xf32> -> vector<8x128xf32>
    %c0_81 = arith.constant 0 : index
    %c0_82 = arith.constant 0 : index
    %496 = vector.load %arg10[%c0_81, %c0_82] : memref<1x128xf32, #tpu.memory_space<vmem>>, vector<1x128xf32>
    %497 = vector.broadcast %496 : vector<1x128xf32> to vector<8x128xf32>
    %498 = arith.addf %495, %497 : vector<8x128xf32>
    %c0_83 = arith.constant 0 : index
    %c0_84 = arith.constant 0 : index
    %499 = vector.load %arg9[%c0_83, %c0_84] : memref<32x128xf32, #tpu.memory_space<vmem>>, vector<32x128xf32>
    %500 = vector.extract_strided_slice %493 {offsets = [0, 0], sizes = [8, 128], strides = [1, 1]} : vector<64x128xf32> to vector<8x128xf32>
    %cst_85 = arith.constant dense<0.000000e+00> : vector<8x128xf32>
    %501 = tpu.matmul %490, %499, %cst_85 {dimension_numbers = #tpu.dot_dimension_numbers<[1], [0], [0], [1], [0, 0, 1, 1], [], []>} : vector<8x32xf32>, vector<32x128xf32>, vector<8x128xf32> -> vector<8x128xf32>
    %502 = arith.addf %500, %501 : vector<8x128xf32>
    %503 = arith.addf %502, %498 : vector<8x128xf32>
    %504 = vector.extract_strided_slice %503 {offsets = [0, 0], sizes = [8, 32], strides = [1, 1]} : vector<8x128xf32> to vector<8x32xf32>
    %505 = arith.negf %504 : vector<8x32xf32>
    %506 = math.exp %505 : vector<8x32xf32>
    %cst_86 = arith.constant 1.000000e+00 : f32
    %507 = vector.broadcast %cst_86 : f32 to vector<8x32xf32>
    %508 = arith.addf %507, %506 : vector<8x32xf32>
    %509 = arith.divf %507, %508 : vector<8x32xf32>
    %510 = vector.extract_strided_slice %503 {offsets = [0, 32], sizes = [8, 32], strides = [1, 1]} : vector<8x128xf32> to vector<8x32xf32>
    %511 = arith.negf %510 : vector<8x32xf32>
    %512 = math.exp %511 : vector<8x32xf32>
    %cst_87 = arith.constant 1.000000e+00 : f32
    %513 = vector.broadcast %cst_87 : f32 to vector<8x32xf32>
    %514 = arith.addf %513, %512 : vector<8x32xf32>
    %515 = arith.divf %513, %514 : vector<8x32xf32>
    %516 = vector.extract_strided_slice %503 {offsets = [0, 64], sizes = [8, 32], strides = [1, 1]} : vector<8x128xf32> to vector<8x32xf32>
    %517 = math.tanh %516 : vector<8x32xf32>
    %518 = vector.extract_strided_slice %503 {offsets = [0, 96], sizes = [8, 32], strides = [1, 1]} : vector<8x128xf32> to vector<8x32xf32>
    %519 = arith.negf %518 : vector<8x32xf32>
    %520 = math.exp %519 : vector<8x32xf32>
    %cst_88 = arith.constant 1.000000e+00 : f32
    %521 = vector.broadcast %cst_88 : f32 to vector<8x32xf32>
    %522 = arith.addf %521, %520 : vector<8x32xf32>
    %523 = arith.divf %521, %522 : vector<8x32xf32>
    %524 = arith.mulf %515, %491 : vector<8x32xf32>
    %525 = arith.mulf %509, %517 : vector<8x32xf32>
    %526 = arith.addf %524, %525 : vector<8x32xf32>
    %527 = math.tanh %526 : vector<8x32xf32>
    %528 = arith.mulf %523, %527 : vector<8x32xf32>
    %529 = vector.extract_strided_slice %493 {offsets = [8, 0], sizes = [8, 128], strides = [1, 1]} : vector<64x128xf32> to vector<8x128xf32>
    %cst_89 = arith.constant dense<0.000000e+00> : vector<8x128xf32>
    %530 = tpu.matmul %528, %499, %cst_89 {dimension_numbers = #tpu.dot_dimension_numbers<[1], [0], [0], [1], [0, 0, 1, 1], [], []>} : vector<8x32xf32>, vector<32x128xf32>, vector<8x128xf32> -> vector<8x128xf32>
    %531 = arith.addf %529, %530 : vector<8x128xf32>
    %532 = arith.addf %531, %498 : vector<8x128xf32>
    %533 = vector.extract_strided_slice %532 {offsets = [0, 0], sizes = [8, 32], strides = [1, 1]} : vector<8x128xf32> to vector<8x32xf32>
    %534 = arith.negf %533 : vector<8x32xf32>
    %535 = math.exp %534 : vector<8x32xf32>
    %cst_90 = arith.constant 1.000000e+00 : f32
    %536 = vector.broadcast %cst_90 : f32 to vector<8x32xf32>
    %537 = arith.addf %536, %535 : vector<8x32xf32>
    %538 = arith.divf %536, %537 : vector<8x32xf32>
    %539 = vector.extract_strided_slice %532 {offsets = [0, 32], sizes = [8, 32], strides = [1, 1]} : vector<8x128xf32> to vector<8x32xf32>
    %540 = arith.negf %539 : vector<8x32xf32>
    %541 = math.exp %540 : vector<8x32xf32>
    %cst_91 = arith.constant 1.000000e+00 : f32
    %542 = vector.broadcast %cst_91 : f32 to vector<8x32xf32>
    %543 = arith.addf %542, %541 : vector<8x32xf32>
    %544 = arith.divf %542, %543 : vector<8x32xf32>
    %545 = vector.extract_strided_slice %532 {offsets = [0, 64], sizes = [8, 32], strides = [1, 1]} : vector<8x128xf32> to vector<8x32xf32>
    %546 = math.tanh %545 : vector<8x32xf32>
    %547 = vector.extract_strided_slice %532 {offsets = [0, 96], sizes = [8, 32], strides = [1, 1]} : vector<8x128xf32> to vector<8x32xf32>
    %548 = arith.negf %547 : vector<8x32xf32>
    %549 = math.exp %548 : vector<8x32xf32>
    %cst_92 = arith.constant 1.000000e+00 : f32
    %550 = vector.broadcast %cst_92 : f32 to vector<8x32xf32>
    %551 = arith.addf %550, %549 : vector<8x32xf32>
    %552 = arith.divf %550, %551 : vector<8x32xf32>
    %553 = arith.mulf %544, %526 : vector<8x32xf32>
    %554 = arith.mulf %538, %546 : vector<8x32xf32>
    %555 = arith.addf %553, %554 : vector<8x32xf32>
    %556 = math.tanh %555 : vector<8x32xf32>
    %557 = arith.mulf %552, %556 : vector<8x32xf32>
    %558 = vector.extract_strided_slice %493 {offsets = [16, 0], sizes = [8, 128], strides = [1, 1]} : vector<64x128xf32> to vector<8x128xf32>
    %cst_93 = arith.constant dense<0.000000e+00> : vector<8x128xf32>
    %559 = tpu.matmul %557, %499, %cst_93 {dimension_numbers = #tpu.dot_dimension_numbers<[1], [0], [0], [1], [0, 0, 1, 1], [], []>} : vector<8x32xf32>, vector<32x128xf32>, vector<8x128xf32> -> vector<8x128xf32>
    %560 = arith.addf %558, %559 : vector<8x128xf32>
    %561 = arith.addf %560, %498 : vector<8x128xf32>
    %562 = vector.extract_strided_slice %561 {offsets = [0, 0], sizes = [8, 32], strides = [1, 1]} : vector<8x128xf32> to vector<8x32xf32>
    %563 = arith.negf %562 : vector<8x32xf32>
    %564 = math.exp %563 : vector<8x32xf32>
    %cst_94 = arith.constant 1.000000e+00 : f32
    %565 = vector.broadcast %cst_94 : f32 to vector<8x32xf32>
    %566 = arith.addf %565, %564 : vector<8x32xf32>
    %567 = arith.divf %565, %566 : vector<8x32xf32>
    %568 = vector.extract_strided_slice %561 {offsets = [0, 32], sizes = [8, 32], strides = [1, 1]} : vector<8x128xf32> to vector<8x32xf32>
    %569 = arith.negf %568 : vector<8x32xf32>
    %570 = math.exp %569 : vector<8x32xf32>
    %cst_95 = arith.constant 1.000000e+00 : f32
    %571 = vector.broadcast %cst_95 : f32 to vector<8x32xf32>
    %572 = arith.addf %571, %570 : vector<8x32xf32>
    %573 = arith.divf %571, %572 : vector<8x32xf32>
    %574 = vector.extract_strided_slice %561 {offsets = [0, 64], sizes = [8, 32], strides = [1, 1]} : vector<8x128xf32> to vector<8x32xf32>
    %575 = math.tanh %574 : vector<8x32xf32>
    %576 = vector.extract_strided_slice %561 {offsets = [0, 96], sizes = [8, 32], strides = [1, 1]} : vector<8x128xf32> to vector<8x32xf32>
    %577 = arith.negf %576 : vector<8x32xf32>
    %578 = math.exp %577 : vector<8x32xf32>
    %cst_96 = arith.constant 1.000000e+00 : f32
    %579 = vector.broadcast %cst_96 : f32 to vector<8x32xf32>
    %580 = arith.addf %579, %578 : vector<8x32xf32>
    %581 = arith.divf %579, %580 : vector<8x32xf32>
    %582 = arith.mulf %573, %555 : vector<8x32xf32>
    %583 = arith.mulf %567, %575 : vector<8x32xf32>
    %584 = arith.addf %582, %583 : vector<8x32xf32>
    %585 = math.tanh %584 : vector<8x32xf32>
    %586 = arith.mulf %581, %585 : vector<8x32xf32>
    %587 = vector.extract_strided_slice %493 {offsets = [24, 0], sizes = [8, 128], strides = [1, 1]} : vector<64x128xf32> to vector<8x128xf32>
    %cst_97 = arith.constant dense<0.000000e+00> : vector<8x128xf32>
    %588 = tpu.matmul %586, %499, %cst_97 {dimension_numbers = #tpu.dot_dimension_numbers<[1], [0], [0], [1], [0, 0, 1, 1], [], []>} : vector<8x32xf32>, vector<32x128xf32>, vector<8x128xf32> -> vector<8x128xf32>
    %589 = arith.addf %587, %588 : vector<8x128xf32>
    %590 = arith.addf %589, %498 : vector<8x128xf32>
    %591 = vector.extract_strided_slice %590 {offsets = [0, 0], sizes = [8, 32], strides = [1, 1]} : vector<8x128xf32> to vector<8x32xf32>
    %592 = arith.negf %591 : vector<8x32xf32>
    %593 = math.exp %592 : vector<8x32xf32>
    %cst_98 = arith.constant 1.000000e+00 : f32
    %594 = vector.broadcast %cst_98 : f32 to vector<8x32xf32>
    %595 = arith.addf %594, %593 : vector<8x32xf32>
    %596 = arith.divf %594, %595 : vector<8x32xf32>
    %597 = vector.extract_strided_slice %590 {offsets = [0, 32], sizes = [8, 32], strides = [1, 1]} : vector<8x128xf32> to vector<8x32xf32>
    %598 = arith.negf %597 : vector<8x32xf32>
    %599 = math.exp %598 : vector<8x32xf32>
    %cst_99 = arith.constant 1.000000e+00 : f32
    %600 = vector.broadcast %cst_99 : f32 to vector<8x32xf32>
    %601 = arith.addf %600, %599 : vector<8x32xf32>
    %602 = arith.divf %600, %601 : vector<8x32xf32>
    %603 = vector.extract_strided_slice %590 {offsets = [0, 64], sizes = [8, 32], strides = [1, 1]} : vector<8x128xf32> to vector<8x32xf32>
    %604 = math.tanh %603 : vector<8x32xf32>
    %605 = vector.extract_strided_slice %590 {offsets = [0, 96], sizes = [8, 32], strides = [1, 1]} : vector<8x128xf32> to vector<8x32xf32>
    %606 = arith.negf %605 : vector<8x32xf32>
    %607 = math.exp %606 : vector<8x32xf32>
    %cst_100 = arith.constant 1.000000e+00 : f32
    %608 = vector.broadcast %cst_100 : f32 to vector<8x32xf32>
    %609 = arith.addf %608, %607 : vector<8x32xf32>
    %610 = arith.divf %608, %609 : vector<8x32xf32>
    %611 = arith.mulf %602, %584 : vector<8x32xf32>
    %612 = arith.mulf %596, %604 : vector<8x32xf32>
    %613 = arith.addf %611, %612 : vector<8x32xf32>
    %614 = math.tanh %613 : vector<8x32xf32>
    %615 = arith.mulf %610, %614 : vector<8x32xf32>
    %616 = vector.extract_strided_slice %493 {offsets = [32, 0], sizes = [8, 128], strides = [1, 1]} : vector<64x128xf32> to vector<8x128xf32>
    %cst_101 = arith.constant dense<0.000000e+00> : vector<8x128xf32>
    %617 = tpu.matmul %615, %499, %cst_101 {dimension_numbers = #tpu.dot_dimension_numbers<[1], [0], [0], [1], [0, 0, 1, 1], [], []>} : vector<8x32xf32>, vector<32x128xf32>, vector<8x128xf32> -> vector<8x128xf32>
    %618 = arith.addf %616, %617 : vector<8x128xf32>
    %619 = arith.addf %618, %498 : vector<8x128xf32>
    %620 = vector.extract_strided_slice %619 {offsets = [0, 0], sizes = [8, 32], strides = [1, 1]} : vector<8x128xf32> to vector<8x32xf32>
    %621 = arith.negf %620 : vector<8x32xf32>
    %622 = math.exp %621 : vector<8x32xf32>
    %cst_102 = arith.constant 1.000000e+00 : f32
    %623 = vector.broadcast %cst_102 : f32 to vector<8x32xf32>
    %624 = arith.addf %623, %622 : vector<8x32xf32>
    %625 = arith.divf %623, %624 : vector<8x32xf32>
    %626 = vector.extract_strided_slice %619 {offsets = [0, 32], sizes = [8, 32], strides = [1, 1]} : vector<8x128xf32> to vector<8x32xf32>
    %627 = arith.negf %626 : vector<8x32xf32>
    %628 = math.exp %627 : vector<8x32xf32>
    %cst_103 = arith.constant 1.000000e+00 : f32
    %629 = vector.broadcast %cst_103 : f32 to vector<8x32xf32>
    %630 = arith.addf %629, %628 : vector<8x32xf32>
    %631 = arith.divf %629, %630 : vector<8x32xf32>
    %632 = vector.extract_strided_slice %619 {offsets = [0, 64], sizes = [8, 32], strides = [1, 1]} : vector<8x128xf32> to vector<8x32xf32>
    %633 = math.tanh %632 : vector<8x32xf32>
    %634 = vector.extract_strided_slice %619 {offsets = [0, 96], sizes = [8, 32], strides = [1, 1]} : vector<8x128xf32> to vector<8x32xf32>
    %635 = arith.negf %634 : vector<8x32xf32>
    %636 = math.exp %635 : vector<8x32xf32>
    %cst_104 = arith.constant 1.000000e+00 : f32
    %637 = vector.broadcast %cst_104 : f32 to vector<8x32xf32>
    %638 = arith.addf %637, %636 : vector<8x32xf32>
    %639 = arith.divf %637, %638 : vector<8x32xf32>
    %640 = arith.mulf %631, %613 : vector<8x32xf32>
    %641 = arith.mulf %625, %633 : vector<8x32xf32>
    %642 = arith.addf %640, %641 : vector<8x32xf32>
    %643 = math.tanh %642 : vector<8x32xf32>
    %644 = arith.mulf %639, %643 : vector<8x32xf32>
    %645 = vector.extract_strided_slice %493 {offsets = [40, 0], sizes = [8, 128], strides = [1, 1]} : vector<64x128xf32> to vector<8x128xf32>
    %cst_105 = arith.constant dense<0.000000e+00> : vector<8x128xf32>
    %646 = tpu.matmul %644, %499, %cst_105 {dimension_numbers = #tpu.dot_dimension_numbers<[1], [0], [0], [1], [0, 0, 1, 1], [], []>} : vector<8x32xf32>, vector<32x128xf32>, vector<8x128xf32> -> vector<8x128xf32>
    %647 = arith.addf %645, %646 : vector<8x128xf32>
    %648 = arith.addf %647, %498 : vector<8x128xf32>
    %649 = vector.extract_strided_slice %648 {offsets = [0, 0], sizes = [8, 32], strides = [1, 1]} : vector<8x128xf32> to vector<8x32xf32>
    %650 = arith.negf %649 : vector<8x32xf32>
    %651 = math.exp %650 : vector<8x32xf32>
    %cst_106 = arith.constant 1.000000e+00 : f32
    %652 = vector.broadcast %cst_106 : f32 to vector<8x32xf32>
    %653 = arith.addf %652, %651 : vector<8x32xf32>
    %654 = arith.divf %652, %653 : vector<8x32xf32>
    %655 = vector.extract_strided_slice %648 {offsets = [0, 32], sizes = [8, 32], strides = [1, 1]} : vector<8x128xf32> to vector<8x32xf32>
    %656 = arith.negf %655 : vector<8x32xf32>
    %657 = math.exp %656 : vector<8x32xf32>
    %cst_107 = arith.constant 1.000000e+00 : f32
    %658 = vector.broadcast %cst_107 : f32 to vector<8x32xf32>
    %659 = arith.addf %658, %657 : vector<8x32xf32>
    %660 = arith.divf %658, %659 : vector<8x32xf32>
    %661 = vector.extract_strided_slice %648 {offsets = [0, 64], sizes = [8, 32], strides = [1, 1]} : vector<8x128xf32> to vector<8x32xf32>
    %662 = math.tanh %661 : vector<8x32xf32>
    %663 = vector.extract_strided_slice %648 {offsets = [0, 96], sizes = [8, 32], strides = [1, 1]} : vector<8x128xf32> to vector<8x32xf32>
    %664 = arith.negf %663 : vector<8x32xf32>
    %665 = math.exp %664 : vector<8x32xf32>
    %cst_108 = arith.constant 1.000000e+00 : f32
    %666 = vector.broadcast %cst_108 : f32 to vector<8x32xf32>
    %667 = arith.addf %666, %665 : vector<8x32xf32>
    %668 = arith.divf %666, %667 : vector<8x32xf32>
    %669 = arith.mulf %660, %642 : vector<8x32xf32>
    %670 = arith.mulf %654, %662 : vector<8x32xf32>
    %671 = arith.addf %669, %670 : vector<8x32xf32>
    %672 = math.tanh %671 : vector<8x32xf32>
    %673 = arith.mulf %668, %672 : vector<8x32xf32>
    %674 = vector.extract_strided_slice %493 {offsets = [48, 0], sizes = [8, 128], strides = [1, 1]} : vector<64x128xf32> to vector<8x128xf32>
    %cst_109 = arith.constant dense<0.000000e+00> : vector<8x128xf32>
    %675 = tpu.matmul %673, %499, %cst_109 {dimension_numbers = #tpu.dot_dimension_numbers<[1], [0], [0], [1], [0, 0, 1, 1], [], []>} : vector<8x32xf32>, vector<32x128xf32>, vector<8x128xf32> -> vector<8x128xf32>
    %676 = arith.addf %674, %675 : vector<8x128xf32>
    %677 = arith.addf %676, %498 : vector<8x128xf32>
    %678 = vector.extract_strided_slice %677 {offsets = [0, 0], sizes = [8, 32], strides = [1, 1]} : vector<8x128xf32> to vector<8x32xf32>
    %679 = arith.negf %678 : vector<8x32xf32>
    %680 = math.exp %679 : vector<8x32xf32>
    %cst_110 = arith.constant 1.000000e+00 : f32
    %681 = vector.broadcast %cst_110 : f32 to vector<8x32xf32>
    %682 = arith.addf %681, %680 : vector<8x32xf32>
    %683 = arith.divf %681, %682 : vector<8x32xf32>
    %684 = vector.extract_strided_slice %677 {offsets = [0, 32], sizes = [8, 32], strides = [1, 1]} : vector<8x128xf32> to vector<8x32xf32>
    %685 = arith.negf %684 : vector<8x32xf32>
    %686 = math.exp %685 : vector<8x32xf32>
    %cst_111 = arith.constant 1.000000e+00 : f32
    %687 = vector.broadcast %cst_111 : f32 to vector<8x32xf32>
    %688 = arith.addf %687, %686 : vector<8x32xf32>
    %689 = arith.divf %687, %688 : vector<8x32xf32>
    %690 = vector.extract_strided_slice %677 {offsets = [0, 64], sizes = [8, 32], strides = [1, 1]} : vector<8x128xf32> to vector<8x32xf32>
    %691 = math.tanh %690 : vector<8x32xf32>
    %692 = vector.extract_strided_slice %677 {offsets = [0, 96], sizes = [8, 32], strides = [1, 1]} : vector<8x128xf32> to vector<8x32xf32>
    %693 = arith.negf %692 : vector<8x32xf32>
    %694 = math.exp %693 : vector<8x32xf32>
    %cst_112 = arith.constant 1.000000e+00 : f32
    %695 = vector.broadcast %cst_112 : f32 to vector<8x32xf32>
    %696 = arith.addf %695, %694 : vector<8x32xf32>
    %697 = arith.divf %695, %696 : vector<8x32xf32>
    %698 = arith.mulf %689, %671 : vector<8x32xf32>
    %699 = arith.mulf %683, %691 : vector<8x32xf32>
    %700 = arith.addf %698, %699 : vector<8x32xf32>
    %701 = math.tanh %700 : vector<8x32xf32>
    %702 = arith.mulf %697, %701 : vector<8x32xf32>
    %703 = vector.extract_strided_slice %493 {offsets = [56, 0], sizes = [8, 128], strides = [1, 1]} : vector<64x128xf32> to vector<8x128xf32>
    %cst_113 = arith.constant dense<0.000000e+00> : vector<8x128xf32>
    %704 = tpu.matmul %702, %499, %cst_113 {dimension_numbers = #tpu.dot_dimension_numbers<[1], [0], [0], [1], [0, 0, 1, 1], [], []>} : vector<8x32xf32>, vector<32x128xf32>, vector<8x128xf32> -> vector<8x128xf32>
    %705 = arith.addf %703, %704 : vector<8x128xf32>
    %706 = arith.addf %705, %498 : vector<8x128xf32>
    %707 = vector.extract_strided_slice %706 {offsets = [0, 0], sizes = [8, 32], strides = [1, 1]} : vector<8x128xf32> to vector<8x32xf32>
    %708 = arith.negf %707 : vector<8x32xf32>
    %709 = math.exp %708 : vector<8x32xf32>
    %cst_114 = arith.constant 1.000000e+00 : f32
    %710 = vector.broadcast %cst_114 : f32 to vector<8x32xf32>
    %711 = arith.addf %710, %709 : vector<8x32xf32>
    %712 = arith.divf %710, %711 : vector<8x32xf32>
    %713 = vector.extract_strided_slice %706 {offsets = [0, 32], sizes = [8, 32], strides = [1, 1]} : vector<8x128xf32> to vector<8x32xf32>
    %714 = arith.negf %713 : vector<8x32xf32>
    %715 = math.exp %714 : vector<8x32xf32>
    %cst_115 = arith.constant 1.000000e+00 : f32
    %716 = vector.broadcast %cst_115 : f32 to vector<8x32xf32>
    %717 = arith.addf %716, %715 : vector<8x32xf32>
    %718 = arith.divf %716, %717 : vector<8x32xf32>
    %719 = vector.extract_strided_slice %706 {offsets = [0, 64], sizes = [8, 32], strides = [1, 1]} : vector<8x128xf32> to vector<8x32xf32>
    %720 = math.tanh %719 : vector<8x32xf32>
    %721 = vector.extract_strided_slice %706 {offsets = [0, 96], sizes = [8, 32], strides = [1, 1]} : vector<8x128xf32> to vector<8x32xf32>
    %722 = arith.negf %721 : vector<8x32xf32>
    %723 = math.exp %722 : vector<8x32xf32>
    %cst_116 = arith.constant 1.000000e+00 : f32
    %724 = vector.broadcast %cst_116 : f32 to vector<8x32xf32>
    %725 = arith.addf %724, %723 : vector<8x32xf32>
    %726 = arith.divf %724, %725 : vector<8x32xf32>
    %727 = arith.mulf %718, %700 : vector<8x32xf32>
    %728 = arith.mulf %712, %720 : vector<8x32xf32>
    %729 = arith.addf %727, %728 : vector<8x32xf32>
    %730 = math.tanh %729 : vector<8x32xf32>
    %731 = arith.mulf %726, %730 : vector<8x32xf32>
    %732 = tpu.concatenate %528, %557, %586, %615, %644, %673, %702, %731 in 0 : vector<8x32xf32>, vector<8x32xf32>, vector<8x32xf32>, vector<8x32xf32>, vector<8x32xf32>, vector<8x32xf32>, vector<8x32xf32>, vector<8x32xf32> -> vector<64x32xf32>
    %c0_117 = arith.constant 0 : index
    %c0_118 = arith.constant 0 : index
    %733 = vector.load %arg11[%c0_117, %c0_118] : memref<32x256xf32, #tpu.memory_space<vmem>>, vector<32x256xf32>
    %cst_119 = arith.constant dense<0.000000e+00> : vector<64x256xf32>
    %734 = tpu.matmul %732, %733, %cst_119 {dimension_numbers = #tpu.dot_dimension_numbers<[1], [0], [0], [1], [0, 0, 1, 1], [], []>} : vector<64x32xf32>, vector<32x256xf32>, vector<64x256xf32> -> vector<64x256xf32>
    %c0_120 = arith.constant 0 : index
    %c0_121 = arith.constant 0 : index
    %735 = vector.load %arg12[%c0_120, %c0_121] : memref<1x256xf32, #tpu.memory_space<vmem>>, vector<1x256xf32>
    %736 = vector.broadcast %735 : vector<1x256xf32> to vector<64x256xf32>
    %737 = arith.addf %734, %736 : vector<64x256xf32>
    %c0_122 = arith.constant 0 : index
    %c0_123 = arith.constant 0 : index
    %738 = vector.load %arg13[%c0_122, %c0_123] : memref<64x256xf32, #tpu.memory_space<vmem>>, vector<64x256xf32>
    tpu.vector_store %arg13[%c0_122, %c0_123], %737 {strides = array<i32>} : memref<64x256xf32, #tpu.memory_space<vmem>>, vector<64x256xf32>,
    %c0_124 = arith.constant 0 : index
    %c0_125 = arith.constant 0 : index
    %739 = vector.load %arg14[%c0_124, %c0_125] : memref<8x16xf32, #tpu.memory_space<vmem>>, vector<8x16xf32>
    tpu.vector_store %arg14[%c0_124, %c0_125], %488 {strides = array<i32>} : memref<8x16xf32, #tpu.memory_space<vmem>>, vector<8x16xf32>,
    %c0_126 = arith.constant 0 : index
    %c0_127 = arith.constant 0 : index
    %740 = vector.load %arg15[%c0_126, %c0_127] : memref<8x16xf32, #tpu.memory_space<vmem>>, vector<8x16xf32>
    tpu.vector_store %arg15[%c0_126, %c0_127], %489 {strides = array<i32>} : memref<8x16xf32, #tpu.memory_space<vmem>>, vector<8x16xf32>,
    return
  }
}

</mosaic_0001>

<llo_original>
// kernel: vae_forward.1
$region0: #{vae_forward.1}
  #allocation0 [shape = 'u32[]', space=smem, size = 0x4, offset = 0x4, fixed_abs, tag = 'smem constant byte address 0x4 - core index']
  #allocation1 [shape = 'u32[144,128]{1,0:T(1,128)}', space=vmem, size = 0x12000, scoped, tag = 'internal scratch']
  %s0 = inlined_call_operand.vmem [shape: s32[64,1], index: 0, kind: input, shape index: {}]
  %s1 = inlined_call_operand.vmem [shape: f32[256,32], index: 1, kind: input, shape index: {}]
  %s2 = inlined_call_operand.vmem [shape: f32[32,256], index: 2, kind: input, shape index: {}]
  %s3 = inlined_call_operand.vmem [shape: f32[1,256], index: 3, kind: input, shape index: {}]
  %s4 = inlined_call_operand.vmem [shape: f32[64,256], index: 4, kind: input, shape index: {}]
  %s5 = inlined_call_operand.vmem [shape: f32[128,96], index: 5, kind: input, shape index: {}]
  %s6 = inlined_call_operand.vmem [shape: f32[1,96], index: 6, kind: input, shape index: {}]
  %s7 = inlined_call_operand.vmem [shape: f32[32,128], index: 7, kind: input, shape index: {}]
  %s8 = inlined_call_operand.vmem [shape: f32[32,128], index: 8, kind: input, shape index: {}]
  %s9 = inlined_call_operand.vmem [shape: f32[32,128], index: 9, kind: input, shape index: {}]
  %s10 = inlined_call_operand.vmem [shape: f32[1,128], index: 10, kind: input, shape index: {}]
  %s11 = inlined_call_operand.vmem [shape: f32[32,256], index: 11, kind: input, shape index: {}]
  %s12 = inlined_call_operand.vmem [shape: f32[1,256], index: 12, kind: input, shape index: {}]
  %s13 = inlined_call_operand.hbm [shape: f32[64,256], index: 13, kind: output, shape index: {0}]
  %s14 = inlined_call_operand.hbm [shape: f32[8,16], index: 14, kind: output, shape index: {1}]
  %s15 = inlined_call_operand.hbm [shape: f32[8,16], index: 15, kind: output, shape index: {2}]
  %16 = xla_tuple %s13, %s14, %s15
  %s17 = sld [smem:[#allocation0]]
  $region78: #{vae_forward.1} parent=0
    _
  %s19 = ssub.s32 1, %s17
  %s20 = scalar_select 0, %s19, %s17
  $region1: #{vae_forward.1} parent=0
    #allocation2 [shape = 'u8[65536]{0}', space=vmem, size = 0x10000, scoped, tag = 'output window, operand 0, single buffered']
    #allocation3 [shape = 's32[1]{0}', space=sflag, size = 0x4, scoped, tag = 'scoped memory for vae_forward.1']
    #allocation4 [shape = 'u8[4096]{0}', space=vmem, size = 0x1000, scoped, tag = 'output window, operand 1, single buffered']
    #allocation5 [shape = 's32[1]{0}', space=sflag, size = 0x4, scoped, tag = 'scoped memory for vae_forward.1']
    #allocation6 [shape = 'u8[4096]{0}', space=vmem, size = 0x1000, scoped, tag = 'output window, operand 2, single buffered']
    %21 = vsyncpa [#allocation3], 0
    %22 = vsyncpa [#allocation5], 0
    // Predicated region
    $region2: #{vae_forward.1} parent=1 // pred_check
      _
    $region3: #{vae_forward.1} parent=1 // pred_check_branch
      %24 = sbr.rel (0) target = $region5
    $region4: #{vae_forward.1} parent=1 // pred_region
      _
    $region5: #{vae_forward.1} parent=1 // pred_fallthru
      _
    // Predicated region
    $region6: #{vae_forward.1} parent=1 // pred_check
      _
    $region7: #{vae_forward.1} parent=1 // pred_check_branch
      %26 = sbr.rel (0) target = $region9
    $region8: #{vae_forward.1} parent=1 // pred_region
      _
    $region9: #{vae_forward.1} parent=1 // pred_fallthru
      _
    // Predicated region
    $region10: #{vae_forward.1} parent=1 // pred_check
      _
    $region11: #{vae_forward.1} parent=1 // pred_check_branch
      %28 = sbr.rel (0) target = $region13
    $region12: #{vae_forward.1} parent=1 // pred_region
      _
    $region13: #{vae_forward.1} parent=1 // pred_fallthru
      _
    // Predicated region
    $region14: #{vae_forward.1} parent=1 // pred_check
      _
    $region15: #{vae_forward.1} parent=1 // pred_check_branch
      %30 = sbr.rel (0) target = $region17
    $region16: #{vae_forward.1} parent=1 // pred_region
      _
    $region17: #{vae_forward.1} parent=1 // pred_fallthru
      _
    // Predicated region
    $region18: #{vae_forward.1} parent=1 // pred_check
      _
    $region19: #{vae_forward.1} parent=1 // pred_check_branch
      %32 = sbr.rel (0) target = $region21
    $region20: #{vae_forward.1} parent=1 // pred_region
      _
    $region21: #{vae_forward.1} parent=1 // pred_fallthru
      _
    // Predicated region
    $region22: #{vae_forward.1} parent=1 // pred_check
      _
    $region23: #{vae_forward.1} parent=1 // pred_check_branch
      %34 = sbr.rel (0) target = $region25
    $region24: #{vae_forward.1} parent=1 // pred_region
      _
    $region25: #{vae_forward.1} parent=1 // pred_fallthru
      _
    // Predicated region
    $region26: #{vae_forward.1} parent=1 // pred_check
      _
    $region27: #{vae_forward.1} parent=1 // pred_check_branch
      %36 = sbr.rel (0) target = $region29
    $region28: #{vae_forward.1} parent=1 // pred_region
      _
    $region29: #{vae_forward.1} parent=1 // pred_fallthru
      _
    // Predicated region
    $region30: #{vae_forward.1} parent=1 // pred_check
      _
    $region31: #{vae_forward.1} parent=1 // pred_check_branch
      %38 = sbr.rel (0) target = $region33
    $region32: #{vae_forward.1} parent=1 // pred_region
      _
    $region33: #{vae_forward.1} parent=1 // pred_fallthru
      _
    // Predicated region
    $region34: #{vae_forward.1} parent=1 // pred_check
      _
    $region35: #{vae_forward.1} parent=1 // pred_check_branch
      %40 = sbr.rel (0) target = $region37
    $region36: #{vae_forward.1} parent=1 // pred_region
      _
    $region37: #{vae_forward.1} parent=1 // pred_fallthru
      _
    // Predicated region
    $region38: #{vae_forward.1} parent=1 // pred_check
      _
    $region39: #{vae_forward.1} parent=1 // pred_check_branch
      %42 = sbr.rel (0) target = $region41
    $region40: #{vae_forward.1} parent=1 // pred_region
      _
    $region41: #{vae_forward.1} parent=1 // pred_fallthru
      _
    // Predicated region
    $region42: #{vae_forward.1} parent=1 // pred_check
      _
    $region43: #{vae_forward.1} parent=1 // pred_check_branch
      %44 = sbr.rel (0) target = $region45
    $region44: #{vae_forward.1} parent=1 // pred_region
      _
    $region45: #{vae_forward.1} parent=1 // pred_fallthru
      _
    // Predicated region
    $region46: #{vae_forward.1} parent=1 // pred_check
      _
    $region47: #{vae_forward.1} parent=1 // pred_check_branch
      %46 = sbr.rel (0) target = $region49
    $region48: #{vae_forward.1} parent=1 // pred_region
      _
    $region49: #{vae_forward.1} parent=1 // pred_fallthru
      _
    // Predicated region
    $region50: #{vae_forward.1} parent=1 // pred_check
      _
    $region51: #{vae_forward.1} parent=1 // pred_check_branch
      %48 = sbr.rel (0) target = $region53
    $region52: #{vae_forward.1} parent=1 // pred_region
      _
    $region53: #{vae_forward.1} parent=1 // pred_fallthru
      _
    %v49 = vld [vmem:[%s0] sm:$0xff]
    %v50 = vld [vmem:[%s0 + $0x8] sm:$0xff]
    %v51 = vld [vmem:[%s0 + $0x10] sm:$0xff]
    %v52 = vld [vmem:[%s0 + $0x18] sm:$0xff]
    %v53 = vld [vmem:[%s0 + $0x20] sm:$0xff]
    %v54 = vld [vmem:[%s0 + $0x28] sm:$0xff]
    %v55 = vld [vmem:[%s0 + $0x30] sm:$0xff]
    %v56 = vld [vmem:[%s0 + $0x38] sm:$0xff]
    %v57 = vlaneseq
    %v58 = vand.u32 %v57, 127
    %v59 = vadd.s32 %v58, 128
    %60 = vset.pattern.permute.xlu0 0
    %61 = vperm.xlu0 %60, %v49
    %v62 = vpop.permute.xlu0 %61
    %63 = vset.pattern.permute.xlu0 0
    %64 = vperm.xlu0 %63, %v50
    %v65 = vpop.permute.xlu0 %64
    %66 = vset.pattern.permute.xlu0 0
    %67 = vperm.xlu0 %66, %v51
    %v68 = vpop.permute.xlu0 %67
    %69 = vset.pattern.permute.xlu0 0
    %70 = vperm.xlu0 %69, %v52
    %v71 = vpop.permute.xlu0 %70
    %72 = vset.pattern.permute.xlu0 0
    %73 = vperm.xlu0 %72, %v53
    %v74 = vpop.permute.xlu0 %73
    %75 = vset.pattern.permute.xlu0 0
    %76 = vperm.xlu0 %75, %v54
    %v77 = vpop.permute.xlu0 %76
    %78 = vset.pattern.permute.xlu0 0
    %79 = vperm.xlu0 %78, %v55
    %v80 = vpop.permute.xlu0 %79
    %81 = vset.pattern.permute.xlu0 0
    %82 = vperm.xlu0 %81, %v56
    %v83 = vpop.permute.xlu0 %82
    %vm84 = vcmp.eq.s32.totalorder %v58, %v62
    %vm85 = vcmp.eq.s32.totalorder %v59, %v62
    %vm86 = vcmp.eq.s32.totalorder %v58, %v65
    %vm87 = vcmp.eq.s32.totalorder %v59, %v65
    %vm88 = vcmp.eq.s32.totalorder %v58, %v68
    %vm89 = vcmp.eq.s32.totalorder %v59, %v68
    %vm90 = vcmp.eq.s32.totalorder %v58, %v71
    %vm91 = vcmp.eq.s32.totalorder %v59, %v71
    %vm92 = vcmp.eq.s32.totalorder %v58, %v74
    %vm93 = vcmp.eq.s32.totalorder %v59, %v74
    %vm94 = vcmp.eq.s32.totalorder %v58, %v77
    %vm95 = vcmp.eq.s32.totalorder %v59, %v77
    %vm96 = vcmp.eq.s32.totalorder %v58, %v80
    %vm97 = vcmp.eq.s32.totalorder %v59, %v80
    %vm98 = vcmp.eq.s32.totalorder %v58, %v83
    %vm99 = vcmp.eq.s32.totalorder %v59, %v83
    %v100 = vsel %vm84, 1, 0
    %v101 = vsel %vm85, 1, 0
    %v102 = vsel %vm86, 1, 0
    %v103 = vsel %vm87, 1, 0
    %v104 = vsel %vm88, 1, 0
    %v105 = vsel %vm89, 1, 0
    %v106 = vsel %vm90, 1, 0
    %v107 = vsel %vm91, 1, 0
    %v108 = vsel %vm92, 1, 0
    %v109 = vsel %vm93, 1, 0
    %v110 = vsel %vm94, 1, 0
    %v111 = vsel %vm95, 1, 0
    %v112 = vsel %vm96, 1, 0
    %v113 = vsel %vm97, 1, 0
    %v114 = vsel %vm98, 1, 0
    %v115 = vsel %vm99, 1, 0
    %v116 = vcvt.s32.f32 %v100
    %v117 = vcvt.s32.f32 %v101
    %v118 = vcvt.s32.f32 %v102
    %v119 = vcvt.s32.f32 %v103
    %v120 = vcvt.s32.f32 %v104
    %v121 = vcvt.s32.f32 %v105
    %v122 = vcvt.s32.f32 %v106
    %v123 = vcvt.s32.f32 %v107
    %v124 = vcvt.s32.f32 %v108
    %v125 = vcvt.s32.f32 %v109
    %v126 = vcvt.s32.f32 %v110
    %v127 = vcvt.s32.f32 %v111
    %v128 = vcvt.s32.f32 %v112
    %v129 = vcvt.s32.f32 %v113
    %v130 = vcvt.s32.f32 %v114
    %v131 = vcvt.s32.f32 %v115
    %v132 = vld [vmem:[%s1] sm:$0xff]
    %v133 = vld [vmem:[%s1 + $0x8] sm:$0xff]
    %v134 = vld [vmem:[%s1 + $0x10] sm:$0xff]
    %v135 = vld [vmem:[%s1 + $0x18] sm:$0xff]
    %v136 = vld [vmem:[%s1 + $0x20] sm:$0xff]
    %v137 = vld [vmem:[%s1 + $0x28] sm:$0xff]
    %v138 = vld [vmem:[%s1 + $0x30] sm:$0xff]
    %v139 = vld [vmem:[%s1 + $0x38] sm:$0xff]
    %v140 = vld [vmem:[%s1 + $0x40] sm:$0xff]
    %v141 = vld [vmem:[%s1 + $0x48] sm:$0xff]
    %v142 = vld [vmem:[%s1 + $0x50] sm:$0xff]
    %v143 = vld [vmem:[%s1 + $0x58] sm:$0xff]
    %v144 = vld [vmem:[%s1 + $0x60] sm:$0xff]
    %v145 = vld [vmem:[%s1 + $0x68] sm:$0xff]
    %v146 = vld [vmem:[%s1 + $0x70] sm:$0xff]
    %v147 = vld [vmem:[%s1 + $0x78] sm:$0xff]
    %v148 = vld [vmem:[%s1 + $0x80] sm:$0xff]
    %v149 = vld [vmem:[%s1 + $0x88] sm:$0xff]
    %v150 = vld [vmem:[%s1 + $0x90] sm:$0xff]
    %v151 = vld [vmem:[%s1 + $0x98] sm:$0xff]
    %v152 = vld [vmem:[%s1 + $0xa0] sm:$0xff]
    %v153 = vld [vmem:[%s1 + $0xa8] sm:$0xff]
    %v154 = vld [vmem:[%s1 + $0xb0] sm:$0xff]
    %v155 = vld [vmem:[%s1 + $0xb8] sm:$0xff]
    %v156 = vld [vmem:[%s1 + $0xc0] sm:$0xff]
    %v157 = vld [vmem:[%s1 + $0xc8] sm:$0xff]
    %v158 = vld [vmem:[%s1 + $0xd0] sm:$0xff]
    %v159 = vld [vmem:[%s1 + $0xd8] sm:$0xff]
    %v160 = vld [vmem:[%s1 + $0xe0] sm:$0xff]
    %v161 = vld [vmem:[%s1 + $0xe8] sm:$0xff]
    %v162 = vld [vmem:[%s1 + $0xf0] sm:$0xff]
    %v163 = vld [vmem:[%s1 + $0xf8] sm:$0xff]
    %164 = vmatprep.subr.mxu0 0.0
    %165 = vmatpush1.msra.mxu0 %v147
    %166 = vmatprep.subr.mxu0 0.0
    %167 = vmatpush1.msra.mxu0 %v146
    %168 = vmatprep.subr.mxu0 0.0
    %169 = vmatpush1.msra.mxu0 %v145
    %170 = vmatprep.subr.mxu0 0.0
    %171 = vmatpush1.msra.mxu0 %v144
    %172 = vmatprep.subr.mxu0 0.0
    %173 = vmatpush1.msra.mxu0 %v143
    %174 = vmatprep.subr.mxu0 0.0
    %175 = vmatpush1.msra.mxu0 %v142
    %176 = vmatprep.subr.mxu0 0.0
    %177 = vmatpush1.msra.mxu0 %v141
    %178 = vmatprep.subr.mxu0 0.0
    %179 = vmatpush1.msra.mxu0 %v140
    %180 = vmatprep.subr.mxu0 0.0
    %181 = vmatpush1.msra.mxu0 %v139
    %182 = vmatprep.subr.mxu0 0.0
    %183 = vmatpush1.msra.mxu0 %v138
    %184 = vmatprep.subr.mxu0 0.0
    %185 = vmatpush1.msra.mxu0 %v137
    %186 = vmatprep.subr.mxu0 0.0
    %187 = vmatpush1.msra.mxu0 %v136
    %188 = vmatprep.subr.mxu0 0.0
    %189 = vmatpush1.msra.mxu0 %v135
    %190 = vmatprep.subr.mxu0 0.0
    %191 = vmatpush1.msra.mxu0 %v134
    %192 = vmatprep.subr.mxu0 0.0
    %193 = vmatpush1.msra.mxu0 %v133
    %194 = vmatprep.subr.mxu0 0.0
    %195 = vmatpush1.msra.mxu0 %v132
    %196 = vmatprep.subr.mxu0 0.0
    %197 = vmatpush2.msra.mxu0 %v163
    %198 = vmatprep.subr.mxu0 0.0
    %199 = vmatpush2.msra.mxu0 %v162
    %200 = vmatprep.subr.mxu0 0.0
    %201 = vmatpush2.msra.mxu0 %v161
    %202 = vmatprep.subr.mxu0 0.0
    %203 = vmatpush2.msra.mxu0 %v160
    %204 = vmatprep.subr.mxu0 0.0
    %205 = vmatpush2.msra.mxu0 %v159
    %206 = vmatprep.subr.mxu0 0.0
    %207 = vmatpush2.msra.mxu0 %v158
    %208 = vmatprep.subr.mxu0 0.0
    %209 = vmatpush2.msra.mxu0 %v157
    %210 = vmatprep.subr.mxu0 0.0
    %211 = vmatpush2.msra.mxu0 %v156
    %212 = vmatprep.subr.mxu0 0.0
    %213 = vmatpush2.msra.mxu0 %v155
    %214 = vmatprep.subr.mxu0 0.0
    %215 = vmatpush2.msra.mxu0 %v154
    %216 = vmatprep.subr.mxu0 0.0
    %217 = vmatpush2.msra.mxu0 %v153
    %218 = vmatprep.subr.mxu0 0.0
    %219 = vmatpush2.msra.mxu0 %v152
    %220 = vmatprep.subr.mxu0 0.0
    %221 = vmatpush2.msra.mxu0 %v151
    %222 = vmatprep.subr.mxu0 0.0
    %223 = vmatpush2.msra.mxu0 %v150
    %224 = vmatprep.subr.mxu0 0.0
    %225 = vmatpush2.msra.mxu0 %v149
    %226 = vmatprep.subr.mxu0 0.0
    %227 = vmatpush2.msra.mxu0 %v148
    %228 = vmatprep.mubr.f32.mxu0 %v117
    %229 = vmatmul.mubr.f32.gmra.mxu0 %v116
    %v230 = vpop.f32.mrf.mxu0
    %v231 = vadd.f32 0.0, %v230
    %v232 = vpop.f32.mrf.mxu0
    %233 = vmatprep.mubr.f32.mxu0 %v119
    %234 = vmatmul.mubr.f32.gmra.mxu0 %v118
    %v235 = vpop.f32.mrf.mxu0
    %v236 = vadd.f32 0.0, %v235
    %v237 = vpop.f32.mrf.mxu0
    %238 = vmatprep.mubr.f32.mxu0 %v121
    %239 = vmatmul.mubr.f32.gmra.mxu0 %v120
    %v240 = vpop.f32.mrf.mxu0
    %v241 = vadd.f32 0.0, %v240
    %v242 = vpop.f32.mrf.mxu0
    %243 = vmatprep.mubr.f32.mxu0 %v123
    %244 = vmatmul.mubr.f32.gmra.mxu0 %v122
    %v245 = vpop.f32.mrf.mxu0
    %v246 = vadd.f32 0.0, %v245
    %v247 = vpop.f32.mrf.mxu0
    %248 = vmatprep.mubr.f32.mxu0 %v125
    %249 = vmatmul.mubr.f32.gmra.mxu0 %v124
    %v250 = vpop.f32.mrf.mxu0
    %v251 = vadd.f32 0.0, %v250
    %v252 = vpop.f32.mrf.mxu0
    %253 = vmatprep.mubr.f32.mxu0 %v127
    %254 = vmatmul.mubr.f32.gmra.mxu0 %v126
    %v255 = vpop.f32.mrf.mxu0
    %v256 = vadd.f32 0.0, %v255
    %v257 = vpop.f32.mrf.mxu0
    %258 = vmatprep.mubr.f32.mxu0 %v129
    %259 = vmatmul.mubr.f32.gmra.mxu0 %v128
    %v260 = vpop.f32.mrf.mxu0
    %v261 = vadd.f32 0.0, %v260
    %v262 = vpop.f32.mrf.mxu0
    %263 = vmatprep.mubr.f32.mxu0 %v131
    %264 = vmatmul.mubr.f32.gmra.mxu0 %v130
    %v265 = vpop.f32.mrf.mxu0
    %v266 = vadd.f32 0.0, %v265
    %v267 = vpop.f32.mrf.mxu0
    %268 = vdwg.mxu0
    %v269 = vld [vmem:[%s2] sm:$0xff]
    %v270 = vld [vmem:[%s2 + $0x8] sm:$0xff]
    %v271 = vld [vmem:[%s2 + $0x10] sm:$0xff]
    %v272 = vld [vmem:[%s2 + $0x18] sm:$0xff]
    %v273 = vld [vmem:[%s2 + $0x20] sm:$0xff]
    %v274 = vld [vmem:[%s2 + $0x28] sm:$0xff]
    %v275 = vld [vmem:[%s2 + $0x30] sm:$0xff]
    %v276 = vld [vmem:[%s2 + $0x38] sm:$0xff]
    %v277 = vld [vmem:[%s3] sm:$0x3]
    %v279 = vlaneseq
    %v280 = vshrl.u32 %v279, 7
    %v281 = vsub.s32 0, %v280
    %v282 = vrot.slane %v277, %v281
    %v283 = vlaneseq
    %v284 = vshrl.u32 %v283, 7
    %v285 = vsub.s32 1, %v284
    %v286 = vrot.slane %v277, %v285
    %vm289 = vcmask 261120
    %v291 = vsel %vm289, %v231, 0
    %v294 = vsel %vm289, %v236, 0
    %v297 = vsel %vm289, %v241, 0
    %v300 = vsel %vm289, %v246, 0
    %v303 = vsel %vm289, %v251, 0
    %v306 = vsel %vm289, %v256, 0
    %v309 = vsel %vm289, %v261, 0
    %v312 = vsel %vm289, %v266, 0
    %314 = vmatprep.subr.mxu0 0.0
    %315 = vmatpush1.msra.mxu0 0.0
    %316 = vmatprep.subr.mxu0 0.0
    %317 = vmatpush1.msra.mxu0 0.0
    %318 = vmatprep.subr.mxu0 0.0
    %319 = vmatpush1.msra.mxu0 0.0
    %320 = vmatprep.subr.mxu0 0.0
    %321 = vmatpush1.msra.mxu0 0.0
    %322 = vmatprep.subr.mxu0 0.0
    %323 = vmatpush1.msra.mxu0 0.0
    %324 = vmatprep.subr.mxu0 0.0
    %325 = vmatpush1.msra.mxu0 0.0
    %326 = vmatprep.subr.mxu0 0.0
    %327 = vmatpush1.msra.mxu0 0.0
    %328 = vmatprep.subr.mxu0 0.0
    %329 = vmatpush1.msra.mxu0 0.0
    %330 = vmatprep.subr.mxu0 0.0
    %331 = vmatpush1.msra.mxu0 0.0
    %332 = vmatprep.subr.mxu0 0.0
    %333 = vmatpush1.msra.mxu0 0.0
    %334 = vmatprep.subr.mxu0 0.0
    %335 = vmatpush1.msra.mxu0 0.0
    %336 = vmatprep.subr.mxu0 0.0
    %337 = vmatpush1.msra.mxu0 0.0
    %338 = vmatprep.subr.mxu0 %v276
    %339 = vmatpush1.msra.mxu0 %v275
    %340 = vmatprep.subr.mxu0 %v274
    %341 = vmatpush1.msra.mxu0 %v273
    %342 = vmatprep.subr.mxu0 %v272
    %343 = vmatpush1.msra.mxu0 %v271
    %344 = vmatprep.subr.mxu0 %v270
    %345 = vmatpush1.msra.mxu0 %v269
    %346 = vmatprep.subr.mxu0 0.0
    %347 = vmatpush2.msra.mxu0 0.0
    %348 = vmatprep.subr.mxu0 0.0
    %349 = vmatpush2.msra.mxu0 0.0
    %350 = vmatprep.subr.mxu0 0.0
    %351 = vmatpush2.msra.mxu0 0.0
    %352 = vmatprep.subr.mxu0 0.0
    %353 = vmatpush2.msra.mxu0 0.0
    %354 = vmatprep.subr.mxu0 0.0
    %355 = vmatpush2.msra.mxu0 0.0
    %356 = vmatprep.subr.mxu0 0.0
    %357 = vmatpush2.msra.mxu0 0.0
    %358 = vmatprep.subr.mxu0 0.0
    %359 = vmatpush2.msra.mxu0 0.0
    %360 = vmatprep.subr.mxu0 0.0
    %361 = vmatpush2.msra.mxu0 0.0
    %362 = vmatprep.subr.mxu0 0.0
    %363 = vmatpush2.msra.mxu0 0.0
    %364 = vmatprep.subr.mxu0 0.0
    %365 = vmatpush2.msra.mxu0 0.0
    %366 = vmatprep.subr.mxu0 0.0
    %367 = vmatpush2.msra.mxu0 0.0
    %368 = vmatprep.subr.mxu0 0.0
    %369 = vmatpush2.msra.mxu0 0.0
    %370 = vmatprep.subr.mxu0 0.0
    %371 = vmatpush2.msra.mxu0 0.0
    %372 = vmatprep.subr.mxu0 0.0
    %373 = vmatpush2.msra.mxu0 0.0
    %374 = vmatprep.subr.mxu0 0.0
    %375 = vmatpush2.msra.mxu0 0.0
    %376 = vmatprep.subr.mxu0 0.0
    %377 = vmatpush2.msra.mxu0 0.0
    %378 = vmatprep.mubr.f32.mxu0 0.0
    %379 = vmatmul.mubr.f32.gmra.mxu0 %v291
    %v380 = vpop.f32.mrf.mxu0
    %v381 = vadd.f32 %v282, %v380
    %v382 = vpop.f32.mrf.mxu0
    %v383 = vadd.f32 %v286, %v382
    %384 = vmatprep.mubr.f32.mxu0 0.0
    %385 = vmatmul.mubr.f32.gmra.mxu0 %v294
    %v386 = vpop.f32.mrf.mxu0
    %v387 = vadd.f32 %v282, %v386
    %v388 = vpop.f32.mrf.mxu0
    %v389 = vadd.f32 %v286, %v388
    %390 = vmatprep.mubr.f32.mxu0 0.0
    %391 = vmatmul.mubr.f32.gmra.mxu0 %v297
    %v392 = vpop.f32.mrf.mxu0
    %v393 = vadd.f32 %v282, %v392
    %v394 = vpop.f32.mrf.mxu0
    %v395 = vadd.f32 %v286, %v394
    %396 = vmatprep.mubr.f32.mxu0 0.0
    %397 = vmatmul.mubr.f32.gmra.mxu0 %v300
    %v398 = vpop.f32.mrf.mxu0
    %v399 = vadd.f32 %v282, %v398
    %v400 = vpop.f32.mrf.mxu0
    %v401 = vadd.f32 %v286, %v400
    %402 = vmatprep.mubr.f32.mxu0 0.0
    %403 = vmatmul.mubr.f32.gmra.mxu0 %v303
    %v404 = vpop.f32.mrf.mxu0
    %v405 = vadd.f32 %v282, %v404
    %v406 = vpop.f32.mrf.mxu0
    %v407 = vadd.f32 %v286, %v406
    %408 = vmatprep.mubr.f32.mxu0 0.0
    %409 = vmatmul.mubr.f32.gmra.mxu0 %v306
    %v410 = vpop.f32.mrf.mxu0
    %v411 = vadd.f32 %v282, %v410
    %v412 = vpop.f32.mrf.mxu0
    %v413 = vadd.f32 %v286, %v412
    %414 = vmatprep.mubr.f32.mxu0 0.0
    %415 = vmatmul.mubr.f32.gmra.mxu0 %v309
    %v416 = vpop.f32.mrf.mxu0
    %v417 = vadd.f32 %v282, %v416
    %v418 = vpop.f32.mrf.mxu0
    %v419 = vadd.f32 %v286, %v418
    %420 = vmatprep.mubr.f32.mxu0 0.0
    %421 = vmatmul.mubr.f32.gmra.mxu0 %v312
    %v422 = vpop.f32.mrf.mxu0
    %v423 = vadd.f32 %v282, %v422
    %v424 = vpop.f32.mrf.mxu0
    %v425 = vadd.f32 %v286, %v424
    %426 = vdwg.mxu0
    %v427 = vld [vmem:[%s4] sm:$0xff]
    %v428 = vld [vmem:[%s4 + $0x8] sm:$0xff]
    %v429 = vld [vmem:[%s4 + $0x10] sm:$0xff]
    %v430 = vld [vmem:[%s4 + $0x18] sm:$0xff]
    %v431 = vld [vmem:[%s4 + $0x20] sm:$0xff]
    %v432 = vld [vmem:[%s4 + $0x28] sm:$0xff]
    %v433 = vld [vmem:[%s4 + $0x30] sm:$0xff]
    %v434 = vld [vmem:[%s4 + $0x38] sm:$0xff]
    %v435 = vld [vmem:[%s4 + $0x40] sm:$0xff]
    %v436 = vld [vmem:[%s4 + $0x48] sm:$0xff]
    %v437 = vld [vmem:[%s4 + $0x50] sm:$0xff]
    %v438 = vld [vmem:[%s4 + $0x58] sm:$0xff]
    %v439 = vld [vmem:[%s4 + $0x60] sm:$0xff]
    %v440 = vld [vmem:[%s4 + $0x68] sm:$0xff]
    %v441 = vld [vmem:[%s4 + $0x70] sm:$0xff]
    %v442 = vld [vmem:[%s4 + $0x78] sm:$0xff]
    %vm443 = vcmask 523264
    %v445 = vsel %vm443, 0.0, 0
    %447 = vmatprep.subr.mxu0 0.0
    %448 = vmatpush1.msra.mxu0 0.0
    %449 = vmatprep.subr.mxu0 0.0
    %450 = vmatpush1.msra.mxu0 0.0
    %451 = vmatprep.subr.mxu0 0.0
    %452 = vmatpush1.msra.mxu0 0.0
    %453 = vmatprep.subr.mxu0 0.0
    %454 = vmatpush1.msra.mxu0 0.0
    %455 = vmatprep.subr.mxu0 0.0
    %456 = vmatpush1.msra.mxu0 0.0
    %457 = vmatprep.subr.mxu0 0.0
    %458 = vmatpush1.msra.mxu0 0.0
    %459 = vmatprep.subr.mxu0 0.0
    %460 = vmatpush1.msra.mxu0 0.0
    %461 = vmatprep.subr.mxu0 0.0
    %462 = vmatpush1.msra.mxu0 0.0
    %463 = vmatprep.subr.mxu0 %v442
    %464 = vmatpush1.msra.mxu0 %v441
    %465 = vmatprep.subr.mxu0 %v440
    %466 = vmatpush1.msra.mxu0 %v439
    %467 = vmatprep.subr.mxu0 %v438
    %468 = vmatpush1.msra.mxu0 %v437
    %469 = vmatprep.subr.mxu0 %v436
    %470 = vmatpush1.msra.mxu0 %v435
    %471 = vmatprep.subr.mxu0 %v434
    %472 = vmatpush1.msra.mxu0 %v433
    %473 = vmatprep.subr.mxu0 %v432
    %474 = vmatpush1.msra.mxu0 %v431
    %475 = vmatprep.subr.mxu0 %v430
    %476 = vmatpush1.msra.mxu0 %v429
    %477 = vmatprep.subr.mxu0 %v428
    %478 = vmatpush1.msra.mxu0 %v427
    %479 = vmatprep.subr.mxu0 0.0
    %480 = vmatpush2.msra.mxu0 0.0
    %481 = vmatprep.subr.mxu0 0.0
    %482 = vmatpush2.msra.mxu0 0.0
    %483 = vmatprep.subr.mxu0 0.0
    %484 = vmatpush2.msra.mxu0 0.0
    %485 = vmatprep.subr.mxu0 0.0
    %486 = vmatpush2.msra.mxu0 0.0
    %487 = vmatprep.subr.mxu0 0.0
    %488 = vmatpush2.msra.mxu0 0.0
    %489 = vmatprep.subr.mxu0 0.0
    %490 = vmatpush2.msra.mxu0 0.0
    %491 = vmatprep.subr.mxu0 0.0
    %492 = vmatpush2.msra.mxu0 0.0
    %493 = vmatprep.subr.mxu0 0.0
    %494 = vmatpush2.msra.mxu0 0.0
    %495 = vmatprep.subr.mxu0 0.0
    %496 = vmatpush2.msra.mxu0 0.0
    %497 = vmatprep.subr.mxu0 0.0
    %498 = vmatpush2.msra.mxu0 0.0
    %499 = vmatprep.subr.mxu0 0.0
    %500 = vmatpush2.msra.mxu0 0.0
    %501 = vmatprep.subr.mxu0 0.0
    %502 = vmatpush2.msra.mxu0 0.0
    %503 = vmatprep.subr.mxu0 0.0
    %504 = vmatpush2.msra.mxu0 0.0
    %505 = vmatprep.subr.mxu0 0.0
    %506 = vmatpush2.msra.mxu0 0.0
    %507 = vmatprep.subr.mxu0 0.0
    %508 = vmatpush2.msra.mxu0 0.0
    %509 = vmatprep.subr.mxu0 0.0
    %510 = vmatpush2.msra.mxu0 0.0
    %511 = vmatprep.mubr.f32.mxu0 0.0
    %512 = vmatmul.mubr.f32.gmra.mxu0 %v445
    %v513 = vpop.f32.mrf.mxu0
    %v514 = vadd.f32 0.0, %v513
    %v515 = vpop.f32.mrf.mxu0
    %v516 = vadd.f32 0.0, %v515
    %517 = vdwg.mxu0
    %v518 = vadd.f32 %v381, %v514
    %v519 = vadd.f32 %v425, %v516
    %v520 = vxor.u32 %v518, 2147483648
    %v521 = vmul.f32 %v520, 1.442695
    %v522 = vpow.pop %v521
    %v523 = vadd.f32 %v522, 1.0
    %v524 = vrcp.pop %v523
    %v525 = vmul.f32 1.0, %v524
    %v526 = vtanh.pop %v518
    %v527 = vmul.f32 %v525, 0.0
    %529 = vrot.lane.b32.xlu0 %v526, 64
    %v530 = vpop.permute.xlu0 %529
    %v532 = vmul.f32 %v525, %v530
    %534 = vrot.lane.b32.xlu0 %v532, 32
    %v535 = vpop.permute.xlu0 %534
    %v537 = vadd.f32 %v527, %v535
    %v538 = vtanh.pop %v537
    %540 = vrot.lane.b32.xlu0 %v538, 64
    %v541 = vpop.permute.xlu0 %540
    %v543 = vmul.f32 %v525, %v541
    %v544 = vxor.u32 %v519, 2147483648
    %v545 = vmul.f32 %v544, 1.442695
    %v546 = vpow.pop %v545
    %v547 = vadd.f32 %v546, 1.0
    %v548 = vrcp.pop %v547
    %v549 = vmul.f32 1.0, %v548
    %v550 = vtanh.pop %v519
    %v551 = vmul.f32 %v549, 0.0
    %553 = vrot.lane.b32.xlu0 %v550, 64
    %v554 = vpop.permute.xlu0 %553
    %v556 = vmul.f32 %v549, %v554
    %558 = vrot.lane.b32.xlu0 %v556, 32
    %v559 = vpop.permute.xlu0 %558
    %v561 = vadd.f32 %v551, %v559
    %v562 = vtanh.pop %v561
    %564 = vrot.lane.b32.xlu0 %v562, 64
    %v565 = vpop.permute.xlu0 %564
    %v567 = vmul.f32 %v549, %v565
    %569 = vrot.lane.b32.xlu0 %v543, 32
    %v570 = vpop.permute.xlu0 %569
    %573 = vrot.lane.b32.xlu0 %v567, 64
    %v574 = vpop.permute.xlu0 %573
    %v576 = vsel %vm289, %v570, %v574
    %v578 = vsel %vm443, %v576, 0
    %580 = vmatprep.subr.mxu0 0.0
    %581 = vmatpush1.msra.mxu0 0.0
    %582 = vmatprep.subr.mxu0 0.0
    %583 = vmatpush1.msra.mxu0 0.0
    %584 = vmatprep.subr.mxu0 0.0
    %585 = vmatpush1.msra.mxu0 0.0
    %586 = vmatprep.subr.mxu0 0.0
    %587 = vmatpush1.msra.mxu0 0.0
    %588 = vmatprep.subr.mxu0 0.0
    %589 = vmatpush1.msra.mxu0 0.0
    %590 = vmatprep.subr.mxu0 0.0
    %591 = vmatpush1.msra.mxu0 0.0
    %592 = vmatprep.subr.mxu0 0.0
    %593 = vmatpush1.msra.mxu0 0.0
    %594 = vmatprep.subr.mxu0 0.0
    %595 = vmatpush1.msra.mxu0 0.0
    %596 = vmatprep.subr.mxu0 %v442
    %597 = vmatpush1.msra.mxu0 %v441
    %598 = vmatprep.subr.mxu0 %v440
    %599 = vmatpush1.msra.mxu0 %v439
    %600 = vmatprep.subr.mxu0 %v438
    %601 = vmatpush1.msra.mxu0 %v437
    %602 = vmatprep.subr.mxu0 %v436
    %603 = vmatpush1.msra.mxu0 %v435
    %604 = vmatprep.subr.mxu0 %v434
    %605 = vmatpush1.msra.mxu0 %v433
    %606 = vmatprep.subr.mxu0 %v432
    %607 = vmatpush1.msra.mxu0 %v431
    %608 = vmatprep.subr.mxu0 %v430
    %609 = vmatpush1.msra.mxu0 %v429
    %610 = vmatprep.subr.mxu0 %v428
    %611 = vmatpush1.msra.mxu0 %v427
    %612 = vmatprep.subr.mxu0 0.0
    %613 = vmatpush2.msra.mxu0 0.0
    %614 = vmatprep.subr.mxu0 0.0
    %615 = vmatpush2.msra.mxu0 0.0
    %616 = vmatprep.subr.mxu0 0.0
    %617 = vmatpush2.msra.mxu0 0.0
    %618 = vmatprep.subr.mxu0 0.0
    %619 = vmatpush2.msra.mxu0 0.0
    %620 = vmatprep.subr.mxu0 0.0
    %621 = vmatpush2.msra.mxu0 0.0
    %622 = vmatprep.subr.mxu0 0.0
    %623 = vmatpush2.msra.mxu0 0.0
    %624 = vmatprep.subr.mxu0 0.0
    %625 = vmatpush2.msra.mxu0 0.0
    %626 = vmatprep.subr.mxu0 0.0
    %627 = vmatpush2.msra.mxu0 0.0
    %628 = vmatprep.subr.mxu0 0.0
    %629 = vmatpush2.msra.mxu0 0.0
    %630 = vmatprep.subr.mxu0 0.0
    %631 = vmatpush2.msra.mxu0 0.0
    %632 = vmatprep.subr.mxu0 0.0
    %633 = vmatpush2.msra.mxu0 0.0
    %634 = vmatprep.subr.mxu0 0.0
    %635 = vmatpush2.msra.mxu0 0.0
    %636 = vmatprep.subr.mxu0 0.0
    %637 = vmatpush2.msra.mxu0 0.0
    %638 = vmatprep.subr.mxu0 0.0
    %639 = vmatpush2.msra.mxu0 0.0
    %640 = vmatprep.subr.mxu0 0.0
    %641 = vmatpush2.msra.mxu0 0.0
    %642 = vmatprep.subr.mxu0 0.0
    %643 = vmatpush2.msra.mxu0 0.0
    %644 = vmatprep.mubr.f32.mxu0 0.0
    %645 = vmatmul.mubr.f32.gmra.mxu0 %v578
    %v646 = vpop.f32.mrf.mxu0
    %v647 = vadd.f32 0.0, %v646
    %v648 = vpop.f32.mrf.mxu0
    %v649 = vadd.f32 0.0, %v648
    %650 = vdwg.mxu0
    %v651 = vadd.f32 %v387, %v647
    %v652 = vadd.f32 %v419, %v649
    %v653 = vxor.u32 %v651, 2147483648
    %v654 = vmul.f32 %v653, 1.442695
    %v655 = vpow.pop %v654
    %v656 = vadd.f32 %v655, 1.0
    %v657 = vrcp.pop %v656
    %v658 = vmul.f32 1.0, %v657
    %v659 = vtanh.pop %v651
    %v660 = vmul.f32 %v658, %v537
    %662 = vrot.lane.b32.xlu0 %v659, 64
    %v663 = vpop.permute.xlu0 %662
    %v665 = vmul.f32 %v658, %v663
    %667 = vrot.lane.b32.xlu0 %v665, 32
    %v668 = vpop.permute.xlu0 %667
    %v670 = vadd.f32 %v660, %v668
    %v671 = vtanh.pop %v670
    %673 = vrot.lane.b32.xlu0 %v671, 64
    %v674 = vpop.permute.xlu0 %673
    %v676 = vmul.f32 %v658, %v674
    %v677 = vxor.u32 %v652, 2147483648
    %v678 = vmul.f32 %v677, 1.442695
    %v679 = vpow.pop %v678
    %v680 = vadd.f32 %v679, 1.0
    %v681 = vrcp.pop %v680
    %v682 = vmul.f32 1.0, %v681
    %v683 = vtanh.pop %v652
    %v684 = vmul.f32 %v682, %v561
    %686 = vrot.lane.b32.xlu0 %v683, 64
    %v687 = vpop.permute.xlu0 %686
    %v689 = vmul.f32 %v682, %v687
    %691 = vrot.lane.b32.xlu0 %v689, 32
    %v692 = vpop.permute.xlu0 %691
    %v694 = vadd.f32 %v684, %v692
    %v695 = vtanh.pop %v694
    %697 = vrot.lane.b32.xlu0 %v695, 64
    %v698 = vpop.permute.xlu0 %697
    %v700 = vmul.f32 %v682, %v698
    %702 = vrot.lane.b32.xlu0 %v676, 32
    %v703 = vpop.permute.xlu0 %702
    %706 = vrot.lane.b32.xlu0 %v700, 64
    %v707 = vpop.permute.xlu0 %706
    %v709 = vsel %vm289, %v703, %v707
    %v711 = vsel %vm443, %v709, 0
    %713 = vmatprep.subr.mxu0 0.0
    %714 = vmatpush1.msra.mxu0 0.0
    %715 = vmatprep.subr.mxu0 0.0
    %716 = vmatpush1.msra.mxu0 0.0
    %717 = vmatprep.subr.mxu0 0.0
    %718 = vmatpush1.msra.mxu0 0.0
    %719 = vmatprep.subr.mxu0 0.0
    %720 = vmatpush1.msra.mxu0 0.0
    %721 = vmatprep.subr.mxu0 0.0
    %722 = vmatpush1.msra.mxu0 0.0
    %723 = vmatprep.subr.mxu0 0.0
    %724 = vmatpush1.msra.mxu0 0.0
    %725 = vmatprep.subr.mxu0 0.0
    %726 = vmatpush1.msra.mxu0 0.0
    %727 = vmatprep.subr.mxu0 0.0
    %728 = vmatpush1.msra.mxu0 0.0
    %729 = vmatprep.subr.mxu0 %v442
    %730 = vmatpush1.msra.mxu0 %v441
    %731 = vmatprep.subr.mxu0 %v440
    %732 = vmatpush1.msra.mxu0 %v439
    %733 = vmatprep.subr.mxu0 %v438
    %734 = vmatpush1.msra.mxu0 %v437
    %735 = vmatprep.subr.mxu0 %v436
    %736 = vmatpush1.msra.mxu0 %v435
    %737 = vmatprep.subr.mxu0 %v434
    %738 = vmatpush1.msra.mxu0 %v433
    %739 = vmatprep.subr.mxu0 %v432
    %740 = vmatpush1.msra.mxu0 %v431
    %741 = vmatprep.subr.mxu0 %v430
    %742 = vmatpush1.msra.mxu0 %v429
    %743 = vmatprep.subr.mxu0 %v428
    %744 = vmatpush1.msra.mxu0 %v427
    %745 = vmatprep.subr.mxu0 0.0
    %746 = vmatpush2.msra.mxu0 0.0
    %747 = vmatprep.subr.mxu0 0.0
    %748 = vmatpush2.msra.mxu0 0.0
    %749 = vmatprep.subr.mxu0 0.0
    %750 = vmatpush2.msra.mxu0 0.0
    %751 = vmatprep.subr.mxu0 0.0
    %752 = vmatpush2.msra.mxu0 0.0
    %753 = vmatprep.subr.mxu0 0.0
    %754 = vmatpush2.msra.mxu0 0.0
    %755 = vmatprep.subr.mxu0 0.0
    %756 = vmatpush2.msra.mxu0 0.0
    %757 = vmatprep.subr.mxu0 0.0
    %758 = vmatpush2.msra.mxu0 0.0
    %759 = vmatprep.subr.mxu0 0.0
    %760 = vmatpush2.msra.mxu0 0.0
    %761 = vmatprep.subr.mxu0 0.0
    %762 = vmatpush2.msra.mxu0 0.0
    %763 = vmatprep.subr.mxu0 0.0
    %764 = vmatpush2.msra.mxu0 0.0
    %765 = vmatprep.subr.mxu0 0.0
    %766 = vmatpush2.msra.mxu0 0.0
    %767 = vmatprep.subr.mxu0 0.0
    %768 = vmatpush2.msra.mxu0 0.0
    %769 = vmatprep.subr.mxu0 0.0
    %770 = vmatpush2.msra.mxu0 0.0
    %771 = vmatprep.subr.mxu0 0.0
    %772 = vmatpush2.msra.mxu0 0.0
    %773 = vmatprep.subr.mxu0 0.0
    %774 = vmatpush2.msra.mxu0 0.0
    %775 = vmatprep.subr.mxu0 0.0
    %776 = vmatpush2.msra.mxu0 0.0
    %777 = vmatprep.mubr.f32.mxu0 0.0
    %778 = vmatmul.mubr.f32.gmra.mxu0 %v711
    %v779 = vpop.f32.mrf.mxu0
    %v780 = vadd.f32 0.0, %v779
    %v781 = vpop.f32.mrf.mxu0
    %v782 = vadd.f32 0.0, %v781
    %783 = vdwg.mxu0
    %v784 = vadd.f32 %v393, %v780
    %v785 = vadd.f32 %v413, %v782
    %v786 = vxor.u32 %v784, 2147483648
    %v787 = vmul.f32 %v786, 1.442695
    %v788 = vpow.pop %v787
    %v789 = vadd.f32 %v788, 1.0
    %v790 = vrcp.pop %v789
    %v791 = vmul.f32 1.0, %v790
    %v792 = vtanh.pop %v784
    %v793 = vmul.f32 %v791, %v670
    %795 = vrot.lane.b32.xlu0 %v792, 64
    %v796 = vpop.permute.xlu0 %795
    %v798 = vmul.f32 %v791, %v796
    %800 = vrot.lane.b32.xlu0 %v798, 32
    %v801 = vpop.permute.xlu0 %800
    %v803 = vadd.f32 %v793, %v801
    %v804 = vtanh.pop %v803
    %806 = vrot.lane.b32.xlu0 %v804, 64
    %v807 = vpop.permute.xlu0 %806
    %v809 = vmul.f32 %v791, %v807
    %v810 = vxor.u32 %v785, 2147483648
    %v811 = vmul.f32 %v810, 1.442695
    %v812 = vpow.pop %v811
    %v813 = vadd.f32 %v812, 1.0
    %v814 = vrcp.pop %v813
    %v815 = vmul.f32 1.0, %v814
    %v816 = vtanh.pop %v785
    %v817 = vmul.f32 %v815, %v694
    %819 = vrot.lane.b32.xlu0 %v816, 64
    %v820 = vpop.permute.xlu0 %819
    %v822 = vmul.f32 %v815, %v820
    %824 = vrot.lane.b32.xlu0 %v822, 32
    %v825 = vpop.permute.xlu0 %824
    %v827 = vadd.f32 %v817, %v825
    %v828 = vtanh.pop %v827
    %830 = vrot.lane.b32.xlu0 %v828, 64
    %v831 = vpop.permute.xlu0 %830
    %v833 = vmul.f32 %v815, %v831
    %835 = vrot.lane.b32.xlu0 %v809, 32
    %v836 = vpop.permute.xlu0 %835
    %839 = vrot.lane.b32.xlu0 %v833, 64
    %v840 = vpop.permute.xlu0 %839
    %v842 = vsel %vm289, %v836, %v840
    %v844 = vsel %vm443, %v842, 0
    %846 = vmatprep.subr.mxu0 0.0
    %847 = vmatpush1.msra.mxu0 0.0
    %848 = vmatprep.subr.mxu0 0.0
    %849 = vmatpush1.msra.mxu0 0.0
    %850 = vmatprep.subr.mxu0 0.0
    %851 = vmatpush1.msra.mxu0 0.0
    %852 = vmatprep.subr.mxu0 0.0
    %853 = vmatpush1.msra.mxu0 0.0
    %854 = vmatprep.subr.mxu0 0.0
    %855 = vmatpush1.msra.mxu0 0.0
    %856 = vmatprep.subr.mxu0 0.0
    %857 = vmatpush1.msra.mxu0 0.0
    %858 = vmatprep.subr.mxu0 0.0
    %859 = vmatpush1.msra.mxu0 0.0
    %860 = vmatprep.subr.mxu0 0.0
    %861 = vmatpush1.msra.mxu0 0.0
    %862 = vmatprep.subr.mxu0 %v442
    %863 = vmatpush1.msra.mxu0 %v441
    %864 = vmatprep.subr.mxu0 %v440
    %865 = vmatpush1.msra.mxu0 %v439
    %866 = vmatprep.subr.mxu0 %v438
    %867 = vmatpush1.msra.mxu0 %v437
    %868 = vmatprep.subr.mxu0 %v436
    %869 = vmatpush1.msra.mxu0 %v435
    %870 = vmatprep.subr.mxu0 %v434
    %871 = vmatpush1.msra.mxu0 %v433
    %872 = vmatprep.subr.mxu0 %v432
    %873 = vmatpush1.msra.mxu0 %v431
    %874 = vmatprep.subr.mxu0 %v430
    %875 = vmatpush1.msra.mxu0 %v429
    %876 = vmatprep.subr.mxu0 %v428
    %877 = vmatpush1.msra.mxu0 %v427
    %878 = vmatprep.subr.mxu0 0.0
    %879 = vmatpush2.msra.mxu0 0.0
    %880 = vmatprep.subr.mxu0 0.0
    %881 = vmatpush2.msra.mxu0 0.0
    %882 = vmatprep.subr.mxu0 0.0
    %883 = vmatpush2.msra.mxu0 0.0
    %884 = vmatprep.subr.mxu0 0.0
    %885 = vmatpush2.msra.mxu0 0.0
    %886 = vmatprep.subr.mxu0 0.0
    %887 = vmatpush2.msra.mxu0 0.0
    %888 = vmatprep.subr.mxu0 0.0
    %889 = vmatpush2.msra.mxu0 0.0
    %890 = vmatprep.subr.mxu0 0.0
    %891 = vmatpush2.msra.mxu0 0.0
    %892 = vmatprep.subr.mxu0 0.0
    %893 = vmatpush2.msra.mxu0 0.0
    %894 = vmatprep.subr.mxu0 0.0
    %895 = vmatpush2.msra.mxu0 0.0
    %896 = vmatprep.subr.mxu0 0.0
    %897 = vmatpush2.msra.mxu0 0.0
    %898 = vmatprep.subr.mxu0 0.0
    %899 = vmatpush2.msra.mxu0 0.0
    %900 = vmatprep.subr.mxu0 0.0
    %901 = vmatpush2.msra.mxu0 0.0
    %902 = vmatprep.subr.mxu0 0.0
    %903 = vmatpush2.msra.mxu0 0.0
    %904 = vmatprep.subr.mxu0 0.0
    %905 = vmatpush2.msra.mxu0 0.0
    %906 = vmatprep.subr.mxu0 0.0
    %907 = vmatpush2.msra.mxu0 0.0
    %908 = vmatprep.subr.mxu0 0.0
    %909 = vmatpush2.msra.mxu0 0.0
    %910 = vmatprep.mubr.f32.mxu0 0.0
    %911 = vmatmul.mubr.f32.gmra.mxu0 %v844
    %v912 = vpop.f32.mrf.mxu0
    %v913 = vadd.f32 0.0, %v912
    %v914 = vpop.f32.mrf.mxu0
    %v915 = vadd.f32 0.0, %v914
    %916 = vdwg.mxu0
    %v917 = vadd.f32 %v399, %v913
    %v918 = vadd.f32 %v407, %v915
    %v919 = vxor.u32 %v917, 2147483648
    %v920 = vmul.f32 %v919, 1.442695
    %v921 = vpow.pop %v920
    %v922 = vadd.f32 %v921, 1.0
    %v923 = vrcp.pop %v922
    %v924 = vmul.f32 1.0, %v923
    %v925 = vtanh.pop %v917
    %v926 = vmul.f32 %v924, %v803
    %928 = vrot.lane.b32.xlu0 %v925, 64
    %v929 = vpop.permute.xlu0 %928
    %v931 = vmul.f32 %v924, %v929
    %933 = vrot.lane.b32.xlu0 %v931, 32
    %v934 = vpop.permute.xlu0 %933
    %v936 = vadd.f32 %v926, %v934
    %v937 = vtanh.pop %v936
    %939 = vrot.lane.b32.xlu0 %v937, 64
    %v940 = vpop.permute.xlu0 %939
    %v942 = vmul.f32 %v924, %v940
    %v943 = vxor.u32 %v918, 2147483648
    %v944 = vmul.f32 %v943, 1.442695
    %v945 = vpow.pop %v944
    %v946 = vadd.f32 %v945, 1.0
    %v947 = vrcp.pop %v946
    %v948 = vmul.f32 1.0, %v947
    %v949 = vtanh.pop %v918
    %v950 = vmul.f32 %v948, %v827
    %952 = vrot.lane.b32.xlu0 %v949, 64
    %v953 = vpop.permute.xlu0 %952
    %v955 = vmul.f32 %v948, %v953
    %957 = vrot.lane.b32.xlu0 %v955, 32
    %v958 = vpop.permute.xlu0 %957
    %v960 = vadd.f32 %v950, %v958
    %v961 = vtanh.pop %v960
    %963 = vrot.lane.b32.xlu0 %v961, 64
    %v964 = vpop.permute.xlu0 %963
    %v966 = vmul.f32 %v948, %v964
    %968 = vrot.lane.b32.xlu0 %v942, 32
    %v969 = vpop.permute.xlu0 %968
    %972 = vrot.lane.b32.xlu0 %v966, 64
    %v973 = vpop.permute.xlu0 %972
    %v975 = vsel %vm289, %v969, %v973
    %v977 = vsel %vm443, %v975, 0
    %979 = vmatprep.subr.mxu0 0.0
    %980 = vmatpush1.msra.mxu0 0.0
    %981 = vmatprep.subr.mxu0 0.0
    %982 = vmatpush1.msra.mxu0 0.0
    %983 = vmatprep.subr.mxu0 0.0
    %984 = vmatpush1.msra.mxu0 0.0
    %985 = vmatprep.subr.mxu0 0.0
    %986 = vmatpush1.msra.mxu0 0.0
    %987 = vmatprep.subr.mxu0 0.0
    %988 = vmatpush1.msra.mxu0 0.0
    %989 = vmatprep.subr.mxu0 0.0
    %990 = vmatpush1.msra.mxu0 0.0
    %991 = vmatprep.subr.mxu0 0.0
    %992 = vmatpush1.msra.mxu0 0.0
    %993 = vmatprep.subr.mxu0 0.0
    %994 = vmatpush1.msra.mxu0 0.0
    %995 = vmatprep.subr.mxu0 %v442
    %996 = vmatpush1.msra.mxu0 %v441
    %997 = vmatprep.subr.mxu0 %v440
    %998 = vmatpush1.msra.mxu0 %v439
    %999 = vmatprep.subr.mxu0 %v438
    %1000 = vmatpush1.msra.mxu0 %v437
    %1001 = vmatprep.subr.mxu0 %v436
    %1002 = vmatpush1.msra.mxu0 %v435
    %1003 = vmatprep.subr.mxu0 %v434
    %1004 = vmatpush1.msra.mxu0 %v433
    %1005 = vmatprep.subr.mxu0 %v432
    %1006 = vmatpush1.msra.mxu0 %v431
    %1007 = vmatprep.subr.mxu0 %v430
    %1008 = vmatpush1.msra.mxu0 %v429
    %1009 = vmatprep.subr.mxu0 %v428
    %1010 = vmatpush1.msra.mxu0 %v427
    %1011 = vmatprep.subr.mxu0 0.0
    %1012 = vmatpush2.msra.mxu0 0.0
    %1013 = vmatprep.subr.mxu0 0.0
    %1014 = vmatpush2.msra.mxu0 0.0
    %1015 = vmatprep.subr.mxu0 0.0
    %1016 = vmatpush2.msra.mxu0 0.0
    %1017 = vmatprep.subr.mxu0 0.0
    %1018 = vmatpush2.msra.mxu0 0.0
    %1019 = vmatprep.subr.mxu0 0.0
    %1020 = vmatpush2.msra.mxu0 0.0
    %1021 = vmatprep.subr.mxu0 0.0
    %1022 = vmatpush2.msra.mxu0 0.0
    %1023 = vmatprep.subr.mxu0 0.0
    %1024 = vmatpush2.msra.mxu0 0.0
    %1025 = vmatprep.subr.mxu0 0.0
    %1026 = vmatpush2.msra.mxu0 0.0
    %1027 = vmatprep.subr.mxu0 0.0
    %1028 = vmatpush2.msra.mxu0 0.0
    %1029 = vmatprep.subr.mxu0 0.0
    %1030 = vmatpush2.msra.mxu0 0.0
    %1031 = vmatprep.subr.mxu0 0.0
    %1032 = vmatpush2.msra.mxu0 0.0
    %1033 = vmatprep.subr.mxu0 0.0
    %1034 = vmatpush2.msra.mxu0 0.0
    %1035 = vmatprep.subr.mxu0 0.0
    %1036 = vmatpush2.msra.mxu0 0.0
    %1037 = vmatprep.subr.mxu0 0.0
    %1038 = vmatpush2.msra.mxu0 0.0
    %1039 = vmatprep.subr.mxu0 0.0
    %1040 = vmatpush2.msra.mxu0 0.0
    %1041 = vmatprep.subr.mxu0 0.0
    %1042 = vmatpush2.msra.mxu0 0.0
    %1043 = vmatprep.mubr.f32.mxu0 0.0
    %1044 = vmatmul.mubr.f32.gmra.mxu0 %v977
    %v1045 = vpop.f32.mrf.mxu0
    %v1046 = vadd.f32 0.0, %v1045
    %v1047 = vpop.f32.mrf.mxu0
    %v1048 = vadd.f32 0.0, %v1047
    %1049 = vdwg.mxu0
    %v1050 = vadd.f32 %v405, %v1046
    %v1051 = vadd.f32 %v401, %v1048
    %v1052 = vxor.u32 %v1050, 2147483648
    %v1053 = vmul.f32 %v1052, 1.442695
    %v1054 = vpow.pop %v1053
    %v1055 = vadd.f32 %v1054, 1.0
    %v1056 = vrcp.pop %v1055
    %v1057 = vmul.f32 1.0, %v1056
    %v1058 = vtanh.pop %v1050
    %v1059 = vmul.f32 %v1057, %v936
    %1061 = vrot.lane.b32.xlu0 %v1058, 64
    %v1062 = vpop.permute.xlu0 %1061
    %v1064 = vmul.f32 %v1057, %v1062
    %1066 = vrot.lane.b32.xlu0 %v1064, 32
    %v1067 = vpop.permute.xlu0 %1066
    %v1069 = vadd.f32 %v1059, %v1067
    %v1070 = vtanh.pop %v1069
    %1072 = vrot.lane.b32.xlu0 %v1070, 64
    %v1073 = vpop.permute.xlu0 %1072
    %v1075 = vmul.f32 %v1057, %v1073
    %v1076 = vxor.u32 %v1051, 2147483648
    %v1077 = vmul.f32 %v1076, 1.442695
    %v1078 = vpow.pop %v1077
    %v1079 = vadd.f32 %v1078, 1.0
    %v1080 = vrcp.pop %v1079
    %v1081 = vmul.f32 1.0, %v1080
    %v1082 = vtanh.pop %v1051
    %v1083 = vmul.f32 %v1081, %v960
    %1085 = vrot.lane.b32.xlu0 %v1082, 64
    %v1086 = vpop.permute.xlu0 %1085
    %v1088 = vmul.f32 %v1081, %v1086
    %1090 = vrot.lane.b32.xlu0 %v1088, 32
    %v1091 = vpop.permute.xlu0 %1090
    %v1093 = vadd.f32 %v1083, %v1091
    %v1094 = vtanh.pop %v1093
    %1096 = vrot.lane.b32.xlu0 %v1094, 64
    %v1097 = vpop.permute.xlu0 %1096
    %v1099 = vmul.f32 %v1081, %v1097
    %1101 = vrot.lane.b32.xlu0 %v1075, 32
    %v1102 = vpop.permute.xlu0 %1101
    %1105 = vrot.lane.b32.xlu0 %v1099, 64
    %v1106 = vpop.permute.xlu0 %1105
    %v1108 = vsel %vm289, %v1102, %v1106
    %v1110 = vsel %vm443, %v1108, 0
    %1112 = vmatprep.subr.mxu0 0.0
    %1113 = vmatpush1.msra.mxu0 0.0
    %1114 = vmatprep.subr.mxu0 0.0
    %1115 = vmatpush1.msra.mxu0 0.0
    %1116 = vmatprep.subr.mxu0 0.0
    %1117 = vmatpush1.msra.mxu0 0.0
    %1118 = vmatprep.subr.mxu0 0.0
    %1119 = vmatpush1.msra.mxu0 0.0
    %1120 = vmatprep.subr.mxu0 0.0
    %1121 = vmatpush1.msra.mxu0 0.0
    %1122 = vmatprep.subr.mxu0 0.0
    %1123 = vmatpush1.msra.mxu0 0.0
    %1124 = vmatprep.subr.mxu0 0.0
    %1125 = vmatpush1.msra.mxu0 0.0
    %1126 = vmatprep.subr.mxu0 0.0
    %1127 = vmatpush1.msra.mxu0 0.0
    %1128 = vmatprep.subr.mxu0 %v442
    %1129 = vmatpush1.msra.mxu0 %v441
    %1130 = vmatprep.subr.mxu0 %v440
    %1131 = vmatpush1.msra.mxu0 %v439
    %1132 = vmatprep.subr.mxu0 %v438
    %1133 = vmatpush1.msra.mxu0 %v437
    %1134 = vmatprep.subr.mxu0 %v436
    %1135 = vmatpush1.msra.mxu0 %v435
    %1136 = vmatprep.subr.mxu0 %v434
    %1137 = vmatpush1.msra.mxu0 %v433
    %1138 = vmatprep.subr.mxu0 %v432
    %1139 = vmatpush1.msra.mxu0 %v431
    %1140 = vmatprep.subr.mxu0 %v430
    %1141 = vmatpush1.msra.mxu0 %v429
    %1142 = vmatprep.subr.mxu0 %v428
    %1143 = vmatpush1.msra.mxu0 %v427
    %1144 = vmatprep.subr.mxu0 0.0
    %1145 = vmatpush2.msra.mxu0 0.0
    %1146 = vmatprep.subr.mxu0 0.0
    %1147 = vmatpush2.msra.mxu0 0.0
    %1148 = vmatprep.subr.mxu0 0.0
    %1149 = vmatpush2.msra.mxu0 0.0
    %1150 = vmatprep.subr.mxu0 0.0
    %1151 = vmatpush2.msra.mxu0 0.0
    %1152 = vmatprep.subr.mxu0 0.0
    %1153 = vmatpush2.msra.mxu0 0.0
    %1154 = vmatprep.subr.mxu0 0.0
    %1155 = vmatpush2.msra.mxu0 0.0
    %1156 = vmatprep.subr.mxu0 0.0
    %1157 = vmatpush2.msra.mxu0 0.0
    %1158 = vmatprep.subr.mxu0 0.0
    %1159 = vmatpush2.msra.mxu0 0.0
    %1160 = vmatprep.subr.mxu0 0.0
    %1161 = vmatpush2.msra.mxu0 0.0
    %1162 = vmatprep.subr.mxu0 0.0
    %1163 = vmatpush2.msra.mxu0 0.0
    %1164 = vmatprep.subr.mxu0 0.0
    %1165 = vmatpush2.msra.mxu0 0.0
    %1166 = vmatprep.subr.mxu0 0.0
    %1167 = vmatpush2.msra.mxu0 0.0
    %1168 = vmatprep.subr.mxu0 0.0
    %1169 = vmatpush2.msra.mxu0 0.0
    %1170 = vmatprep.subr.mxu0 0.0
    %1171 = vmatpush2.msra.mxu0 0.0
    %1172 = vmatprep.subr.mxu0 0.0
    %1173 = vmatpush2.msra.mxu0 0.0
    %1174 = vmatprep.subr.mxu0 0.0
    %1175 = vmatpush2.msra.mxu0 0.0
    %1176 = vmatprep.mubr.f32.mxu0 0.0
    %1177 = vmatmul.mubr.f32.gmra.mxu0 %v1110
    %v1178 = vpop.f32.mrf.mxu0
    %v1179 = vadd.f32 0.0, %v1178
    %v1180 = vpop.f32.mrf.mxu0
    %v1181 = vadd.f32 0.0, %v1180
    %1182 = vdwg.mxu0
    %v1183 = vadd.f32 %v411, %v1179
    %v1184 = vadd.f32 %v395, %v1181
    %v1185 = vxor.u32 %v1183, 2147483648
    %v1186 = vmul.f32 %v1185, 1.442695
    %v1187 = vpow.pop %v1186
    %v1188 = vadd.f32 %v1187, 1.0
    %v1189 = vrcp.pop %v1188
    %v1190 = vmul.f32 1.0, %v1189
    %v1191 = vtanh.pop %v1183
    %v1192 = vmul.f32 %v1190, %v1069
    %1194 = vrot.lane.b32.xlu0 %v1191, 64
    %v1195 = vpop.permute.xlu0 %1194
    %v1197 = vmul.f32 %v1190, %v1195
    %1199 = vrot.lane.b32.xlu0 %v1197, 32
    %v1200 = vpop.permute.xlu0 %1199
    %v1202 = vadd.f32 %v1192, %v1200
    %v1203 = vtanh.pop %v1202
    %1205 = vrot.lane.b32.xlu0 %v1203, 64
    %v1206 = vpop.permute.xlu0 %1205
    %v1208 = vmul.f32 %v1190, %v1206
    %v1209 = vxor.u32 %v1184, 2147483648
    %v1210 = vmul.f32 %v1209, 1.442695
    %v1211 = vpow.pop %v1210
    %v1212 = vadd.f32 %v1211, 1.0
    %v1213 = vrcp.pop %v1212
    %v1214 = vmul.f32 1.0, %v1213
    %v1215 = vtanh.pop %v1184
    %v1216 = vmul.f32 %v1214, %v1093
    %1218 = vrot.lane.b32.xlu0 %v1215, 64
    %v1219 = vpop.permute.xlu0 %1218
    %v1221 = vmul.f32 %v1214, %v1219
    %1223 = vrot.lane.b32.xlu0 %v1221, 32
    %v1224 = vpop.permute.xlu0 %1223
    %v1226 = vadd.f32 %v1216, %v1224
    %v1227 = vtanh.pop %v1226
    %1229 = vrot.lane.b32.xlu0 %v1227, 64
    %v1230 = vpop.permute.xlu0 %1229
    %v1232 = vmul.f32 %v1214, %v1230
    %1234 = vrot.lane.b32.xlu0 %v1208, 32
    %v1235 = vpop.permute.xlu0 %1234
    %1238 = vrot.lane.b32.xlu0 %v1232, 64
    %v1239 = vpop.permute.xlu0 %1238
    %v1241 = vsel %vm289, %v1235, %v1239
    %v1243 = vsel %vm443, %v1241, 0
    %1245 = vmatprep.subr.mxu0 0.0
    %1246 = vmatpush1.msra.mxu0 0.0
    %1247 = vmatprep.subr.mxu0 0.0
    %1248 = vmatpush1.msra.mxu0 0.0
    %1249 = vmatprep.subr.mxu0 0.0
    %1250 = vmatpush1.msra.mxu0 0.0
    %1251 = vmatprep.subr.mxu0 0.0
    %1252 = vmatpush1.msra.mxu0 0.0
    %1253 = vmatprep.subr.mxu0 0.0
    %1254 = vmatpush1.msra.mxu0 0.0
    %1255 = vmatprep.subr.mxu0 0.0
    %1256 = vmatpush1.msra.mxu0 0.0
    %1257 = vmatprep.subr.mxu0 0.0
    %1258 = vmatpush1.msra.mxu0 0.0
    %1259 = vmatprep.subr.mxu0 0.0
    %1260 = vmatpush1.msra.mxu0 0.0
    %1261 = vmatprep.subr.mxu0 %v442
    %1262 = vmatpush1.msra.mxu0 %v441
    %1263 = vmatprep.subr.mxu0 %v440
    %1264 = vmatpush1.msra.mxu0 %v439
    %1265 = vmatprep.subr.mxu0 %v438
    %1266 = vmatpush1.msra.mxu0 %v437
    %1267 = vmatprep.subr.mxu0 %v436
    %1268 = vmatpush1.msra.mxu0 %v435
    %1269 = vmatprep.subr.mxu0 %v434
    %1270 = vmatpush1.msra.mxu0 %v433
    %1271 = vmatprep.subr.mxu0 %v432
    %1272 = vmatpush1.msra.mxu0 %v431
    %1273 = vmatprep.subr.mxu0 %v430
    %1274 = vmatpush1.msra.mxu0 %v429
    %1275 = vmatprep.subr.mxu0 %v428
    %1276 = vmatpush1.msra.mxu0 %v427
    %1277 = vmatprep.subr.mxu0 0.0
    %1278 = vmatpush2.msra.mxu0 0.0
    %1279 = vmatprep.subr.mxu0 0.0
    %1280 = vmatpush2.msra.mxu0 0.0
    %1281 = vmatprep.subr.mxu0 0.0
    %1282 = vmatpush2.msra.mxu0 0.0
    %1283 = vmatprep.subr.mxu0 0.0
    %1284 = vmatpush2.msra.mxu0 0.0
    %1285 = vmatprep.subr.mxu0 0.0
    %1286 = vmatpush2.msra.mxu0 0.0
    %1287 = vmatprep.subr.mxu0 0.0
    %1288 = vmatpush2.msra.mxu0 0.0
    %1289 = vmatprep.subr.mxu0 0.0
    %1290 = vmatpush2.msra.mxu0 0.0
    %1291 = vmatprep.subr.mxu0 0.0
    %1292 = vmatpush2.msra.mxu0 0.0
    %1293 = vmatprep.subr.mxu0 0.0
    %1294 = vmatpush2.msra.mxu0 0.0
    %1295 = vmatprep.subr.mxu0 0.0
    %1296 = vmatpush2.msra.mxu0 0.0
    %1297 = vmatprep.subr.mxu0 0.0
    %1298 = vmatpush2.msra.mxu0 0.0
    %1299 = vmatprep.subr.mxu0 0.0
    %1300 = vmatpush2.msra.mxu0 0.0
    %1301 = vmatprep.subr.mxu0 0.0
    %1302 = vmatpush2.msra.mxu0 0.0
    %1303 = vmatprep.subr.mxu0 0.0
    %1304 = vmatpush2.msra.mxu0 0.0
    %1305 = vmatprep.subr.mxu0 0.0
    %1306 = vmatpush2.msra.mxu0 0.0
    %1307 = vmatprep.subr.mxu0 0.0
    %1308 = vmatpush2.msra.mxu0 0.0
    %1309 = vmatprep.mubr.f32.mxu0 0.0
    %1310 = vmatmul.mubr.f32.gmra.mxu0 %v1243
    %v1311 = vpop.f32.mrf.mxu0
    %v1312 = vadd.f32 0.0, %v1311
    %v1313 = vpop.f32.mrf.mxu0
    %v1314 = vadd.f32 0.0, %v1313
    %1315 = vdwg.mxu0
    %v1316 = vadd.f32 %v417, %v1312
    %v1317 = vadd.f32 %v389, %v1314
    %v1318 = vxor.u32 %v1316, 2147483648
    %v1319 = vmul.f32 %v1318, 1.442695
    %v1320 = vpow.pop %v1319
    %v1321 = vadd.f32 %v1320, 1.0
    %v1322 = vrcp.pop %v1321
    %v1323 = vmul.f32 1.0, %v1322
    %v1324 = vtanh.pop %v1316
    %v1325 = vmul.f32 %v1323, %v1202
    %1327 = vrot.lane.b32.xlu0 %v1324, 64
    %v1328 = vpop.permute.xlu0 %1327
    %v1330 = vmul.f32 %v1323, %v1328
    %1332 = vrot.lane.b32.xlu0 %v1330, 32
    %v1333 = vpop.permute.xlu0 %1332
    %v1335 = vadd.f32 %v1325, %v1333
    %v1336 = vtanh.pop %v1335
    %1338 = vrot.lane.b32.xlu0 %v1336, 64
    %v1339 = vpop.permute.xlu0 %1338
    %v1341 = vmul.f32 %v1323, %v1339
    %v1342 = vxor.u32 %v1317, 2147483648
    %v1343 = vmul.f32 %v1342, 1.442695
    %v1344 = vpow.pop %v1343
    %v1345 = vadd.f32 %v1344, 1.0
    %v1346 = vrcp.pop %v1345
    %v1347 = vmul.f32 1.0, %v1346
    %v1348 = vtanh.pop %v1317
    %v1349 = vmul.f32 %v1347, %v1226
    %1351 = vrot.lane.b32.xlu0 %v1348, 64
    %v1352 = vpop.permute.xlu0 %1351
    %v1354 = vmul.f32 %v1347, %v1352
    %1356 = vrot.lane.b32.xlu0 %v1354, 32
    %v1357 = vpop.permute.xlu0 %1356
    %v1359 = vadd.f32 %v1349, %v1357
    %v1360 = vtanh.pop %v1359
    %1362 = vrot.lane.b32.xlu0 %v1360, 64
    %v1363 = vpop.permute.xlu0 %1362
    %v1365 = vmul.f32 %v1347, %v1363
    %1367 = vrot.lane.b32.xlu0 %v1341, 32
    %v1368 = vpop.permute.xlu0 %1367
    %1371 = vrot.lane.b32.xlu0 %v1365, 64
    %v1372 = vpop.permute.xlu0 %1371
    %v1374 = vsel %vm289, %v1368, %v1372
    %v1376 = vsel %vm443, %v1374, 0
    %1378 = vmatprep.subr.mxu0 0.0
    %1379 = vmatpush1.msra.mxu0 0.0
    %1380 = vmatprep.subr.mxu0 0.0
    %1381 = vmatpush1.msra.mxu0 0.0
    %1382 = vmatprep.subr.mxu0 0.0
    %1383 = vmatpush1.msra.mxu0 0.0
    %1384 = vmatprep.subr.mxu0 0.0
    %1385 = vmatpush1.msra.mxu0 0.0
    %1386 = vmatprep.subr.mxu0 0.0
    %1387 = vmatpush1.msra.mxu0 0.0
    %1388 = vmatprep.subr.mxu0 0.0
    %1389 = vmatpush1.msra.mxu0 0.0
    %1390 = vmatprep.subr.mxu0 0.0
    %1391 = vmatpush1.msra.mxu0 0.0
    %1392 = vmatprep.subr.mxu0 0.0
    %1393 = vmatpush1.msra.mxu0 0.0
    %1394 = vmatprep.subr.mxu0 %v442
    %1395 = vmatpush1.msra.mxu0 %v441
    %1396 = vmatprep.subr.mxu0 %v440
    %1397 = vmatpush1.msra.mxu0 %v439
    %1398 = vmatprep.subr.mxu0 %v438
    %1399 = vmatpush1.msra.mxu0 %v437
    %1400 = vmatprep.subr.mxu0 %v436
    %1401 = vmatpush1.msra.mxu0 %v435
    %1402 = vmatprep.subr.mxu0 %v434
    %1403 = vmatpush1.msra.mxu0 %v433
    %1404 = vmatprep.subr.mxu0 %v432
    %1405 = vmatpush1.msra.mxu0 %v431
    %1406 = vmatprep.subr.mxu0 %v430
    %1407 = vmatpush1.msra.mxu0 %v429
    %1408 = vmatprep.subr.mxu0 %v428
    %1409 = vmatpush1.msra.mxu0 %v427
    %1410 = vmatprep.subr.mxu0 0.0
    %1411 = vmatpush2.msra.mxu0 0.0
    %1412 = vmatprep.subr.mxu0 0.0
    %1413 = vmatpush2.msra.mxu0 0.0
    %1414 = vmatprep.subr.mxu0 0.0
    %1415 = vmatpush2.msra.mxu0 0.0
    %1416 = vmatprep.subr.mxu0 0.0
    %1417 = vmatpush2.msra.mxu0 0.0
    %1418 = vmatprep.subr.mxu0 0.0
    %1419 = vmatpush2.msra.mxu0 0.0
    %1420 = vmatprep.subr.mxu0 0.0
    %1421 = vmatpush2.msra.mxu0 0.0
    %1422 = vmatprep.subr.mxu0 0.0
    %1423 = vmatpush2.msra.mxu0 0.0
    %1424 = vmatprep.subr.mxu0 0.0
    %1425 = vmatpush2.msra.mxu0 0.0
    %1426 = vmatprep.subr.mxu0 0.0
    %1427 = vmatpush2.msra.mxu0 0.0
    %1428 = vmatprep.subr.mxu0 0.0
    %1429 = vmatpush2.msra.mxu0 0.0
    %1430 = vmatprep.subr.mxu0 0.0
    %1431 = vmatpush2.msra.mxu0 0.0
    %1432 = vmatprep.subr.mxu0 0.0
    %1433 = vmatpush2.msra.mxu0 0.0
    %1434 = vmatprep.subr.mxu0 0.0
    %1435 = vmatpush2.msra.mxu0 0.0
    %1436 = vmatprep.subr.mxu0 0.0
    %1437 = vmatpush2.msra.mxu0 0.0
    %1438 = vmatprep.subr.mxu0 0.0
    %1439 = vmatpush2.msra.mxu0 0.0
    %1440 = vmatprep.subr.mxu0 0.0
    %1441 = vmatpush2.msra.mxu0 0.0
    %1442 = vmatprep.mubr.f32.mxu0 0.0
    %1443 = vmatmul.mubr.f32.gmra.mxu0 %v1376
    %v1444 = vpop.f32.mrf.mxu0
    %v1445 = vadd.f32 0.0, %v1444
    %v1446 = vpop.f32.mrf.mxu0
    %v1447 = vadd.f32 0.0, %v1446
    %1448 = vdwg.mxu0
    %v1449 = vadd.f32 %v423, %v1445
    %v1450 = vadd.f32 %v383, %v1447
    %v1451 = vxor.u32 %v1449, 2147483648
    %v1452 = vmul.f32 %v1451, 1.442695
    %v1453 = vpow.pop %v1452
    %v1454 = vadd.f32 %v1453, 1.0
    %v1455 = vrcp.pop %v1454
    %v1456 = vmul.f32 1.0, %v1455
    %v1457 = vtanh.pop %v1449
    %v1458 = vmul.f32 %v1456, %v1335
    %1460 = vrot.lane.b32.xlu0 %v1457, 64
    %v1461 = vpop.permute.xlu0 %1460
    %v1463 = vmul.f32 %v1456, %v1461
    %1465 = vrot.lane.b32.xlu0 %v1463, 32
    %v1466 = vpop.permute.xlu0 %1465
    %v1468 = vadd.f32 %v1458, %v1466
    %v1469 = vtanh.pop %v1468
    %1471 = vrot.lane.b32.xlu0 %v1469, 64
    %v1472 = vpop.permute.xlu0 %1471
    %v1474 = vmul.f32 %v1456, %v1472
    %v1475 = vxor.u32 %v1450, 2147483648
    %v1476 = vmul.f32 %v1475, 1.442695
    %v1477 = vpow.pop %v1476
    %v1478 = vadd.f32 %v1477, 1.0
    %v1479 = vrcp.pop %v1478
    %v1480 = vmul.f32 1.0, %v1479
    %v1481 = vtanh.pop %v1450
    %v1482 = vmul.f32 %v1480, %v1359
    %1484 = vrot.lane.b32.xlu0 %v1481, 64
    %v1485 = vpop.permute.xlu0 %1484
    %v1487 = vmul.f32 %v1480, %v1485
    %1489 = vrot.lane.b32.xlu0 %v1487, 32
    %v1490 = vpop.permute.xlu0 %1489
    %v1492 = vadd.f32 %v1482, %v1490
    %v1493 = vtanh.pop %v1492
    %1495 = vrot.lane.b32.xlu0 %v1493, 64
    %v1496 = vpop.permute.xlu0 %1495
    %v1498 = vmul.f32 %v1480, %v1496
    %1500 = vrot.lane.b32.xlu0 %v1474, 32
    %v1501 = vpop.permute.xlu0 %1500
    %1504 = vrot.lane.b32.xlu0 %v1498, 64
    %v1505 = vpop.permute.xlu0 %1504
    %1508 = vrot.lane.b32.xlu0 %v1468, 32
    %v1509 = vpop.permute.xlu0 %1508
    %1512 = vrot.lane.b32.xlu0 %v1492, 64
    %v1513 = vpop.permute.xlu0 %1512
    %v1515 = vsel %vm289, %v1501, %v1505
    %v1516 = vsel %vm443, %v1515, %v1509
    %vm1517 = vcmask 785408
    %v1518 = vsel %vm1517, %v1516, %v1513
    %v1519 = vld [vmem:[%s5] sm:$0xff]
    %v1520 = vld [vmem:[%s5 + $0x8] sm:$0xff]
    %v1521 = vld [vmem:[%s5 + $0x10] sm:$0xff]
    %v1522 = vld [vmem:[%s5 + $0x18] sm:$0xff]
    %v1523 = vld [vmem:[%s5 + $0x20] sm:$0xff]
    %v1524 = vld [vmem:[%s5 + $0x28] sm:$0xff]
    %v1525 = vld [vmem:[%s5 + $0x30] sm:$0xff]
    %v1526 = vld [vmem:[%s5 + $0x38] sm:$0xff]
    %v1527 = vld [vmem:[%s5 + $0x40] sm:$0xff]
    %v1528 = vld [vmem:[%s5 + $0x48] sm:$0xff]
    %v1529 = vld [vmem:[%s5 + $0x50] sm:$0xff]
    %v1530 = vld [vmem:[%s5 + $0x58] sm:$0xff]
    %v1531 = vld [vmem:[%s5 + $0x60] sm:$0xff]
    %v1532 = vld [vmem:[%s5 + $0x68] sm:$0xff]
    %v1533 = vld [vmem:[%s5 + $0x70] sm:$0xff]
    %v1534 = vld [vmem:[%s5 + $0x78] sm:$0xff]
    %v1535 = vld [vmem:[%s6] sm:$0x1]
    %v1537 = vlaneseq
    %v1538 = vshrl.u32 %v1537, 7
    %v1539 = vsub.s32 0, %v1538
    %v1540 = vrot.slane %v1535, %v1539
    %1542 = vmatprep.subr.mxu0 0.0
    %1543 = vmatpush1.msra.mxu0 %v1534
    %1544 = vmatprep.subr.mxu0 0.0
    %1545 = vmatpush1.msra.mxu0 %v1533
    %1546 = vmatprep.subr.mxu0 0.0
    %1547 = vmatpush1.msra.mxu0 %v1532
    %1548 = vmatprep.subr.mxu0 0.0
    %1549 = vmatpush1.msra.mxu0 %v1531
    %1550 = vmatprep.subr.mxu0 0.0
    %1551 = vmatpush1.msra.mxu0 %v1530
    %1552 = vmatprep.subr.mxu0 0.0
    %1553 = vmatpush1.msra.mxu0 %v1529
    %1554 = vmatprep.subr.mxu0 0.0
    %1555 = vmatpush1.msra.mxu0 %v1528
    %1556 = vmatprep.subr.mxu0 0.0
    %1557 = vmatpush1.msra.mxu0 %v1527
    %1558 = vmatprep.subr.mxu0 0.0
    %1559 = vmatpush1.msra.mxu0 %v1526
    %1560 = vmatprep.subr.mxu0 0.0
    %1561 = vmatpush1.msra.mxu0 %v1525
    %1562 = vmatprep.subr.mxu0 0.0
    %1563 = vmatpush1.msra.mxu0 %v1524
    %1564 = vmatprep.subr.mxu0 0.0
    %1565 = vmatpush1.msra.mxu0 %v1523
    %1566 = vmatprep.subr.mxu0 0.0
    %1567 = vmatpush1.msra.mxu0 %v1522
    %1568 = vmatprep.subr.mxu0 0.0
    %1569 = vmatpush1.msra.mxu0 %v1521
    %1570 = vmatprep.subr.mxu0 0.0
    %1571 = vmatpush1.msra.mxu0 %v1520
    %1572 = vmatprep.subr.mxu0 0.0
    %1573 = vmatpush1.msra.mxu0 %v1519
    %1574 = vmatprep.subr.mxu0 0.0
    %1575 = vmatpush2.msra.mxu0 0.0
    %1576 = vmatprep.subr.mxu0 0.0
    %1577 = vmatpush2.msra.mxu0 0.0
    %1578 = vmatprep.subr.mxu0 0.0
    %1579 = vmatpush2.msra.mxu0 0.0
    %1580 = vmatprep.subr.mxu0 0.0
    %1581 = vmatpush2.msra.mxu0 0.0
    %1582 = vmatprep.subr.mxu0 0.0
    %1583 = vmatpush2.msra.mxu0 0.0
    %1584 = vmatprep.subr.mxu0 0.0
    %1585 = vmatpush2.msra.mxu0 0.0
    %1586 = vmatprep.subr.mxu0 0.0
    %1587 = vmatpush2.msra.mxu0 0.0
    %1588 = vmatprep.subr.mxu0 0.0
    %1589 = vmatpush2.msra.mxu0 0.0
    %1590 = vmatprep.subr.mxu0 0.0
    %1591 = vmatpush2.msra.mxu0 0.0
    %1592 = vmatprep.subr.mxu0 0.0
    %1593 = vmatpush2.msra.mxu0 0.0
    %1594 = vmatprep.subr.mxu0 0.0
    %1595 = vmatpush2.msra.mxu0 0.0
    %1596 = vmatprep.subr.mxu0 0.0
    %1597 = vmatpush2.msra.mxu0 0.0
    %1598 = vmatprep.subr.mxu0 0.0
    %1599 = vmatpush2.msra.mxu0 0.0
    %1600 = vmatprep.subr.mxu0 0.0
    %1601 = vmatpush2.msra.mxu0 0.0
    %1602 = vmatprep.subr.mxu0 0.0
    %1603 = vmatpush2.msra.mxu0 0.0
    %1604 = vmatprep.subr.mxu0 0.0
    %1605 = vmatpush2.msra.mxu0 0.0
    %1606 = vmatprep.mubr.f32.mxu0 0.0
    %1607 = vmatmul.mubr.f32.gmra.mxu0 %v1518
    %v1608 = vpop.f32.mrf.mxu0
    %v1609 = vadd.f32 %v1540, %v1608
    %v1610 = vpop.f32.mrf.mxu0
    %1611 = vdwg.mxu0
    %v1612 = vld [vmem:[%s7] sm:$0xff]
    %v1613 = vld [vmem:[%s7 + $0x8] sm:$0xff]
    %v1614 = vld [vmem:[%s7 + $0x10] sm:$0xff]
    %v1615 = vld [vmem:[%s7 + $0x18] sm:$0xff]
    %1616 = vmatprep.subr.mxu0 0.0
    %1617 = vmatpush1.msra.mxu0 0.0
    %1618 = vmatprep.subr.mxu0 0.0
    %1619 = vmatpush1.msra.mxu0 0.0
    %1620 = vmatprep.subr.mxu0 0.0
    %1621 = vmatpush1.msra.mxu0 0.0
    %1622 = vmatprep.subr.mxu0 0.0
    %1623 = vmatpush1.msra.mxu0 0.0
    %1624 = vmatprep.subr.mxu0 0.0
    %1625 = vmatpush1.msra.mxu0 0.0
    %1626 = vmatprep.subr.mxu0 0.0
    %1627 = vmatpush1.msra.mxu0 0.0
    %1628 = vmatprep.subr.mxu0 0.0
    %1629 = vmatpush1.msra.mxu0 0.0
    %1630 = vmatprep.subr.mxu0 0.0
    %1631 = vmatpush1.msra.mxu0 0.0
    %1632 = vmatprep.subr.mxu0 0.0
    %1633 = vmatpush1.msra.mxu0 0.0
    %1634 = vmatprep.subr.mxu0 0.0
    %1635 = vmatpush1.msra.mxu0 0.0
    %1636 = vmatprep.subr.mxu0 0.0
    %1637 = vmatpush1.msra.mxu0 0.0
    %1638 = vmatprep.subr.mxu0 0.0
    %1639 = vmatpush1.msra.mxu0 0.0
    %1640 = vmatprep.subr.mxu0 0.0
    %1641 = vmatpush1.msra.mxu0 %v1615
    %1642 = vmatprep.subr.mxu0 0.0
    %1643 = vmatpush1.msra.mxu0 %v1614
    %1644 = vmatprep.subr.mxu0 0.0
    %1645 = vmatpush1.msra.mxu0 %v1613
    %1646 = vmatprep.subr.mxu0 0.0
    %1647 = vmatpush1.msra.mxu0 %v1612
    %1648 = vmatprep.subr.mxu0 0.0
    %1649 = vmatpush2.msra.mxu0 0.0
    %1650 = vmatprep.subr.mxu0 0.0
    %1651 = vmatpush2.msra.mxu0 0.0
    %1652 = vmatprep.subr.mxu0 0.0
    %1653 = vmatpush2.msra.mxu0 0.0
    %1654 = vmatprep.subr.mxu0 0.0
    %1655 = vmatpush2.msra.mxu0 0.0
    %1656 = vmatprep.subr.mxu0 0.0
    %1657 = vmatpush2.msra.mxu0 0.0
    %1658 = vmatprep.subr.mxu0 0.0
    %1659 = vmatpush2.msra.mxu0 0.0
    %1660 = vmatprep.subr.mxu0 0.0
    %1661 = vmatpush2.msra.mxu0 0.0
    %1662 = vmatprep.subr.mxu0 0.0
    %1663 = vmatpush2.msra.mxu0 0.0
    %1664 = vmatprep.subr.mxu0 0.0
    %1665 = vmatpush2.msra.mxu0 0.0
    %1666 = vmatprep.subr.mxu0 0.0
    %1667 = vmatpush2.msra.mxu0 0.0
    %1668 = vmatprep.subr.mxu0 0.0
    %1669 = vmatpush2.msra.mxu0 0.0
    %1670 = vmatprep.subr.mxu0 0.0
    %1671 = vmatpush2.msra.mxu0 0.0
    %1672 = vmatprep.subr.mxu0 0.0
    %1673 = vmatpush2.msra.mxu0 0.0
    %1674 = vmatprep.subr.mxu0 0.0
    %1675 = vmatpush2.msra.mxu0 0.0
    %1676 = vmatprep.subr.mxu0 0.0
    %1677 = vmatpush2.msra.mxu0 0.0
    %1678 = vmatprep.subr.mxu0 0.0
    %1679 = vmatpush2.msra.mxu0 0.0
    %1680 = vmatprep.mubr.f32.mxu0 0.0
    %1681 = vmatmul.mubr.f32.gmra.mxu0 %v291
    %v1682 = vpop.f32.mrf.mxu0
    %v1683 = vadd.f32 0.0, %v1682
    %v1684 = vpop.f32.mrf.mxu0
    %1685 = vmatprep.mubr.f32.mxu0 0.0
    %1686 = vmatmul.mubr.f32.gmra.mxu0 %v294
    %v1687 = vpop.f32.mrf.mxu0
    %v1688 = vadd.f32 0.0, %v1687
    %v1689 = vpop.f32.mrf.mxu0
    %1690 = vmatprep.mubr.f32.mxu0 0.0
    %1691 = vmatmul.mubr.f32.gmra.mxu0 %v297
    %v1692 = vpop.f32.mrf.mxu0
    %v1693 = vadd.f32 0.0, %v1692
    %v1694 = vpop.f32.mrf.mxu0
    %1695 = vmatprep.mubr.f32.mxu0 0.0
    %1696 = vmatmul.mubr.f32.gmra.mxu0 %v300
    %v1697 = vpop.f32.mrf.mxu0
    %v1698 = vadd.f32 0.0, %v1697
    %v1699 = vpop.f32.mrf.mxu0
    %1700 = vmatprep.mubr.f32.mxu0 0.0
    %1701 = vmatmul.mubr.f32.gmra.mxu0 %v303
    %v1702 = vpop.f32.mrf.mxu0
    %v1703 = vadd.f32 0.0, %v1702
    %v1704 = vpop.f32.mrf.mxu0
    %1705 = vmatprep.mubr.f32.mxu0 0.0
    %1706 = vmatmul.mubr.f32.gmra.mxu0 %v306
    %v1707 = vpop.f32.mrf.mxu0
    %v1708 = vadd.f32 0.0, %v1707
    %v1709 = vpop.f32.mrf.mxu0
    %1710 = vmatprep.mubr.f32.mxu0 0.0
    %1711 = vmatmul.mubr.f32.gmra.mxu0 %v309
    %v1712 = vpop.f32.mrf.mxu0
    %v1713 = vadd.f32 0.0, %v1712
    %v1714 = vpop.f32.mrf.mxu0
    %1715 = vmatprep.mubr.f32.mxu0 0.0
    %1716 = vmatmul.mubr.f32.gmra.mxu0 %v312
    %v1717 = vpop.f32.mrf.mxu0
    %v1718 = vadd.f32 0.0, %v1717
    %v1719 = vpop.f32.mrf.mxu0
    %1720 = vdwg.mxu0
    %v1721 = vld [vmem:[%s8] sm:$0xff]
    %v1722 = vld [vmem:[%s8 + $0x8] sm:$0xff]
    %v1723 = vld [vmem:[%s8 + $0x10] sm:$0xff]
    %v1724 = vld [vmem:[%s8 + $0x18] sm:$0xff]
    %v1725 = vld [vmem:[%s10] sm:$0x1]
    %v1727 = vlaneseq
    %v1728 = vshrl.u32 %v1727, 7
    %v1729 = vsub.s32 0, %v1728
    %v1730 = vrot.slane %v1725, %v1729
    %1733 = vrot.lane.b32.xlu0 %v1609, 96
    %v1734 = vpop.permute.xlu0 %1733
    %v1735 = vsel %vm289, %v1734, 0
    %1737 = vmatprep.subr.mxu0 0.0
    %1738 = vmatpush1.msra.mxu0 0.0
    %1739 = vmatprep.subr.mxu0 0.0
    %1740 = vmatpush1.msra.mxu0 0.0
    %1741 = vmatprep.subr.mxu0 0.0
    %1742 = vmatpush1.msra.mxu0 0.0
    %1743 = vmatprep.subr.mxu0 0.0
    %1744 = vmatpush1.msra.mxu0 0.0
    %1745 = vmatprep.subr.mxu0 0.0
    %1746 = vmatpush1.msra.mxu0 0.0
    %1747 = vmatprep.subr.mxu0 0.0
    %1748 = vmatpush1.msra.mxu0 0.0
    %1749 = vmatprep.subr.mxu0 0.0
    %1750 = vmatpush1.msra.mxu0 0.0
    %1751 = vmatprep.subr.mxu0 0.0
    %1752 = vmatpush1.msra.mxu0 0.0
    %1753 = vmatprep.subr.mxu0 0.0
    %1754 = vmatpush1.msra.mxu0 0.0
    %1755 = vmatprep.subr.mxu0 0.0
    %1756 = vmatpush1.msra.mxu0 0.0
    %1757 = vmatprep.subr.mxu0 0.0
    %1758 = vmatpush1.msra.mxu0 0.0
    %1759 = vmatprep.subr.mxu0 0.0
    %1760 = vmatpush1.msra.mxu0 0.0
    %1761 = vmatprep.subr.mxu0 0.0
    %1762 = vmatpush1.msra.mxu0 %v1724
    %1763 = vmatprep.subr.mxu0 0.0
    %1764 = vmatpush1.msra.mxu0 %v1723
    %1765 = vmatprep.subr.mxu0 0.0
    %1766 = vmatpush1.msra.mxu0 %v1722
    %1767 = vmatprep.subr.mxu0 0.0
    %1768 = vmatpush1.msra.mxu0 %v1721
    %1769 = vmatprep.subr.mxu0 0.0
    %1770 = vmatpush2.msra.mxu0 0.0
    %1771 = vmatprep.subr.mxu0 0.0
    %1772 = vmatpush2.msra.mxu0 0.0
    %1773 = vmatprep.subr.mxu0 0.0
    %1774 = vmatpush2.msra.mxu0 0.0
    %1775 = vmatprep.subr.mxu0 0.0
    %1776 = vmatpush2.msra.mxu0 0.0
    %1777 = vmatprep.subr.mxu0 0.0
    %1778 = vmatpush2.msra.mxu0 0.0
    %1779 = vmatprep.subr.mxu0 0.0
    %1780 = vmatpush2.msra.mxu0 0.0
    %1781 = vmatprep.subr.mxu0 0.0
    %1782 = vmatpush2.msra.mxu0 0.0
    %1783 = vmatprep.subr.mxu0 0.0
    %1784 = vmatpush2.msra.mxu0 0.0
    %1785 = vmatprep.subr.mxu0 0.0
    %1786 = vmatpush2.msra.mxu0 0.0
    %1787 = vmatprep.subr.mxu0 0.0
    %1788 = vmatpush2.msra.mxu0 0.0
    %1789 = vmatprep.subr.mxu0 0.0
    %1790 = vmatpush2.msra.mxu0 0.0
    %1791 = vmatprep.subr.mxu0 0.0
    %1792 = vmatpush2.msra.mxu0 0.0
    %1793 = vmatprep.subr.mxu0 0.0
    %1794 = vmatpush2.msra.mxu0 0.0
    %1795 = vmatprep.subr.mxu0 0.0
    %1796 = vmatpush2.msra.mxu0 0.0
    %1797 = vmatprep.subr.mxu0 0.0
    %1798 = vmatpush2.msra.mxu0 0.0
    %1799 = vmatprep.subr.mxu0 0.0
    %1800 = vmatpush2.msra.mxu0 0.0
    %1801 = vmatprep.mubr.f32.mxu0 0.0
    %1802 = vmatmul.mubr.f32.gmra.mxu0 %v1735
    %v1803 = vpop.f32.mrf.mxu0
    %v1804 = vadd.f32 %v1730, %v1803
    %v1805 = vpop.f32.mrf.mxu0
    %1806 = vdwg.mxu0
    %v1807 = vld [vmem:[%s9] sm:$0xff]
    %v1808 = vld [vmem:[%s9 + $0x8] sm:$0xff]
    %v1809 = vld [vmem:[%s9 + $0x10] sm:$0xff]
    %v1810 = vld [vmem:[%s9 + $0x18] sm:$0xff]
    %1811 = vmatprep.subr.mxu0 0.0
    %1812 = vmatpush1.msra.mxu0 0.0
    %1813 = vmatprep.subr.mxu0 0.0
    %1814 = vmatpush1.msra.mxu0 0.0
    %1815 = vmatprep.subr.mxu0 0.0
    %1816 = vmatpush1.msra.mxu0 0.0
    %1817 = vmatprep.subr.mxu0 0.0
    %1818 = vmatpush1.msra.mxu0 0.0
    %1819 = vmatprep.subr.mxu0 0.0
    %1820 = vmatpush1.msra.mxu0 0.0
    %1821 = vmatprep.subr.mxu0 0.0
    %1822 = vmatpush1.msra.mxu0 0.0
    %1823 = vmatprep.subr.mxu0 0.0
    %1824 = vmatpush1.msra.mxu0 0.0
    %1825 = vmatprep.subr.mxu0 0.0
    %1826 = vmatpush1.msra.mxu0 0.0
    %1827 = vmatprep.subr.mxu0 0.0
    %1828 = vmatpush1.msra.mxu0 0.0
    %1829 = vmatprep.subr.mxu0 0.0
    %1830 = vmatpush1.msra.mxu0 0.0
    %1831 = vmatprep.subr.mxu0 0.0
    %1832 = vmatpush1.msra.mxu0 0.0
    %1833 = vmatprep.subr.mxu0 0.0
    %1834 = vmatpush1.msra.mxu0 0.0
    %1835 = vmatprep.subr.mxu0 0.0
    %1836 = vmatpush1.msra.mxu0 %v1810
    %1837 = vmatprep.subr.mxu0 0.0
    %1838 = vmatpush1.msra.mxu0 %v1809
    %1839 = vmatprep.subr.mxu0 0.0
    %1840 = vmatpush1.msra.mxu0 %v1808
    %1841 = vmatprep.subr.mxu0 0.0
    %1842 = vmatpush1.msra.mxu0 %v1807
    %1843 = vmatprep.subr.mxu0 0.0
    %1844 = vmatpush2.msra.mxu0 0.0
    %1845 = vmatprep.subr.mxu0 0.0
    %1846 = vmatpush2.msra.mxu0 0.0
    %1847 = vmatprep.subr.mxu0 0.0
    %1848 = vmatpush2.msra.mxu0 0.0
    %1849 = vmatprep.subr.mxu0 0.0
    %1850 = vmatpush2.msra.mxu0 0.0
    %1851 = vmatprep.subr.mxu0 0.0
    %1852 = vmatpush2.msra.mxu0 0.0
    %1853 = vmatprep.subr.mxu0 0.0
    %1854 = vmatpush2.msra.mxu0 0.0
    %1855 = vmatprep.subr.mxu0 0.0
    %1856 = vmatpush2.msra.mxu0 0.0
    %1857 = vmatprep.subr.mxu0 0.0
    %1858 = vmatpush2.msra.mxu0 0.0
    %1859 = vmatprep.subr.mxu0 0.0
    %1860 = vmatpush2.msra.mxu0 0.0
    %1861 = vmatprep.subr.mxu0 0.0
    %1862 = vmatpush2.msra.mxu0 0.0
    %1863 = vmatprep.subr.mxu0 0.0
    %1864 = vmatpush2.msra.mxu0 0.0
    %1865 = vmatprep.subr.mxu0 0.0
    %1866 = vmatpush2.msra.mxu0 0.0
    %1867 = vmatprep.subr.mxu0 0.0
    %1868 = vmatpush2.msra.mxu0 0.0
    %1869 = vmatprep.subr.mxu0 0.0
    %1870 = vmatpush2.msra.mxu0 0.0
    %1871 = vmatprep.subr.mxu0 0.0
    %1872 = vmatpush2.msra.mxu0 0.0
    %1873 = vmatprep.subr.mxu0 0.0
    %1874 = vmatpush2.msra.mxu0 0.0
    %1875 = vmatprep.mubr.f32.mxu0 0.0
    %1876 = vmatmul.mubr.f32.gmra.mxu0 %v1735
    %v1877 = vpop.f32.mrf.mxu0
    %v1878 = vadd.f32 0.0, %v1877
    %v1879 = vpop.f32.mrf.mxu0
    %1880 = vdwg.mxu0
    %v1881 = vadd.f32 %v1683, %v1878
    %v1882 = vadd.f32 %v1881, %v1804
    %v1883 = vxor.u32 %v1882, 2147483648
    %v1884 = vmul.f32 %v1883, 1.442695
    %v1885 = vpow.pop %v1884
    %v1886 = vadd.f32 %v1885, 1.0
    %v1887 = vrcp.pop %v1886
    %v1888 = vmul.f32 1.0, %v1887
    %v1889 = vtanh.pop %v1882
    %v1891 = vmul.f32 %v1888, %v1734
    %1893 = vrot.lane.b32.xlu0 %v1889, 64
    %v1894 = vpop.permute.xlu0 %1893
    %v1896 = vmul.f32 %v1888, %v1894
    %1898 = vrot.lane.b32.xlu0 %v1896, 32
    %v1899 = vpop.permute.xlu0 %1898
    %v1901 = vadd.f32 %v1891, %v1899
    %v1902 = vtanh.pop %v1901
    %1904 = vrot.lane.b32.xlu0 %v1902, 64
    %v1905 = vpop.permute.xlu0 %1904
    %v1907 = vmul.f32 %v1888, %v1905
    %1909 = vrot.lane.b32.xlu0 %v1907, 32
    %v1910 = vpop.permute.xlu0 %1909
    %v1911 = vsel %vm289, %v1910, 0
    %1913 = vmatprep.subr.mxu0 0.0
    %1914 = vmatpush1.msra.mxu0 0.0
    %1915 = vmatprep.subr.mxu0 0.0
    %1916 = vmatpush1.msra.mxu0 0.0
    %1917 = vmatprep.subr.mxu0 0.0
    %1918 = vmatpush1.msra.mxu0 0.0
    %1919 = vmatprep.subr.mxu0 0.0
    %1920 = vmatpush1.msra.mxu0 0.0
    %1921 = vmatprep.subr.mxu0 0.0
    %1922 = vmatpush1.msra.mxu0 0.0
    %1923 = vmatprep.subr.mxu0 0.0
    %1924 = vmatpush1.msra.mxu0 0.0
    %1925 = vmatprep.subr.mxu0 0.0
    %1926 = vmatpush1.msra.mxu0 0.0
    %1927 = vmatprep.subr.mxu0 0.0
    %1928 = vmatpush1.msra.mxu0 0.0
    %1929 = vmatprep.subr.mxu0 0.0
    %1930 = vmatpush1.msra.mxu0 0.0
    %1931 = vmatprep.subr.mxu0 0.0
    %1932 = vmatpush1.msra.mxu0 0.0
    %1933 = vmatprep.subr.mxu0 0.0
    %1934 = vmatpush1.msra.mxu0 0.0
    %1935 = vmatprep.subr.mxu0 0.0
    %1936 = vmatpush1.msra.mxu0 0.0
    %1937 = vmatprep.subr.mxu0 0.0
    %1938 = vmatpush1.msra.mxu0 %v1810
    %1939 = vmatprep.subr.mxu0 0.0
    %1940 = vmatpush1.msra.mxu0 %v1809
    %1941 = vmatprep.subr.mxu0 0.0
    %1942 = vmatpush1.msra.mxu0 %v1808
    %1943 = vmatprep.subr.mxu0 0.0
    %1944 = vmatpush1.msra.mxu0 %v1807
    %1945 = vmatprep.subr.mxu0 0.0
    %1946 = vmatpush2.msra.mxu0 0.0
    %1947 = vmatprep.subr.mxu0 0.0
    %1948 = vmatpush2.msra.mxu0 0.0
    %1949 = vmatprep.subr.mxu0 0.0
    %1950 = vmatpush2.msra.mxu0 0.0
    %1951 = vmatprep.subr.mxu0 0.0
    %1952 = vmatpush2.msra.mxu0 0.0
    %1953 = vmatprep.subr.mxu0 0.0
    %1954 = vmatpush2.msra.mxu0 0.0
    %1955 = vmatprep.subr.mxu0 0.0
    %1956 = vmatpush2.msra.mxu0 0.0
    %1957 = vmatprep.subr.mxu0 0.0
    %1958 = vmatpush2.msra.mxu0 0.0
    %1959 = vmatprep.subr.mxu0 0.0
    %1960 = vmatpush2.msra.mxu0 0.0
    %1961 = vmatprep.subr.mxu0 0.0
    %1962 = vmatpush2.msra.mxu0 0.0
    %1963 = vmatprep.subr.mxu0 0.0
    %1964 = vmatpush2.msra.mxu0 0.0
    %1965 = vmatprep.subr.mxu0 0.0
    %1966 = vmatpush2.msra.mxu0 0.0
    %1967 = vmatprep.subr.mxu0 0.0
    %1968 = vmatpush2.msra.mxu0 0.0
    %1969 = vmatprep.subr.mxu0 0.0
    %1970 = vmatpush2.msra.mxu0 0.0
    %1971 = vmatprep.subr.mxu0 0.0
    %1972 = vmatpush2.msra.mxu0 0.0
    %1973 = vmatprep.subr.mxu0 0.0
    %1974 = vmatpush2.msra.mxu0 0.0
    %1975 = vmatprep.subr.mxu0 0.0
    %1976 = vmatpush2.msra.mxu0 0.0
    %1977 = vmatprep.mubr.f32.mxu0 0.0
    %1978 = vmatmul.mubr.f32.gmra.mxu0 %v1911
    %v1979 = vpop.f32.mrf.mxu0
    %v1980 = vadd.f32 0.0, %v1979
    %v1981 = vpop.f32.mrf.mxu0
    %1982 = vdwg.mxu0
    %v1983 = vadd.f32 %v1688, %v1980
    %v1984 = vadd.f32 %v1983, %v1804
    %v1985 = vxor.u32 %v1984, 2147483648
    %v1986 = vmul.f32 %v1985, 1.442695
    %v1987 = vpow.pop %v1986
    %v1988 = vadd.f32 %v1987, 1.0
    %v1989 = vrcp.pop %v1988
    %v1990 = vmul.f32 1.0, %v1989
    %v1991 = vtanh.pop %v1984
    %v1992 = vmul.f32 %v1990, %v1901
    %1994 = vrot.lane.b32.xlu0 %v1991, 64
    %v1995 = vpop.permute.xlu0 %1994
    %v1997 = vmul.f32 %v1990, %v1995
    %1999 = vrot.lane.b32.xlu0 %v1997, 32
    %v2000 = vpop.permute.xlu0 %1999
    %v2002 = vadd.f32 %v1992, %v2000
    %v2003 = vtanh.pop %v2002
    %2005 = vrot.lane.b32.xlu0 %v2003, 64
    %v2006 = vpop.permute.xlu0 %2005
    %v2008 = vmul.f32 %v1990, %v2006
    %2010 = vrot.lane.b32.xlu0 %v2008, 32
    %v2011 = vpop.permute.xlu0 %2010
    %v2012 = vsel %vm289, %v2011, 0
    %2014 = vmatprep.subr.mxu0 0.0
    %2015 = vmatpush1.msra.mxu0 0.0
    %2016 = vmatprep.subr.mxu0 0.0
    %2017 = vmatpush1.msra.mxu0 0.0
    %2018 = vmatprep.subr.mxu0 0.0
    %2019 = vmatpush1.msra.mxu0 0.0
    %2020 = vmatprep.subr.mxu0 0.0
    %2021 = vmatpush1.msra.mxu0 0.0
    %2022 = vmatprep.subr.mxu0 0.0
    %2023 = vmatpush1.msra.mxu0 0.0
    %2024 = vmatprep.subr.mxu0 0.0
    %2025 = vmatpush1.msra.mxu0 0.0
    %2026 = vmatprep.subr.mxu0 0.0
    %2027 = vmatpush1.msra.mxu0 0.0
    %2028 = vmatprep.subr.mxu0 0.0
    %2029 = vmatpush1.msra.mxu0 0.0
    %2030 = vmatprep.subr.mxu0 0.0
    %2031 = vmatpush1.msra.mxu0 0.0
    %2032 = vmatprep.subr.mxu0 0.0
    %2033 = vmatpush1.msra.mxu0 0.0
    %2034 = vmatprep.subr.mxu0 0.0
    %2035 = vmatpush1.msra.mxu0 0.0
    %2036 = vmatprep.subr.mxu0 0.0
    %2037 = vmatpush1.msra.mxu0 0.0
    %2038 = vmatprep.subr.mxu0 0.0
    %2039 = vmatpush1.msra.mxu0 %v1810
    %2040 = vmatprep.subr.mxu0 0.0
    %2041 = vmatpush1.msra.mxu0 %v1809
    %2042 = vmatprep.subr.mxu0 0.0
    %2043 = vmatpush1.msra.mxu0 %v1808
    %2044 = vmatprep.subr.mxu0 0.0
    %2045 = vmatpush1.msra.mxu0 %v1807
    %2046 = vmatprep.subr.mxu0 0.0
    %2047 = vmatpush2.msra.mxu0 0.0
    %2048 = vmatprep.subr.mxu0 0.0
    %2049 = vmatpush2.msra.mxu0 0.0
    %2050 = vmatprep.subr.mxu0 0.0
    %2051 = vmatpush2.msra.mxu0 0.0
    %2052 = vmatprep.subr.mxu0 0.0
    %2053 = vmatpush2.msra.mxu0 0.0
    %2054 = vmatprep.subr.mxu0 0.0
    %2055 = vmatpush2.msra.mxu0 0.0
    %2056 = vmatprep.subr.mxu0 0.0
    %2057 = vmatpush2.msra.mxu0 0.0
    %2058 = vmatprep.subr.mxu0 0.0
    %2059 = vmatpush2.msra.mxu0 0.0
    %2060 = vmatprep.subr.mxu0 0.0
    %2061 = vmatpush2.msra.mxu0 0.0
    %2062 = vmatprep.subr.mxu0 0.0
    %2063 = vmatpush2.msra.mxu0 0.0
    %2064 = vmatprep.subr.mxu0 0.0
    %2065 = vmatpush2.msra.mxu0 0.0
    %2066 = vmatprep.subr.mxu0 0.0
    %2067 = vmatpush2.msra.mxu0 0.0
    %2068 = vmatprep.subr.mxu0 0.0
    %2069 = vmatpush2.msra.mxu0 0.0
    %2070 = vmatprep.subr.mxu0 0.0
    %2071 = vmatpush2.msra.mxu0 0.0
    %2072 = vmatprep.subr.mxu0 0.0
    %2073 = vmatpush2.msra.mxu0 0.0
    %2074 = vmatprep.subr.mxu0 0.0
    %2075 = vmatpush2.msra.mxu0 0.0
    %2076 = vmatprep.subr.mxu0 0.0
    %2077 = vmatpush2.msra.mxu0 0.0
    %2078 = vmatprep.mubr.f32.mxu0 0.0
    %2079 = vmatmul.mubr.f32.gmra.mxu0 %v2012
    %v2080 = vpop.f32.mrf.mxu0
    %v2081 = vadd.f32 0.0, %v2080
    %v2082 = vpop.f32.mrf.mxu0
    %2083 = vdwg.mxu0
    %v2084 = vadd.f32 %v1693, %v2081
    %v2085 = vadd.f32 %v2084, %v1804
    %v2086 = vxor.u32 %v2085, 2147483648
    %v2087 = vmul.f32 %v2086, 1.442695
    %v2088 = vpow.pop %v2087
    %v2089 = vadd.f32 %v2088, 1.0
    %v2090 = vrcp.pop %v2089
    %v2091 = vmul.f32 1.0, %v2090
    %v2092 = vtanh.pop %v2085
    %v2093 = vmul.f32 %v2091, %v2002
    %2095 = vrot.lane.b32.xlu0 %v2092, 64
    %v2096 = vpop.permute.xlu0 %2095
    %v2098 = vmul.f32 %v2091, %v2096
    %2100 = vrot.lane.b32.xlu0 %v2098, 32
    %v2101 = vpop.permute.xlu0 %2100
    %v2103 = vadd.f32 %v2093, %v2101
    %v2104 = vtanh.pop %v2103
    %2106 = vrot.lane.b32.xlu0 %v2104, 64
    %v2107 = vpop.permute.xlu0 %2106
    %v2109 = vmul.f32 %v2091, %v2107
    %2111 = vrot.lane.b32.xlu0 %v2109, 32
    %v2112 = vpop.permute.xlu0 %2111
    %v2113 = vsel %vm289, %v2112, 0
    %2115 = vmatprep.subr.mxu0 0.0
    %2116 = vmatpush1.msra.mxu0 0.0
    %2117 = vmatprep.subr.mxu0 0.0
    %2118 = vmatpush1.msra.mxu0 0.0
    %2119 = vmatprep.subr.mxu0 0.0
    %2120 = vmatpush1.msra.mxu0 0.0
    %2121 = vmatprep.subr.mxu0 0.0
    %2122 = vmatpush1.msra.mxu0 0.0
    %2123 = vmatprep.subr.mxu0 0.0
    %2124 = vmatpush1.msra.mxu0 0.0
    %2125 = vmatprep.subr.mxu0 0.0
    %2126 = vmatpush1.msra.mxu0 0.0
    %2127 = vmatprep.subr.mxu0 0.0
    %2128 = vmatpush1.msra.mxu0 0.0
    %2129 = vmatprep.subr.mxu0 0.0
    %2130 = vmatpush1.msra.mxu0 0.0
    %2131 = vmatprep.subr.mxu0 0.0
    %2132 = vmatpush1.msra.mxu0 0.0
    %2133 = vmatprep.subr.mxu0 0.0
    %2134 = vmatpush1.msra.mxu0 0.0
    %2135 = vmatprep.subr.mxu0 0.0
    %2136 = vmatpush1.msra.mxu0 0.0
    %2137 = vmatprep.subr.mxu0 0.0
    %2138 = vmatpush1.msra.mxu0 0.0
    %2139 = vmatprep.subr.mxu0 0.0
    %2140 = vmatpush1.msra.mxu0 %v1810
    %2141 = vmatprep.subr.mxu0 0.0
    %2142 = vmatpush1.msra.mxu0 %v1809
    %2143 = vmatprep.subr.mxu0 0.0
    %2144 = vmatpush1.msra.mxu0 %v1808
    %2145 = vmatprep.subr.mxu0 0.0
    %2146 = vmatpush1.msra.mxu0 %v1807
    %2147 = vmatprep.subr.mxu0 0.0
    %2148 = vmatpush2.msra.mxu0 0.0
    %2149 = vmatprep.subr.mxu0 0.0
    %2150 = vmatpush2.msra.mxu0 0.0
    %2151 = vmatprep.subr.mxu0 0.0
    %2152 = vmatpush2.msra.mxu0 0.0
    %2153 = vmatprep.subr.mxu0 0.0
    %2154 = vmatpush2.msra.mxu0 0.0
    %2155 = vmatprep.subr.mxu0 0.0
    %2156 = vmatpush2.msra.mxu0 0.0
    %2157 = vmatprep.subr.mxu0 0.0
    %2158 = vmatpush2.msra.mxu0 0.0
    %2159 = vmatprep.subr.mxu0 0.0
    %2160 = vmatpush2.msra.mxu0 0.0
    %2161 = vmatprep.subr.mxu0 0.0
    %2162 = vmatpush2.msra.mxu0 0.0
    %2163 = vmatprep.subr.mxu0 0.0
    %2164 = vmatpush2.msra.mxu0 0.0
    %2165 = vmatprep.subr.mxu0 0.0
    %2166 = vmatpush2.msra.mxu0 0.0
    %2167 = vmatprep.subr.mxu0 0.0
    %2168 = vmatpush2.msra.mxu0 0.0
    %2169 = vmatprep.subr.mxu0 0.0
    %2170 = vmatpush2.msra.mxu0 0.0
    %2171 = vmatprep.subr.mxu0 0.0
    %2172 = vmatpush2.msra.mxu0 0.0
    %2173 = vmatprep.subr.mxu0 0.0
    %2174 = vmatpush2.msra.mxu0 0.0
    %2175 = vmatprep.subr.mxu0 0.0
    %2176 = vmatpush2.msra.mxu0 0.0
    %2177 = vmatprep.subr.mxu0 0.0
    %2178 = vmatpush2.msra.mxu0 0.0
    %2179 = vmatprep.mubr.f32.mxu0 0.0
    %2180 = vmatmul.mubr.f32.gmra.mxu0 %v2113
    %v2181 = vpop.f32.mrf.mxu0
    %v2182 = vadd.f32 0.0, %v2181
    %v2183 = vpop.f32.mrf.mxu0
    %2184 = vdwg.mxu0
    %v2185 = vadd.f32 %v1698, %v2182
    %v2186 = vadd.f32 %v2185, %v1804
    %v2187 = vxor.u32 %v2186, 2147483648
    %v2188 = vmul.f32 %v2187, 1.442695
    %v2189 = vpow.pop %v2188
    %v2190 = vadd.f32 %v2189, 1.0
    %v2191 = vrcp.pop %v2190
    %v2192 = vmul.f32 1.0, %v2191
    %v2193 = vtanh.pop %v2186
    %v2194 = vmul.f32 %v2192, %v2103
    %2196 = vrot.lane.b32.xlu0 %v2193, 64
    %v2197 = vpop.permute.xlu0 %2196
    %v2199 = vmul.f32 %v2192, %v2197
    %2201 = vrot.lane.b32.xlu0 %v2199, 32
    %v2202 = vpop.permute.xlu0 %2201
    %v2204 = vadd.f32 %v2194, %v2202
    %v2205 = vtanh.pop %v2204
    %2207 = vrot.lane.b32.xlu0 %v2205, 64
    %v2208 = vpop.permute.xlu0 %2207
    %v2210 = vmul.f32 %v2192, %v2208
    %2212 = vrot.lane.b32.xlu0 %v2210, 32
    %v2213 = vpop.permute.xlu0 %2212
    %v2214 = vsel %vm289, %v2213, 0
    %2216 = vmatprep.subr.mxu0 0.0
    %2217 = vmatpush1.msra.mxu0 0.0
    %2218 = vmatprep.subr.mxu0 0.0
    %2219 = vmatpush1.msra.mxu0 0.0
    %2220 = vmatprep.subr.mxu0 0.0
    %2221 = vmatpush1.msra.mxu0 0.0
    %2222 = vmatprep.subr.mxu0 0.0
    %2223 = vmatpush1.msra.mxu0 0.0
    %2224 = vmatprep.subr.mxu0 0.0
    %2225 = vmatpush1.msra.mxu0 0.0
    %2226 = vmatprep.subr.mxu0 0.0
    %2227 = vmatpush1.msra.mxu0 0.0
    %2228 = vmatprep.subr.mxu0 0.0
    %2229 = vmatpush1.msra.mxu0 0.0
    %2230 = vmatprep.subr.mxu0 0.0
    %2231 = vmatpush1.msra.mxu0 0.0
    %2232 = vmatprep.subr.mxu0 0.0
    %2233 = vmatpush1.msra.mxu0 0.0
    %2234 = vmatprep.subr.mxu0 0.0
    %2235 = vmatpush1.msra.mxu0 0.0
    %2236 = vmatprep.subr.mxu0 0.0
    %2237 = vmatpush1.msra.mxu0 0.0
    %2238 = vmatprep.subr.mxu0 0.0
    %2239 = vmatpush1.msra.mxu0 0.0
    %2240 = vmatprep.subr.mxu0 0.0
    %2241 = vmatpush1.msra.mxu0 %v1810
    %2242 = vmatprep.subr.mxu0 0.0
    %2243 = vmatpush1.msra.mxu0 %v1809
    %2244 = vmatprep.subr.mxu0 0.0
    %2245 = vmatpush1.msra.mxu0 %v1808
    %2246 = vmatprep.subr.mxu0 0.0
    %2247 = vmatpush1.msra.mxu0 %v1807
    %2248 = vmatprep.subr.mxu0 0.0
    %2249 = vmatpush2.msra.mxu0 0.0
    %2250 = vmatprep.subr.mxu0 0.0
    %2251 = vmatpush2.msra.mxu0 0.0
    %2252 = vmatprep.subr.mxu0 0.0
    %2253 = vmatpush2.msra.mxu0 0.0
    %2254 = vmatprep.subr.mxu0 0.0
    %2255 = vmatpush2.msra.mxu0 0.0
    %2256 = vmatprep.subr.mxu0 0.0
    %2257 = vmatpush2.msra.mxu0 0.0
    %2258 = vmatprep.subr.mxu0 0.0
    %2259 = vmatpush2.msra.mxu0 0.0
    %2260 = vmatprep.subr.mxu0 0.0
    %2261 = vmatpush2.msra.mxu0 0.0
    %2262 = vmatprep.subr.mxu0 0.0
    %2263 = vmatpush2.msra.mxu0 0.0
    %2264 = vmatprep.subr.mxu0 0.0
    %2265 = vmatpush2.msra.mxu0 0.0
    %2266 = vmatprep.subr.mxu0 0.0
    %2267 = vmatpush2.msra.mxu0 0.0
    %2268 = vmatprep.subr.mxu0 0.0
    %2269 = vmatpush2.msra.mxu0 0.0
    %2270 = vmatprep.subr.mxu0 0.0
    %2271 = vmatpush2.msra.mxu0 0.0
    %2272 = vmatprep.subr.mxu0 0.0
    %2273 = vmatpush2.msra.mxu0 0.0
    %2274 = vmatprep.subr.mxu0 0.0
    %2275 = vmatpush2.msra.mxu0 0.0
    %2276 = vmatprep.subr.mxu0 0.0
    %2277 = vmatpush2.msra.mxu0 0.0
    %2278 = vmatprep.subr.mxu0 0.0
    %2279 = vmatpush2.msra.mxu0 0.0
    %2280 = vmatprep.mubr.f32.mxu0 0.0
    %2281 = vmatmul.mubr.f32.gmra.mxu0 %v2214
    %v2282 = vpop.f32.mrf.mxu0
    %v2283 = vadd.f32 0.0, %v2282
    %v2284 = vpop.f32.mrf.mxu0
    %2285 = vdwg.mxu0
    %v2286 = vadd.f32 %v1703, %v2283
    %v2287 = vadd.f32 %v2286, %v1804
    %v2288 = vxor.u32 %v2287, 2147483648
    %v2289 = vmul.f32 %v2288, 1.442695
    %v2290 = vpow.pop %v2289
    %v2291 = vadd.f32 %v2290, 1.0
    %v2292 = vrcp.pop %v2291
    %v2293 = vmul.f32 1.0, %v2292
    %v2294 = vtanh.pop %v2287
    %v2295 = vmul.f32 %v2293, %v2204
    %2297 = vrot.lane.b32.xlu0 %v2294, 64
    %v2298 = vpop.permute.xlu0 %2297
    %v2300 = vmul.f32 %v2293, %v2298
    %2302 = vrot.lane.b32.xlu0 %v2300, 32
    %v2303 = vpop.permute.xlu0 %2302
    %v2305 = vadd.f32 %v2295, %v2303
    %v2306 = vtanh.pop %v2305
    %2308 = vrot.lane.b32.xlu0 %v2306, 64
    %v2309 = vpop.permute.xlu0 %2308
    %v2311 = vmul.f32 %v2293, %v2309
    %2313 = vrot.lane.b32.xlu0 %v2311, 32
    %v2314 = vpop.permute.xlu0 %2313
    %v2315 = vsel %vm289, %v2314, 0
    %2317 = vmatprep.subr.mxu0 0.0
    %2318 = vmatpush1.msra.mxu0 0.0
    %2319 = vmatprep.subr.mxu0 0.0
    %2320 = vmatpush1.msra.mxu0 0.0
    %2321 = vmatprep.subr.mxu0 0.0
    %2322 = vmatpush1.msra.mxu0 0.0
    %2323 = vmatprep.subr.mxu0 0.0
    %2324 = vmatpush1.msra.mxu0 0.0
    %2325 = vmatprep.subr.mxu0 0.0
    %2326 = vmatpush1.msra.mxu0 0.0
    %2327 = vmatprep.subr.mxu0 0.0
    %2328 = vmatpush1.msra.mxu0 0.0
    %2329 = vmatprep.subr.mxu0 0.0
    %2330 = vmatpush1.msra.mxu0 0.0
    %2331 = vmatprep.subr.mxu0 0.0
    %2332 = vmatpush1.msra.mxu0 0.0
    %2333 = vmatprep.subr.mxu0 0.0
    %2334 = vmatpush1.msra.mxu0 0.0
    %2335 = vmatprep.subr.mxu0 0.0
    %2336 = vmatpush1.msra.mxu0 0.0
    %2337 = vmatprep.subr.mxu0 0.0
    %2338 = vmatpush1.msra.mxu0 0.0
    %2339 = vmatprep.subr.mxu0 0.0
    %2340 = vmatpush1.msra.mxu0 0.0
    %2341 = vmatprep.subr.mxu0 0.0
    %2342 = vmatpush1.msra.mxu0 %v1810
    %2343 = vmatprep.subr.mxu0 0.0
    %2344 = vmatpush1.msra.mxu0 %v1809
    %2345 = vmatprep.subr.mxu0 0.0
    %2346 = vmatpush1.msra.mxu0 %v1808
    %2347 = vmatprep.subr.mxu0 0.0
    %2348 = vmatpush1.msra.mxu0 %v1807
    %2349 = vmatprep.subr.mxu0 0.0
    %2350 = vmatpush2.msra.mxu0 0.0
    %2351 = vmatprep.subr.mxu0 0.0
    %2352 = vmatpush2.msra.mxu0 0.0
    %2353 = vmatprep.subr.mxu0 0.0
    %2354 = vmatpush2.msra.mxu0 0.0
    %2355 = vmatprep.subr.mxu0 0.0
    %2356 = vmatpush2.msra.mxu0 0.0
    %2357 = vmatprep.subr.mxu0 0.0
    %2358 = vmatpush2.msra.mxu0 0.0
    %2359 = vmatprep.subr.mxu0 0.0
    %2360 = vmatpush2.msra.mxu0 0.0
    %2361 = vmatprep.subr.mxu0 0.0
    %2362 = vmatpush2.msra.mxu0 0.0
    %2363 = vmatprep.subr.mxu0 0.0
    %2364 = vmatpush2.msra.mxu0 0.0
    %2365 = vmatprep.subr.mxu0 0.0
    %2366 = vmatpush2.msra.mxu0 0.0
    %2367 = vmatprep.subr.mxu0 0.0
    %2368 = vmatpush2.msra.mxu0 0.0
    %2369 = vmatprep.subr.mxu0 0.0
    %2370 = vmatpush2.msra.mxu0 0.0
    %2371 = vmatprep.subr.mxu0 0.0
    %2372 = vmatpush2.msra.mxu0 0.0
    %2373 = vmatprep.subr.mxu0 0.0
    %2374 = vmatpush2.msra.mxu0 0.0
    %2375 = vmatprep.subr.mxu0 0.0
    %2376 = vmatpush2.msra.mxu0 0.0
    %2377 = vmatprep.subr.mxu0 0.0
    %2378 = vmatpush2.msra.mxu0 0.0
    %2379 = vmatprep.subr.mxu0 0.0
    %2380 = vmatpush2.msra.mxu0 0.0
    %2381 = vmatprep.mubr.f32.mxu0 0.0
    %2382 = vmatmul.mubr.f32.gmra.mxu0 %v2315
    %v2383 = vpop.f32.mrf.mxu0
    %v2384 = vadd.f32 0.0, %v2383
    %v2385 = vpop.f32.mrf.mxu0
    %2386 = vdwg.mxu0
    %v2387 = vadd.f32 %v1708, %v2384
    %v2388 = vadd.f32 %v2387, %v1804
    %v2389 = vxor.u32 %v2388, 2147483648
    %v2390 = vmul.f32 %v2389, 1.442695
    %v2391 = vpow.pop %v2390
    %v2392 = vadd.f32 %v2391, 1.0
    %v2393 = vrcp.pop %v2392
    %v2394 = vmul.f32 1.0, %v2393
    %v2395 = vtanh.pop %v2388
    %v2396 = vmul.f32 %v2394, %v2305
    %2398 = vrot.lane.b32.xlu0 %v2395, 64
    %v2399 = vpop.permute.xlu0 %2398
    %v2401 = vmul.f32 %v2394, %v2399
    %2403 = vrot.lane.b32.xlu0 %v2401, 32
    %v2404 = vpop.permute.xlu0 %2403
    %v2406 = vadd.f32 %v2396, %v2404
    %v2407 = vtanh.pop %v2406
    %2409 = vrot.lane.b32.xlu0 %v2407, 64
    %v2410 = vpop.permute.xlu0 %2409
    %v2412 = vmul.f32 %v2394, %v2410
    %2414 = vrot.lane.b32.xlu0 %v2412, 32
    %v2415 = vpop.permute.xlu0 %2414
    %v2416 = vsel %vm289, %v2415, 0
    %2418 = vmatprep.subr.mxu0 0.0
    %2419 = vmatpush1.msra.mxu0 0.0
    %2420 = vmatprep.subr.mxu0 0.0
    %2421 = vmatpush1.msra.mxu0 0.0
    %2422 = vmatprep.subr.mxu0 0.0
    %2423 = vmatpush1.msra.mxu0 0.0
    %2424 = vmatprep.subr.mxu0 0.0
    %2425 = vmatpush1.msra.mxu0 0.0
    %2426 = vmatprep.subr.mxu0 0.0
    %2427 = vmatpush1.msra.mxu0 0.0
    %2428 = vmatprep.subr.mxu0 0.0
    %2429 = vmatpush1.msra.mxu0 0.0
    %2430 = vmatprep.subr.mxu0 0.0
    %2431 = vmatpush1.msra.mxu0 0.0
    %2432 = vmatprep.subr.mxu0 0.0
    %2433 = vmatpush1.msra.mxu0 0.0
    %2434 = vmatprep.subr.mxu0 0.0
    %2435 = vmatpush1.msra.mxu0 0.0
    %2436 = vmatprep.subr.mxu0 0.0
    %2437 = vmatpush1.msra.mxu0 0.0
    %2438 = vmatprep.subr.mxu0 0.0
    %2439 = vmatpush1.msra.mxu0 0.0
    %2440 = vmatprep.subr.mxu0 0.0
    %2441 = vmatpush1.msra.mxu0 0.0
    %2442 = vmatprep.subr.mxu0 0.0
    %2443 = vmatpush1.msra.mxu0 %v1810
    %2444 = vmatprep.subr.mxu0 0.0
    %2445 = vmatpush1.msra.mxu0 %v1809
    %2446 = vmatprep.subr.mxu0 0.0
    %2447 = vmatpush1.msra.mxu0 %v1808
    %2448 = vmatprep.subr.mxu0 0.0
    %2449 = vmatpush1.msra.mxu0 %v1807
    %2450 = vmatprep.subr.mxu0 0.0
    %2451 = vmatpush2.msra.mxu0 0.0
    %2452 = vmatprep.subr.mxu0 0.0
    %2453 = vmatpush2.msra.mxu0 0.0
    %2454 = vmatprep.subr.mxu0 0.0
    %2455 = vmatpush2.msra.mxu0 0.0
    %2456 = vmatprep.subr.mxu0 0.0
    %2457 = vmatpush2.msra.mxu0 0.0
    %2458 = vmatprep.subr.mxu0 0.0
    %2459 = vmatpush2.msra.mxu0 0.0
    %2460 = vmatprep.subr.mxu0 0.0
    %2461 = vmatpush2.msra.mxu0 0.0
    %2462 = vmatprep.subr.mxu0 0.0
    %2463 = vmatpush2.msra.mxu0 0.0
    %2464 = vmatprep.subr.mxu0 0.0
    %2465 = vmatpush2.msra.mxu0 0.0
    %2466 = vmatprep.subr.mxu0 0.0
    %2467 = vmatpush2.msra.mxu0 0.0
    %2468 = vmatprep.subr.mxu0 0.0
    %2469 = vmatpush2.msra.mxu0 0.0
    %2470 = vmatprep.subr.mxu0 0.0
    %2471 = vmatpush2.msra.mxu0 0.0
    %2472 = vmatprep.subr.mxu0 0.0
    %2473 = vmatpush2.msra.mxu0 0.0
    %2474 = vmatprep.subr.mxu0 0.0
    %2475 = vmatpush2.msra.mxu0 0.0
    %2476 = vmatprep.subr.mxu0 0.0
    %2477 = vmatpush2.msra.mxu0 0.0
    %2478 = vmatprep.subr.mxu0 0.0
    %2479 = vmatpush2.msra.mxu0 0.0
    %2480 = vmatprep.subr.mxu0 0.0
    %2481 = vmatpush2.msra.mxu0 0.0
    %2482 = vmatprep.mubr.f32.mxu0 0.0
    %2483 = vmatmul.mubr.f32.gmra.mxu0 %v2416
    %v2484 = vpop.f32.mrf.mxu0
    %v2485 = vadd.f32 0.0, %v2484
    %v2486 = vpop.f32.mrf.mxu0
    %2487 = vdwg.mxu0
    %v2488 = vadd.f32 %v1713, %v2485
    %v2489 = vadd.f32 %v2488, %v1804
    %v2490 = vxor.u32 %v2489, 2147483648
    %v2491 = vmul.f32 %v2490, 1.442695
    %v2492 = vpow.pop %v2491
    %v2493 = vadd.f32 %v2492, 1.0
    %v2494 = vrcp.pop %v2493
    %v2495 = vmul.f32 1.0, %v2494
    %v2496 = vtanh.pop %v2489
    %v2497 = vmul.f32 %v2495, %v2406
    %2499 = vrot.lane.b32.xlu0 %v2496, 64
    %v2500 = vpop.permute.xlu0 %2499
    %v2502 = vmul.f32 %v2495, %v2500
    %2504 = vrot.lane.b32.xlu0 %v2502, 32
    %v2505 = vpop.permute.xlu0 %2504
    %v2507 = vadd.f32 %v2497, %v2505
    %v2508 = vtanh.pop %v2507
    %2510 = vrot.lane.b32.xlu0 %v2508, 64
    %v2511 = vpop.permute.xlu0 %2510
    %v2513 = vmul.f32 %v2495, %v2511
    %2515 = vrot.lane.b32.xlu0 %v2513, 32
    %v2516 = vpop.permute.xlu0 %2515
    %v2517 = vsel %vm289, %v2516, 0
    %2519 = vmatprep.subr.mxu0 0.0
    %2520 = vmatpush1.msra.mxu0 0.0
    %2521 = vmatprep.subr.mxu0 0.0
    %2522 = vmatpush1.msra.mxu0 0.0
    %2523 = vmatprep.subr.mxu0 0.0
    %2524 = vmatpush1.msra.mxu0 0.0
    %2525 = vmatprep.subr.mxu0 0.0
    %2526 = vmatpush1.msra.mxu0 0.0
    %2527 = vmatprep.subr.mxu0 0.0
    %2528 = vmatpush1.msra.mxu0 0.0
    %2529 = vmatprep.subr.mxu0 0.0
    %2530 = vmatpush1.msra.mxu0 0.0
    %2531 = vmatprep.subr.mxu0 0.0
    %2532 = vmatpush1.msra.mxu0 0.0
    %2533 = vmatprep.subr.mxu0 0.0
    %2534 = vmatpush1.msra.mxu0 0.0
    %2535 = vmatprep.subr.mxu0 0.0
    %2536 = vmatpush1.msra.mxu0 0.0
    %2537 = vmatprep.subr.mxu0 0.0
    %2538 = vmatpush1.msra.mxu0 0.0
    %2539 = vmatprep.subr.mxu0 0.0
    %2540 = vmatpush1.msra.mxu0 0.0
    %2541 = vmatprep.subr.mxu0 0.0
    %2542 = vmatpush1.msra.mxu0 0.0
    %2543 = vmatprep.subr.mxu0 0.0
    %2544 = vmatpush1.msra.mxu0 %v1810
    %2545 = vmatprep.subr.mxu0 0.0
    %2546 = vmatpush1.msra.mxu0 %v1809
    %2547 = vmatprep.subr.mxu0 0.0
    %2548 = vmatpush1.msra.mxu0 %v1808
    %2549 = vmatprep.subr.mxu0 0.0
    %2550 = vmatpush1.msra.mxu0 %v1807
    %2551 = vmatprep.subr.mxu0 0.0
    %2552 = vmatpush2.msra.mxu0 0.0
    %2553 = vmatprep.subr.mxu0 0.0
    %2554 = vmatpush2.msra.mxu0 0.0
    %2555 = vmatprep.subr.mxu0 0.0
    %2556 = vmatpush2.msra.mxu0 0.0
    %2557 = vmatprep.subr.mxu0 0.0
    %2558 = vmatpush2.msra.mxu0 0.0
    %2559 = vmatprep.subr.mxu0 0.0
    %2560 = vmatpush2.msra.mxu0 0.0
    %2561 = vmatprep.subr.mxu0 0.0
    %2562 = vmatpush2.msra.mxu0 0.0
    %2563 = vmatprep.subr.mxu0 0.0
    %2564 = vmatpush2.msra.mxu0 0.0
    %2565 = vmatprep.subr.mxu0 0.0
    %2566 = vmatpush2.msra.mxu0 0.0
    %2567 = vmatprep.subr.mxu0 0.0
    %2568 = vmatpush2.msra.mxu0 0.0
    %2569 = vmatprep.subr.mxu0 0.0
    %2570 = vmatpush2.msra.mxu0 0.0
    %2571 = vmatprep.subr.mxu0 0.0
    %2572 = vmatpush2.msra.mxu0 0.0
    %2573 = vmatprep.subr.mxu0 0.0
    %2574 = vmatpush2.msra.mxu0 0.0
    %2575 = vmatprep.subr.mxu0 0.0
    %2576 = vmatpush2.msra.mxu0 0.0
    %2577 = vmatprep.subr.mxu0 0.0
    %2578 = vmatpush2.msra.mxu0 0.0
    %2579 = vmatprep.subr.mxu0 0.0
    %2580 = vmatpush2.msra.mxu0 0.0
    %2581 = vmatprep.subr.mxu0 0.0
    %2582 = vmatpush2.msra.mxu0 0.0
    %2583 = vmatprep.mubr.f32.mxu0 0.0
    %2584 = vmatmul.mubr.f32.gmra.mxu0 %v2517
    %v2585 = vpop.f32.mrf.mxu0
    %v2586 = vadd.f32 0.0, %v2585
    %v2587 = vpop.f32.mrf.mxu0
    %2588 = vdwg.mxu0
    %v2589 = vadd.f32 %v1718, %v2586
    %v2590 = vadd.f32 %v2589, %v1804
    %v2591 = vxor.u32 %v2590, 2147483648
    %v2592 = vmul.f32 %v2591, 1.442695
    %v2593 = vpow.pop %v2592
    %v2594 = vadd.f32 %v2593, 1.0
    %v2595 = vrcp.pop %v2594
    %v2596 = vmul.f32 1.0, %v2595
    %v2597 = vtanh.pop %v2590
    %v2598 = vmul.f32 %v2596, %v2507
    %2600 = vrot.lane.b32.xlu0 %v2597, 64
    %v2601 = vpop.permute.xlu0 %2600
    %v2603 = vmul.f32 %v2596, %v2601
    %2605 = vrot.lane.b32.xlu0 %v2603, 32
    %v2606 = vpop.permute.xlu0 %2605
    %v2608 = vadd.f32 %v2598, %v2606
    %v2609 = vtanh.pop %v2608
    %2611 = vrot.lane.b32.xlu0 %v2609, 64
    %v2612 = vpop.permute.xlu0 %2611
    %v2614 = vmul.f32 %v2596, %v2612
    %v2615 = vld [vmem:[%s11] sm:$0xff]
    %v2616 = vld [vmem:[%s11 + $0x8] sm:$0xff]
    %v2617 = vld [vmem:[%s11 + $0x10] sm:$0xff]
    %v2618 = vld [vmem:[%s11 + $0x18] sm:$0xff]
    %v2619 = vld [vmem:[%s11 + $0x20] sm:$0xff]
    %v2620 = vld [vmem:[%s11 + $0x28] sm:$0xff]
    %v2621 = vld [vmem:[%s11 + $0x30] sm:$0xff]
    %v2622 = vld [vmem:[%s11 + $0x38] sm:$0xff]
    %v2623 = vld [vmem:[%s12] sm:$0x3]
    %v2625 = vlaneseq
    %v2626 = vshrl.u32 %v2625, 7
    %v2627 = vsub.s32 0, %v2626
    %v2628 = vrot.slane %v2623, %v2627
    %v2629 = vlaneseq
    %v2630 = vshrl.u32 %v2629, 7
    %v2631 = vsub.s32 1, %v2630
    %v2632 = vrot.slane %v2623, %v2631
    %2636 = vrot.lane.b32.xlu0 %v2614, 32
    %v2637 = vpop.permute.xlu0 %2636
    %v2638 = vsel %vm289, %v2637, 0
    %2640 = vmatprep.subr.mxu0 0.0
    %2641 = vmatpush1.msra.mxu0 0.0
    %2642 = vmatprep.subr.mxu0 0.0
    %2643 = vmatpush1.msra.mxu0 0.0
    %2644 = vmatprep.subr.mxu0 0.0
    %2645 = vmatpush1.msra.mxu0 0.0
    %2646 = vmatprep.subr.mxu0 0.0
    %2647 = vmatpush1.msra.mxu0 0.0
    %2648 = vmatprep.subr.mxu0 0.0
    %2649 = vmatpush1.msra.mxu0 0.0
    %2650 = vmatprep.subr.mxu0 0.0
    %2651 = vmatpush1.msra.mxu0 0.0
    %2652 = vmatprep.subr.mxu0 0.0
    %2653 = vmatpush1.msra.mxu0 0.0
    %2654 = vmatprep.subr.mxu0 0.0
    %2655 = vmatpush1.msra.mxu0 0.0
    %2656 = vmatprep.subr.mxu0 0.0
    %2657 = vmatpush1.msra.mxu0 0.0
    %2658 = vmatprep.subr.mxu0 0.0
    %2659 = vmatpush1.msra.mxu0 0.0
    %2660 = vmatprep.subr.mxu0 0.0
    %2661 = vmatpush1.msra.mxu0 0.0
    %2662 = vmatprep.subr.mxu0 0.0
    %2663 = vmatpush1.msra.mxu0 0.0
    %2664 = vmatprep.subr.mxu0 %v2622
    %2665 = vmatpush1.msra.mxu0 %v2621
    %2666 = vmatprep.subr.mxu0 %v2620
    %2667 = vmatpush1.msra.mxu0 %v2619
    %2668 = vmatprep.subr.mxu0 %v2618
    %2669 = vmatpush1.msra.mxu0 %v2617
    %2670 = vmatprep.subr.mxu0 %v2616
    %2671 = vmatpush1.msra.mxu0 %v2615
    %2672 = vmatprep.subr.mxu0 0.0
    %2673 = vmatpush2.msra.mxu0 0.0
    %2674 = vmatprep.subr.mxu0 0.0
    %2675 = vmatpush2.msra.mxu0 0.0
    %2676 = vmatprep.subr.mxu0 0.0
    %2677 = vmatpush2.msra.mxu0 0.0
    %2678 = vmatprep.subr.mxu0 0.0
    %2679 = vmatpush2.msra.mxu0 0.0
    %2680 = vmatprep.subr.mxu0 0.0
    %2681 = vmatpush2.msra.mxu0 0.0
    %2682 = vmatprep.subr.mxu0 0.0
    %2683 = vmatpush2.msra.mxu0 0.0
    %2684 = vmatprep.subr.mxu0 0.0
    %2685 = vmatpush2.msra.mxu0 0.0
    %2686 = vmatprep.subr.mxu0 0.0
    %2687 = vmatpush2.msra.mxu0 0.0
    %2688 = vmatprep.subr.mxu0 0.0
    %2689 = vmatpush2.msra.mxu0 0.0
    %2690 = vmatprep.subr.mxu0 0.0
    %2691 = vmatpush2.msra.mxu0 0.0
    %2692 = vmatprep.subr.mxu0 0.0
    %2693 = vmatpush2.msra.mxu0 0.0
    %2694 = vmatprep.subr.mxu0 0.0
    %2695 = vmatpush2.msra.mxu0 0.0
    %2696 = vmatprep.subr.mxu0 0.0
    %2697 = vmatpush2.msra.mxu0 0.0
    %2698 = vmatprep.subr.mxu0 0.0
    %2699 = vmatpush2.msra.mxu0 0.0
    %2700 = vmatprep.subr.mxu0 0.0
    %2701 = vmatpush2.msra.mxu0 0.0
    %2702 = vmatprep.subr.mxu0 0.0
    %2703 = vmatpush2.msra.mxu0 0.0
    %2704 = vmatprep.mubr.f32.mxu0 0.0
    %2705 = vmatmul.mubr.f32.gmra.mxu0 %v1911
    %v2706 = vpop.f32.mrf.mxu0
    %v2707 = vadd.f32 %v2628, %v2706
    %v2708 = vpop.f32.mrf.mxu0
    %v2709 = vadd.f32 %v2632, %v2708
    %2710 = vmatprep.mubr.f32.mxu0 0.0
    %2711 = vmatmul.mubr.f32.gmra.mxu0 %v2012
    %v2712 = vpop.f32.mrf.mxu0
    %v2713 = vadd.f32 %v2628, %v2712
    %v2714 = vpop.f32.mrf.mxu0
    %v2715 = vadd.f32 %v2632, %v2714
    %2716 = vmatprep.mubr.f32.mxu0 0.0
    %2717 = vmatmul.mubr.f32.gmra.mxu0 %v2113
    %v2718 = vpop.f32.mrf.mxu0
    %v2719 = vadd.f32 %v2628, %v2718
    %v2720 = vpop.f32.mrf.mxu0
    %v2721 = vadd.f32 %v2632, %v2720
    %2722 = vmatprep.mubr.f32.mxu0 0.0
    %2723 = vmatmul.mubr.f32.gmra.mxu0 %v2214
    %v2724 = vpop.f32.mrf.mxu0
    %v2725 = vadd.f32 %v2628, %v2724
    %v2726 = vpop.f32.mrf.mxu0
    %v2727 = vadd.f32 %v2632, %v2726
    %2728 = vmatprep.mubr.f32.mxu0 0.0
    %2729 = vmatmul.mubr.f32.gmra.mxu0 %v2315
    %v2730 = vpop.f32.mrf.mxu0
    %v2731 = vadd.f32 %v2628, %v2730
    %v2732 = vpop.f32.mrf.mxu0
    %v2733 = vadd.f32 %v2632, %v2732
    %2734 = vmatprep.mubr.f32.mxu0 0.0
    %2735 = vmatmul.mubr.f32.gmra.mxu0 %v2416
    %v2736 = vpop.f32.mrf.mxu0
    %v2737 = vadd.f32 %v2628, %v2736
    %v2738 = vpop.f32.mrf.mxu0
    %v2739 = vadd.f32 %v2632, %v2738
    %2740 = vmatprep.mubr.f32.mxu0 0.0
    %2741 = vmatmul.mubr.f32.gmra.mxu0 %v2517
    %v2742 = vpop.f32.mrf.mxu0
    %v2743 = vadd.f32 %v2628, %v2742
    %v2744 = vpop.f32.mrf.mxu0
    %v2745 = vadd.f32 %v2632, %v2744
    %2746 = vmatprep.mubr.f32.mxu0 0.0
    %2747 = vmatmul.mubr.f32.gmra.mxu0 %v2638
    %v2748 = vpop.f32.mrf.mxu0
    %v2749 = vadd.f32 %v2628, %v2748
    %v2750 = vpop.f32.mrf.mxu0
    %v2751 = vadd.f32 %v2632, %v2750
    %2752 = vdwg.mxu0
    %2753 = vst [vmem:[#allocation2] sm:$0xff] %v2707
    %2754 = vst [vmem:[#allocation2 + $0x8] sm:$0xff] %v2709
    %2755 = vst [vmem:[#allocation2 + $0x10] sm:$0xff] %v2713
    %2756 = vst [vmem:[#allocation2 + $0x18] sm:$0xff] %v2715
    %2757 = vst [vmem:[#allocation2 + $0x20] sm:$0xff] %v2719
    %2758 = vst [vmem:[#allocation2 + $0x28] sm:$0xff] %v2721
    %2759 = vst [vmem:[#allocation2 + $0x30] sm:$0xff] %v2725
    %2760 = vst [vmem:[#allocation2 + $0x38] sm:$0xff] %v2727
    %2761 = vst [vmem:[#allocation2 + $0x40] sm:$0xff] %v2731
    %2762 = vst [vmem:[#allocation2 + $0x48] sm:$0xff] %v2733
    %2763 = vst [vmem:[#allocation2 + $0x50] sm:$0xff] %v2737
    %2764 = vst [vmem:[#allocation2 + $0x58] sm:$0xff] %v2739
    %2765 = vst [vmem:[#allocation2 + $0x60] sm:$0xff] %v2743
    %2766 = vst [vmem:[#allocation2 + $0x68] sm:$0xff] %v2745
    %2767 = vst [vmem:[#allocation2 + $0x70] sm:$0xff] %v2749
    %2768 = vst [vmem:[#allocation2 + $0x78] sm:$0xff] %v2751
    %vm2769 = vcmask 130048
    %2770 = vst.msk [vmem:[#allocation4] sm:$0xff] %vm2769, %v1609
    %2771 = vrot.lane.b32.xlu0 %v1609, 112
    %v2772 = vpop.permute.xlu0 %2771
    %2774 = vst.msk [vmem:[#allocation6] sm:$0xff] %vm2769, %v2772
    // Predicated region
    $region54: #{vae_forward.1} parent=1 // pred_check
      _
    $region55: #{vae_forward.1} parent=1 // pred_check_branch
      %2776 = sbr.rel (0) target = $region57
    $region56: #{vae_forward.1} parent=1 // pred_region
      %s2778 = ssub.s32 2048, 2048
      %2779 = vsyncadd [#allocation3], %s2778
      %s2780 = sshll.u32 [#allocation2], 4
      %s2781 = int_to_ptr.vmem [resolvable:$true] %s2780
      %2786 = dma.vmem_to_hbm [thread:$0]  %s2781, 2048, %s13, [#allocation3], 256, 256, 16
    $region57: #{vae_forward.1} parent=1 // pred_fallthru
      _
    // Predicated region
    $region58: #{vae_forward.1} parent=1 // pred_check
      _
    $region59: #{vae_forward.1} parent=1 // pred_check_branch
      %2788 = sbr.rel (0) target = $region61
    $region60: #{vae_forward.1} parent=1 // pred_region
      %s2790 = ssub.s32 128, 128
      %2791 = vsyncadd [#allocation5], %s2790
      %s2793 = sshll.u32 [#allocation4], 4
      %s2794 = int_to_ptr.vmem [resolvable:$true] %s2793
      %2796 = dma.vmem_to_hbm [thread:$0]  %s2794, 128, %s14, [#allocation5]
    $region61: #{vae_forward.1} parent=1 // pred_fallthru
      _
    // Predicated region
    $region62: #{vae_forward.1} parent=1 // pred_check
      _
    $region63: #{vae_forward.1} parent=1 // pred_check_branch
      %2798 = sbr.rel (0) target = $region65
    $region64: #{vae_forward.1} parent=1 // pred_region
      %s2800 = ssub.s32 128, 128
      %2801 = vsyncadd [#allocation5], %s2800
      %s2803 = sshll.u32 [#allocation6], 4
      %s2804 = int_to_ptr.vmem [resolvable:$true] %s2803
      %2806 = dma.vmem_to_hbm [thread:$0]  %s2804, 128, %s15, [#allocation5]
    $region65: #{vae_forward.1} parent=1 // pred_fallthru
      _
    // Predicated region
    $region66: #{vae_forward.1} parent=1 // pred_check
      _
    $region67: #{vae_forward.1} parent=1 // pred_check_branch
      %2808 = sbr.rel (0) target = $region69
    $region68: #{vae_forward.1} parent=1 // pred_region
      %2809 = dma.done [#allocation3], 2048
    $region69: #{vae_forward.1} parent=1 // pred_fallthru
      _
    // Predicated region
    $region70: #{vae_forward.1} parent=1 // pred_check
      _
    $region71: #{vae_forward.1} parent=1 // pred_check_branch
      %2811 = sbr.rel (0) target = $region73
    $region72: #{vae_forward.1} parent=1 // pred_region
      %2812 = dma.done [#allocation5], 128
    $region73: #{vae_forward.1} parent=1 // pred_fallthru
      _
    // Predicated region
    $region74: #{vae_forward.1} parent=1 // pred_check
      _
    $region75: #{vae_forward.1} parent=1 // pred_check_branch
      %2814 = sbr.rel (0) target = $region77
    $region76: #{vae_forward.1} parent=1 // pred_region
      %2815 = dma.done [#allocation5], 128
    $region77: #{vae_forward.1} parent=1 // pred_fallthru
      _
    %2816 = vsyncpa [#allocation3], 1
    %2817 = vsyncpa [#allocation5], 1

</llo_original>
